<compile_context>
chip_gen: v6e
topology: v6e:2x2x1
jax: 0.10.0
libtpu: 0.0.40
codegen_flags: <defaults>
</compile_context>

<pallas_src>
import functools

import jax
import jax.numpy as jnp
from jax.experimental import pallas as pl
from jax.experimental.pallas import tpu as pltpu


_VMEM_LIMIT = 48 * 1024 * 1024  # fits v5e/v6e (128 MiB phys) and v7x (64 MiB phys)


def _round_up(x, m):
    return ((x + m - 1) // m) * m


# ----------------------------------------------------------------------------
# In-kernel exact-style GELU (erf via Abramowitz&Stegun 7.1.26, max err ~1.5e-7).
# TODO(synk): switch to jax.lax.erf once its Mosaic lowering is confirmed on the
#             target build; the polynomial keeps f32-level accuracy meanwhile.
# ----------------------------------------------------------------------------
def _erf_approx(x):
    a1, a2, a3, a4, a5 = (0.254829592, -0.284496736, 1.421413741,
                          -1.453152027, 1.061405429)
    p = 0.3275911
    s = jnp.where(x < 0.0, -1.0, 1.0).astype(jnp.float32)
    ax = jnp.abs(x)
    t = 1.0 / (1.0 + p * ax)
    poly = ((((a5 * t + a4) * t + a3) * t + a2) * t + a1) * t
    return s * (1.0 - poly * jnp.exp(-ax * ax))


def _gelu_erf(x):
    return 0.5 * x * (1.0 + _erf_approx(x * 0.7071067811865476))


# ----------------------------------------------------------------------------
# Fused matmul kernel:   out = epilogue( prologue(x) @ W + b )
#   prologue: optional (x - x_sub) diff, optional LayerNorm over K
#   epilogue: optional GELU, optional residual add
# MXU inputs are bf16, accumulation f32.
# ----------------------------------------------------------------------------
def _fused_mm_kernel(*refs, has_sub, has_bias, has_ln, has_res, gelu, eps):
    it = iter(refs)
    x_ref = next(it)
    sub_ref = next(it) if has_sub else None
    w_ref = next(it)
    b_ref = next(it) if has_bias else None
    g_ref = next(it) if has_ln else None
    bln_ref = next(it) if has_ln else None
    res_ref = next(it) if has_res else None
    o_ref = next(it)

    x = x_ref[...]
    if has_sub:
        x = x.astype(jnp.float32) - sub_ref[...].astype(jnp.float32)
    if has_ln:
        x = x.astype(jnp.float32)
        mu = jnp.mean(x, axis=-1, keepdims=True)
        xc = x - mu
        var = jnp.mean(xc * xc, axis=-1, keepdims=True)
        x = xc * jax.lax.rsqrt(var + eps) * g_ref[...] + bln_ref[...]

    acc = jnp.dot(x.astype(jnp.bfloat16), w_ref[...],
                  preferred_element_type=jnp.float32)
    if has_bias:
        acc = acc + b_ref[...]
    if gelu:
        acc = _gelu_erf(acc)
    if has_res:
        acc = acc + res_ref[...].astype(jnp.float32)
    o_ref[...] = acc.astype(o_ref.dtype)


def fused_matmul(x, w, b=None, *, x_sub=None, ln=None, gelu=False,
                 residual=None, out_dtype=jnp.float32,
                 tm_max=256, tn_max=512, eps=1e-5):
    """(M, K) @ (K, N) with fused LN prologue / diff / GELU / residual epilogue."""
    M, K = x.shape
    Kw, N = w.shape
    assert Kw == K

    tm = min(tm_max, _round_up(M, 8))
    Mp = _round_up(M, tm)
    if N <= tn_max:
        tn, Np = N, N
    else:
        tn = tn_max
        Np = _round_up(N, tn)

    def pad_rows(a):
        return jnp.pad(a, ((0, Mp - M), (0, 0))) if Mp != M else a

    def pad_cols(a):
        return jnp.pad(a, ((0, 0), (0, Np - a.shape[1]))) if a.shape[1] != Np else a

    operands = [pad_rows(x)]
    in_specs = [pl.BlockSpec((tm, K), lambda i, j: (i, 0))]
    if x_sub is not None:
        operands.append(pad_rows(x_sub))
        in_specs.append(pl.BlockSpec((tm, K), lambda i, j: (i, 0)))
    operands.append(pad_cols(w.astype(jnp.bfloat16)))
    in_specs.append(pl.BlockSpec((K, tn), lambda i, j: (0, j)))
    if b is not None:
        operands.append(pad_cols(b.reshape(1, N).astype(jnp.float32)))
        in_specs.append(pl.BlockSpec((1, tn), lambda i, j: (0, j)))
    if ln is not None:
        g, be = ln
        operands.append(g.reshape(1, K).astype(jnp.float32))
        in_specs.append(pl.BlockSpec((1, K), lambda i, j: (0, 0)))
        operands.append(be.reshape(1, K).astype(jnp.float32))
        in_specs.append(pl.BlockSpec((1, K), lambda i, j: (0, 0)))
    if residual is not None:
        operands.append(pad_cols(pad_rows(residual.astype(jnp.float32))))
        in_specs.append(pl.BlockSpec((tm, tn), lambda i, j: (i, j)))

    kernel = functools.partial(
        _fused_mm_kernel,
        has_sub=x_sub is not None, has_bias=b is not None,
        has_ln=ln is not None, has_res=residual is not None,
        gelu=gelu, eps=eps)

    out = pl.pallas_call(
        kernel,
        grid=(Mp // tm, Np // tn),
        in_specs=in_specs,
        out_specs=pl.BlockSpec((tm, tn), lambda i, j: (i, j)),
        out_shape=jax.ShapeDtypeStruct((Mp, Np), out_dtype),
        compiler_params=pltpu.CompilerParams(
            dimension_semantics=("parallel", "parallel"),
            vmem_limit_bytes=_VMEM_LIMIT),
    )(*operands)
    if Mp != M or Np != N:
        out = out[:M, :N]
    return out


# ----------------------------------------------------------------------------
# Fused DeepViT re-attention kernel (per batch element):
#   scores -> softmax -> head-mix (reattn_w) -> LayerNorm over heads -> PV
# Everything lives in VMEM; reattn params are SMEM scalars (VPU broadcast mix).
# ----------------------------------------------------------------------------
def _reattn_kernel(qkv_ref, rw_ref, rg_ref, rb_ref, o_ref,
                   *, heads, dim_head, scale, eps):
    H, dh = heads, dim_head
    I = H * dh

    # Per-head scores + softmax (the (H, N, N) tensor never leaves VMEM).
    attn = []
    for h in range(H):
        qh = qkv_ref[:, h * dh:(h + 1) * dh].astype(jnp.bfloat16)
        kh = qkv_ref[:, I + h * dh:I + (h + 1) * dh].astype(jnp.bfloat16)
        s = jax.lax.dot_general(
            qh, kh, (((1,), (1,)), ((), ())),
            preferred_element_type=jnp.float32) * scale
        m = jnp.max(s, axis=-1, keepdims=True)
        e = jnp.exp(s - m)
        attn.append(e / jnp.sum(e, axis=-1, keepdims=True))

    # Re-attention mix over heads: mixed[g] = sum_h reattn_w[h, g] * attn[h]
    mixed = []
    for g in range(H):
        acc = attn[0] * rw_ref[0, g]
        for h in range(1, H):
            acc = acc + attn[h] * rw_ref[h, g]
        mixed.append(acc)

    # LayerNorm over the head axis (per score element), VPU-only plane ops.
    mean = mixed[0]
    for g in range(1, H):
        mean = mean + mixed[g]
    mean = mean * (1.0 / H)
    var = None
    for g in range(H):
        d = mixed[g] - mean
        var = d * d if var is None else var + d * d
    var = var * (1.0 / H)
    inv = jax.lax.rsqrt(var + eps)

    # PV matmul per head, written straight into the per-batch output block.
    for h in range(H):
        a_h = ((mixed[h] - mean) * inv * rg_ref[h] + rb_ref[h]).astype(jnp.bfloat16)
        vh = qkv_ref[:, 2 * I + h * dh:2 * I + (h + 1) * dh].astype(jnp.bfloat16)
        o_ref[:, h * dh:(h + 1) * dh] = jnp.dot(
            a_h, vh, preferred_element_type=jnp.float32).astype(o_ref.dtype)


def fused_reattention(qkv, reattn_w, reattn_g, reattn_b, *, heads, dim_head,
                      eps=1e-5):
    """qkv: (B, N, 3*H*dh) -> attention output (B, N, H*dh), fully fused."""
    B, N, three_i = qkv.shape
    I = heads * dim_head
    assert three_i == 3 * I
    kernel = functools.partial(_reattn_kernel, heads=heads, dim_head=dim_head,
                               scale=dim_head ** -0.5, eps=eps)
    return pl.pallas_call(
        kernel,
        grid=(B,),
        in_specs=[
            pl.BlockSpec((None, N, three_i), lambda b: (b, 0, 0)),
            pl.BlockSpec(memory_space=pltpu.MemorySpace.SMEM),
            pl.BlockSpec(memory_space=pltpu.MemorySpace.SMEM),
            pl.BlockSpec(memory_space=pltpu.MemorySpace.SMEM),
        ],
        out_specs=pl.BlockSpec((None, N, I), lambda b: (b, 0, 0)),
        out_shape=jax.ShapeDtypeStruct((B, N, I), jnp.bfloat16),
        compiler_params=pltpu.CompilerParams(
            dimension_semantics=("parallel",),
            vmem_limit_bytes=_VMEM_LIMIT),
    )(qkv, reattn_w.astype(jnp.float32), reattn_g.astype(jnp.float32),
      reattn_b.astype(jnp.float32))


# ----------------------------------------------------------------------------
# Model
# ----------------------------------------------------------------------------
class ViTDiffShiftPredictorPallas:
    """JAX/Pallas port of ViTDiffShiftPredictor (DeepViT backbone, inference mode).

    The PyTorch module hardcodes vit_dim=1024, depth=6, heads=16, mlp_dim=2048,
    dim_head=64; those are the defaults here and may be shrunk for a fast demo.
    """

    def __init__(self, image_size, dim, channels=3, patch_size=32, *,
                 vit_dim=1024, depth=6, heads=16, dim_head=64, mlp_dim=2048,
                 key=None):
        assert image_size % patch_size == 0
        self.dim = dim                      # latent dim -> num_classes = dim + 1
        self.image_size = image_size
        self.patch_size = patch_size
        self.channels = channels
        self.vit_dim = vit_dim
        self.depth = depth
        self.heads = heads
        self.dim_head = dim_head
        self.mlp_dim = mlp_dim
        self.num_patches = (image_size // patch_size) ** 2
        self.patch_dim = channels * patch_size ** 2
        self.inner_dim = heads * dim_head
        self.num_classes = dim + 1
        if key is None:
            key = jax.random.PRNGKey(0)
        self.params = self._init_params(key)
        self._forward_jit = jax.jit(self._forward)

    # -- deterministic synthetic init -----------------------------------------
    def _init_params(self, key):
        n_keys = 4 + 5 * self.depth
        keys = iter(jax.random.split(key, n_keys))

        def nrm(shape, scale=0.02, dtype=jnp.float32):
            return (scale * jax.random.normal(next(keys), shape, jnp.float32)
                    ).astype(dtype)

        D, H, I, M = self.vit_dim, self.heads, self.inner_dim, self.mlp_dim
        ncp = _round_up(self.num_classes, 128)   # lane-padded head (sliced later)
        head_w = jnp.pad(nrm((D, self.num_classes)),
                         ((0, 0), (0, ncp - self.num_classes))).astype(jnp.bfloat16)
        params = {
            "patch_w": nrm((self.patch_dim, D), dtype=jnp.bfloat16),
            "patch_b": jnp.zeros((D,), jnp.float32),
            "pos_emb": nrm((1, self.num_patches + 1, D)),
            "cls_token": nrm((1, 1, D)),
            "head_ln_g": jnp.ones((D,), jnp.float32),
            "head_ln_b": jnp.zeros((D,), jnp.float32),
            "head_w": head_w,
            "head_b": jnp.zeros((ncp,), jnp.float32),
            "layers": [],
        }
        for _ in range(self.depth):
            params["layers"].append({
                "ln1_g": jnp.ones((D,), jnp.float32),
                "ln1_b": jnp.zeros((D,), jnp.float32),
                "w_qkv": nrm((D, 3 * I), dtype=jnp.bfloat16),   # bias=False in DeepViT
                "reattn_w": nrm((H, H), scale=1.0 / H),
                "reattn_ln_g": jnp.ones((H,), jnp.float32),
                "reattn_ln_b": jnp.zeros((H,), jnp.float32),
                "w_o": nrm((I, D), dtype=jnp.bfloat16),
                "b_o": jnp.zeros((D,), jnp.float32),
                "ln2_g": jnp.ones((D,), jnp.float32),
                "ln2_b": jnp.zeros((D,), jnp.float32),
                "w1": nrm((D, M), dtype=jnp.bfloat16),
                "b1": jnp.zeros((M,), jnp.float32),
                "w2": nrm((M, D), dtype=jnp.bfloat16),
                "b2": jnp.zeros((D,), jnp.float32),
            })
        return params

    # -- forward ---------------------------------------------------------------
    def _forward(self, params, x1, x2):
        B, C, Himg, Wimg = x1.shape
        p = self.patch_size
        hg, wg = Himg // p, Wimg // p
        D, I = self.vit_dim, self.inner_dim

        def to_patches(img):
            # rearrange 'b c (h p1) (w p2) -> (b h w) (p1 p2 c)'  (layout only, no math)
            t = img.reshape(B, C, hg, p, wg, p)
            t = t.transpose(0, 2, 4, 3, 5, 1)
            return t.reshape(B * hg * wg, p * p * C)

        p1 = to_patches(x1.astype(jnp.float32))
        p2 = to_patches(x2.astype(jnp.float32))
        # x_diff = x2 - x1 folded into the patch-embedding matmul: (p2 - p1) @ W + b
        tok = fused_matmul(p2, params["patch_w"], params["patch_b"], x_sub=p1)
        tok = tok.reshape(B, hg * wg, D)

        cls = jnp.broadcast_to(params["cls_token"], (B, 1, D))
        x = jnp.concatenate([cls, tok], axis=1)
        x = x + params["pos_emb"][:, : x.shape[1]]
        N = x.shape[1]
        # emb_dropout / dropout: identity in eval mode

        x2d = x.reshape(B * N, D)
        for lp in params["layers"]:
            # PreNorm(Re-Attention): LN fused into the QKV projection
            qkv = fused_matmul(x2d, lp["w_qkv"], None,
                               ln=(lp["ln1_g"], lp["ln1_b"]),
                               out_dtype=jnp.bfloat16)
            attn_out = fused_reattention(
                qkv.reshape(B, N, 3 * I),
                lp["reattn_w"], lp["reattn_ln_g"], lp["reattn_ln_b"],
                heads=self.heads, dim_head=self.dim_head)
            # output projection with fused residual add
            x2d = fused_matmul(attn_out.reshape(B * N, I), lp["w_o"], lp["b_o"],
                               residual=x2d)

            # PreNorm(MLP): LN + GELU fused into the first matmul, residual into 2nd
            h1 = fused_matmul(x2d, lp["w1"], lp["b1"],
                              ln=(lp["ln2_g"], lp["ln2_b"]), gelu=True,
                              out_dtype=jnp.bfloat16)
            x2d = fused_matmul(h1, lp["w2"], lp["b2"], residual=x2d)

        x = x2d.reshape(B, N, D)
        cls_out = x[:, 0]                                   # pool = 'cls'
        # mlp_head = LayerNorm + Linear (LN fused), lane-padded output then sliced
        out = fused_matmul(cls_out, params["head_w"], params["head_b"],
                           ln=(params["head_ln_g"], params["head_ln_b"]))
        out = out[:, : self.num_classes]
        logits = out[:, : self.dim]
        shift = out[:, -1]
        return logits, jnp.squeeze(shift)

    # -- top-level forward (matches ViTDiffShiftPredictor.forward) ------------
    def __call__(self, x1, x2):
        return self._forward_jit(self.params, x1, x2)


# ----------------------------------------------------------------------------
if __name__ == "__main__":
    key = jax.random.PRNGKey(0)
    k1, k2, kp = jax.random.split(key, 3)

    B, C, S = 2, 4, 16           # batch, channels, image size (NCHW)
    latent_dim = 8               # -> num_classes = 9

    # Small config for the demo (architecture identical to the PyTorch module,
    # which hardcodes vit_dim=1024, depth=6, heads=16, mlp_dim=2048).
    model = ViTDiffShiftPredictorPallas(
        image_size=S, dim=latent_dim, channels=C, patch_size=8,
        vit_dim=128, depth=2, heads=4, dim_head=32, mlp_dim=256,
        key=kp,
    )

    x1 = jax.random.normal(k1, (B, C, S, S), jnp.float32)
    x2 = jax.random.normal(k2, (B, C, S, S), jnp.float32)

    logits, shift = model(x1, x2)
    jax.block_until_ready((logits, shift))

    assert logits.shape == (B, latent_dim), logits.shape
    assert shift.shape == (B,), shift.shape
    assert bool(jnp.all(jnp.isfinite(logits))) and bool(jnp.all(jnp.isfinite(shift)))
    print("KERNEL_OK")
</pallas_src>

<mosaic_0001>
module attributes {stable_mosaic.version = 11 : i64} {
  func.func @_fused_mm_kernel(%arg0: i32, %arg1: i32, %arg2: memref<8x256xf32, #tpu.memory_space<vmem>>, %arg3: memref<8x256xf32, #tpu.memory_space<vmem>>, %arg4: memref<256x128xbf16, #tpu.memory_space<vmem>>, %arg5: memref<1x128xf32, #tpu.memory_space<vmem>>, %arg6: memref<8x128xf32, #tpu.memory_space<vmem>>) attributes {dimension_semantics = [#tpu.dimension_semantics<parallel>, #tpu.dimension_semantics<parallel>], iteration_bounds = array<i64: 1, 1>, scalar_prefetch = 0 : i64, scratch_operands = 0 : i64, tpu.core_type = #tpu.core_type<tc>, window_params = [{transform_indices = @transform_0, window_bounds = array<i64: 8, 256>}, {transform_indices = @transform_1, window_bounds = array<i64: 8, 256>}, {transform_indices = @transform_2, window_bounds = array<i64: 256, 128>}, {transform_indices = @transform_3, window_bounds = array<i64: 1, 128>}, {transform_indices = @transform_4, window_bounds = array<i64: 8, 128>}]} {
    %c0 = arith.constant 0 : index
    %c0_0 = arith.constant 0 : index
    %0 = vector.load %arg2[%c0, %c0_0] : memref<8x256xf32, #tpu.memory_space<vmem>>, vector<8x256xf32>
    %c0_1 = arith.constant 0 : index
    %c0_2 = arith.constant 0 : index
    %1 = vector.load %arg3[%c0_1, %c0_2] : memref<8x256xf32, #tpu.memory_space<vmem>>, vector<8x256xf32>
    %2 = arith.subf %0, %1 : vector<8x256xf32>
    %3 = arith.truncf %2 : vector<8x256xf32> to vector<8x256xbf16>
    %c0_3 = arith.constant 0 : index
    %c0_4 = arith.constant 0 : index
    %4 = vector.load %arg4[%c0_3, %c0_4] : memref<256x128xbf16, #tpu.memory_space<vmem>>, vector<256x128xbf16>
    %cst = arith.constant dense<0.000000e+00> : vector<8x128xf32>
    %5 = tpu.matmul %3, %4, %cst {dimension_numbers = #tpu.dot_dimension_numbers<[1], [0], [0], [1], [0, 0, 1, 1], [], []>} : vector<8x256xbf16>, vector<256x128xbf16>, vector<8x128xf32> -> vector<8x128xf32>
    %c0_5 = arith.constant 0 : index
    %c0_6 = arith.constant 0 : index
    %6 = vector.load %arg5[%c0_5, %c0_6] : memref<1x128xf32, #tpu.memory_space<vmem>>, vector<1x128xf32>
    %7 = vector.broadcast %6 : vector<1x128xf32> to vector<8x128xf32>
    %8 = arith.addf %5, %7 : vector<8x128xf32>
    %c0_7 = arith.constant 0 : index
    %c0_8 = arith.constant 0 : index
    %9 = vector.load %arg6[%c0_7, %c0_8] : memref<8x128xf32, #tpu.memory_space<vmem>>, vector<8x128xf32>
    tpu.vector_store %arg6[%c0_7, %c0_8], %8 {strides = array<i32>} : memref<8x128xf32, #tpu.memory_space<vmem>>, vector<8x128xf32>,
    return
  }
  func.func @transform_0(%arg0: i32, %arg1: i32) -> (i32, i32) {
    %c0_i32 = arith.constant 0 : i32
    %c0_i32_0 = arith.constant 0 : i32
    return %arg0, %c0_i32 : i32, i32
  }
  func.func @transform_1(%arg0: i32, %arg1: i32) -> (i32, i32) {
    %c0_i32 = arith.constant 0 : i32
    %c0_i32_0 = arith.constant 0 : i32
    return %arg0, %c0_i32 : i32, i32
  }
  func.func @transform_2(%arg0: i32, %arg1: i32) -> (i32, i32) {
    %c0_i32 = arith.constant 0 : i32
    %c0_i32_0 = arith.constant 0 : i32
    return %c0_i32, %arg1 : i32, i32
  }
  func.func @transform_3(%arg0: i32, %arg1: i32) -> (i32, i32) {
    %c0_i32 = arith.constant 0 : i32
    %c0_i32_0 = arith.constant 0 : i32
    return %c0_i32, %arg1 : i32, i32
  }
  func.func @transform_4(%arg0: i32, %arg1: i32) -> (i32, i32) {
    %c0_i32 = arith.constant 0 : i32
    return %arg0, %arg1 : i32, i32
  }
}

module attributes {stable_mosaic.version = 11 : i64} {
  func.func @_fused_mm_kernel(%arg0: i32, %arg1: i32, %arg2: memref<16x128xf32, #tpu.memory_space<vmem>>, %arg3: memref<128x384xbf16, #tpu.memory_space<vmem>>, %arg4: memref<1x128xf32, #tpu.memory_space<vmem>>, %arg5: memref<1x128xf32, #tpu.memory_space<vmem>>, %arg6: memref<16x384xbf16, #tpu.memory_space<vmem>>) attributes {dimension_semantics = [#tpu.dimension_semantics<parallel>, #tpu.dimension_semantics<parallel>], iteration_bounds = array<i64: 1, 1>, scalar_prefetch = 0 : i64, scratch_operands = 0 : i64, tpu.core_type = #tpu.core_type<tc>, window_params = [{transform_indices = @transform_0, window_bounds = array<i64: 16, 128>}, {transform_indices = @transform_1, window_bounds = array<i64: 128, 384>}, {pipeline_mode = #tpu.pipeline_mode<synchronous>, transform_indices = @transform_2, window_bounds = array<i64: 1, 128>}, {pipeline_mode = #tpu.pipeline_mode<synchronous>, transform_indices = @transform_3, window_bounds = array<i64: 1, 128>}, {transform_indices = @transform_4, window_bounds = array<i64: 16, 384>}]} {
    %c0 = arith.constant 0 : index
    %c0_0 = arith.constant 0 : index
    %0 = vector.load %arg2[%c0, %c0_0] : memref<16x128xf32, #tpu.memory_space<vmem>>, vector<16x128xf32>
    %cst = arith.constant dense<0.000000e+00> : vector<16xf32>
    %1 = vector.multi_reduction <add>, %0, %cst [1] : vector<16x128xf32> to vector<16xf32>
    %2 = vector.shape_cast %1 : vector<16xf32> to vector<16x1xf32>
    %cst_1 = arith.constant 1.280000e+02 : f32
    %3 = vector.broadcast %cst_1 : f32 to vector<16x1xf32>
    %4 = arith.divf %2, %3 : vector<16x1xf32>
    %5 = vector.broadcast %4 : vector<16x1xf32> to vector<16x128xf32>
    %6 = arith.subf %0, %5 : vector<16x128xf32>
    %7 = arith.mulf %6, %6 : vector<16x128xf32>
    %cst_2 = arith.constant dense<0.000000e+00> : vector<16xf32>
    %8 = vector.multi_reduction <add>, %7, %cst_2 [1] : vector<16x128xf32> to vector<16xf32>
    %9 = vector.shape_cast %8 : vector<16xf32> to vector<16x1xf32>
    %cst_3 = arith.constant 1.280000e+02 : f32
    %10 = vector.broadcast %cst_3 : f32 to vector<16x1xf32>
    %11 = arith.divf %9, %10 : vector<16x1xf32>
    %cst_4 = arith.constant 9.99999974E-6 : f32
    %12 = vector.broadcast %cst_4 : f32 to vector<16x1xf32>
    %13 = arith.addf %11, %12 : vector<16x1xf32>
    %14 = math.rsqrt %13 : vector<16x1xf32>
    %15 = vector.broadcast %14 : vector<16x1xf32> to vector<16x128xf32>
    %16 = arith.mulf %6, %15 : vector<16x128xf32>
    %c0_5 = arith.constant 0 : index
    %c0_6 = arith.constant 0 : index
    %17 = vector.load %arg4[%c0_5, %c0_6] : memref<1x128xf32, #tpu.memory_space<vmem>>, vector<1x128xf32>
    %18 = vector.broadcast %17 : vector<1x128xf32> to vector<16x128xf32>
    %19 = arith.mulf %16, %18 : vector<16x128xf32>
    %c0_7 = arith.constant 0 : index
    %c0_8 = arith.constant 0 : index
    %20 = vector.load %arg5[%c0_7, %c0_8] : memref<1x128xf32, #tpu.memory_space<vmem>>, vector<1x128xf32>
    %21 = vector.broadcast %20 : vector<1x128xf32> to vector<16x128xf32>
    %22 = arith.addf %19, %21 : vector<16x128xf32>
    %23 = arith.truncf %22 : vector<16x128xf32> to vector<16x128xbf16>
    %c0_9 = arith.constant 0 : index
    %c0_10 = arith.constant 0 : index
    %24 = vector.load %arg3[%c0_9, %c0_10] : memref<128x384xbf16, #tpu.memory_space<vmem>>, vector<128x384xbf16>
    %cst_11 = arith.constant dense<0.000000e+00> : vector<16x384xf32>
    %25 = tpu.matmul %23, %24, %cst_11 {dimension_numbers = #tpu.dot_dimension_numbers<[1], [0], [0], [1], [0, 0, 1, 1], [], []>} : vector<16x128xbf16>, vector<128x384xbf16>, vector<16x384xf32> -> vector<16x384xf32>
    %26 = arith.truncf %25 : vector<16x384xf32> to vector<16x384xbf16>
    %c0_12 = arith.constant 0 : index
    %c0_13 = arith.constant 0 : index
    %27 = vector.load %arg6[%c0_12, %c0_13] : memref<16x384xbf16, #tpu.memory_space<vmem>>, vector<16x384xbf16>
    tpu.vector_store %arg6[%c0_12, %c0_13], %26 {strides = array<i32>} : memref<16x384xbf16, #tpu.memory_space<vmem>>, vector<16x384xbf16>,
    return
  }
  func.func @transform_0(%arg0: i32, %arg1: i32) -> (i32, i32) {
    %c0_i32 = arith.constant 0 : i32
    %c0_i32_0 = arith.constant 0 : i32
    return %arg0, %c0_i32 : i32, i32
  }
  func.func @transform_1(%arg0: i32, %arg1: i32) -> (i32, i32) {
    %c0_i32 = arith.constant 0 : i32
    %c0_i32_0 = arith.constant 0 : i32
    return %c0_i32, %arg1 : i32, i32
  }
  func.func @transform_2(%arg0: i32, %arg1: i32) -> (i32, i32) {
    %c0_i32 = arith.constant 0 : i32
    %c0_i32_0 = arith.constant 0 : i32
    %c0_i32_1 = arith.constant 0 : i32
    return %c0_i32, %c0_i32_0 : i32, i32
  }
  func.func @transform_3(%arg0: i32, %arg1: i32) -> (i32, i32) {
    %c0_i32 = arith.constant 0 : i32
    %c0_i32_0 = arith.constant 0 : i32
    %c0_i32_1 = arith.constant 0 : i32
    return %c0_i32, %c0_i32_0 : i32, i32
  }
  func.func @transform_4(%arg0: i32, %arg1: i32) -> (i32, i32) {
    %c0_i32 = arith.constant 0 : i32
    return %arg0, %arg1 : i32, i32
  }
}

module attributes {stable_mosaic.version = 11 : i64} {
  func.func @_reattn_kernel(%arg0: i32, %arg1: memref<1x5x384xbf16, #tpu.memory_space<vmem>>, %arg2: memref<4x4xf32, #tpu.memory_space<smem>>, %arg3: memref<4xf32, #tpu.memory_space<smem>>, %arg4: memref<4xf32, #tpu.memory_space<smem>>, %arg5: memref<1x5x128xbf16, #tpu.memory_space<vmem>>) attributes {dimension_semantics = [#tpu.dimension_semantics<parallel>], iteration_bounds = array<i64: 2>, scalar_prefetch = 0 : i64, scratch_operands = 0 : i64, tpu.core_type = #tpu.core_type<tc>, window_params = [{transform_indices = @transform_0, window_bounds = array<i64: 1, 5, 384>}, {transform_indices = @transform_1, window_bounds = array<i64: 4, 4>}, {transform_indices = @transform_2, window_bounds = array<i64: 4>}, {transform_indices = @transform_3, window_bounds = array<i64: 4>}, {transform_indices = @transform_4, window_bounds = array<i64: 1, 5, 128>}]} {
    %c0 = arith.constant 0 : index
    %c0_0 = arith.constant 0 : index
    %c0_1 = arith.constant 0 : index
    %0 = vector.load %arg1[%c0, %c0_0, %c0_1] : memref<1x5x384xbf16, #tpu.memory_space<vmem>>, vector<1x5x32xbf16>
    %1 = vector.shape_cast %0 : vector<1x5x32xbf16> to vector<5x32xbf16>
    %c0_2 = arith.constant 0 : index
    %c0_3 = arith.constant 0 : index
    %c128 = arith.constant 128 : index
    %2 = vector.load %arg1[%c0_2, %c0_3, %c128] : memref<1x5x384xbf16, #tpu.memory_space<vmem>>, vector<1x5x32xbf16>
    %3 = vector.shape_cast %2 : vector<1x5x32xbf16> to vector<5x32xbf16>
    %cst = arith.constant dense<0.000000e+00> : vector<5x5xf32>
    %4 = tpu.matmul %1, %3, %cst {dimension_numbers = #tpu.dot_dimension_numbers<[1], [1], [0], [0], [0, 0, 1, 0], [], []>} : vector<5x32xbf16>, vector<5x32xbf16>, vector<5x5xf32> -> vector<5x5xf32>
    %cst_4 = arith.constant 0.176776692 : f32
    %5 = vector.broadcast %cst_4 : f32 to vector<5x5xf32>
    %6 = arith.mulf %4, %5 : vector<5x5xf32>
    %cst_5 = arith.constant dense<0xFF800000> : vector<5xf32>
    %7 = vector.multi_reduction <maximumf>, %6, %cst_5 [1] : vector<5x5xf32> to vector<5xf32>
    %8 = vector.shape_cast %7 : vector<5xf32> to vector<5x1xf32>
    %9 = vector.broadcast %8 : vector<5x1xf32> to vector<5x5xf32>
    %10 = arith.subf %6, %9 : vector<5x5xf32>
    %11 = math.exp %10 : vector<5x5xf32>
    %cst_6 = arith.constant dense<0.000000e+00> : vector<5xf32>
    %12 = vector.multi_reduction <add>, %11, %cst_6 [1] : vector<5x5xf32> to vector<5xf32>
    %13 = vector.shape_cast %12 : vector<5xf32> to vector<5x1xf32>
    %14 = vector.broadcast %13 : vector<5x1xf32> to vector<5x5xf32>
    %15 = arith.divf %11, %14 : vector<5x5xf32>
    %c0_7 = arith.constant 0 : index
    %c0_8 = arith.constant 0 : index
    %c32 = arith.constant 32 : index
    %16 = vector.load %arg1[%c0_7, %c0_8, %c32] : memref<1x5x384xbf16, #tpu.memory_space<vmem>>, vector<1x5x32xbf16>
    %17 = vector.shape_cast %16 : vector<1x5x32xbf16> to vector<5x32xbf16>
    %c0_9 = arith.constant 0 : index
    %c0_10 = arith.constant 0 : index
    %c160 = arith.constant 160 : index
    %18 = vector.load %arg1[%c0_9, %c0_10, %c160] : memref<1x5x384xbf16, #tpu.memory_space<vmem>>, vector<1x5x32xbf16>
    %19 = vector.shape_cast %18 : vector<1x5x32xbf16> to vector<5x32xbf16>
    %cst_11 = arith.constant dense<0.000000e+00> : vector<5x5xf32>
    %20 = tpu.matmul %17, %19, %cst_11 {dimension_numbers = #tpu.dot_dimension_numbers<[1], [1], [0], [0], [0, 0, 1, 0], [], []>} : vector<5x32xbf16>, vector<5x32xbf16>, vector<5x5xf32> -> vector<5x5xf32>
    %cst_12 = arith.constant 0.176776692 : f32
    %21 = vector.broadcast %cst_12 : f32 to vector<5x5xf32>
    %22 = arith.mulf %20, %21 : vector<5x5xf32>
    %cst_13 = arith.constant dense<0xFF800000> : vector<5xf32>
    %23 = vector.multi_reduction <maximumf>, %22, %cst_13 [1] : vector<5x5xf32> to vector<5xf32>
    %24 = vector.shape_cast %23 : vector<5xf32> to vector<5x1xf32>
    %25 = vector.broadcast %24 : vector<5x1xf32> to vector<5x5xf32>
    %26 = arith.subf %22, %25 : vector<5x5xf32>
    %27 = math.exp %26 : vector<5x5xf32>
    %cst_14 = arith.constant dense<0.000000e+00> : vector<5xf32>
    %28 = vector.multi_reduction <add>, %27, %cst_14 [1] : vector<5x5xf32> to vector<5xf32>
    %29 = vector.shape_cast %28 : vector<5xf32> to vector<5x1xf32>
    %30 = vector.broadcast %29 : vector<5x1xf32> to vector<5x5xf32>
    %31 = arith.divf %27, %30 : vector<5x5xf32>
    %c0_15 = arith.constant 0 : index
    %c0_16 = arith.constant 0 : index
    %c64 = arith.constant 64 : index
    %32 = vector.load %arg1[%c0_15, %c0_16, %c64] : memref<1x5x384xbf16, #tpu.memory_space<vmem>>, vector<1x5x32xbf16>
    %33 = vector.shape_cast %32 : vector<1x5x32xbf16> to vector<5x32xbf16>
    %c0_17 = arith.constant 0 : index
    %c0_18 = arith.constant 0 : index
    %c192 = arith.constant 192 : index
    %34 = vector.load %arg1[%c0_17, %c0_18, %c192] : memref<1x5x384xbf16, #tpu.memory_space<vmem>>, vector<1x5x32xbf16>
    %35 = vector.shape_cast %34 : vector<1x5x32xbf16> to vector<5x32xbf16>
    %cst_19 = arith.constant dense<0.000000e+00> : vector<5x5xf32>
    %36 = tpu.matmul %33, %35, %cst_19 {dimension_numbers = #tpu.dot_dimension_numbers<[1], [1], [0], [0], [0, 0, 1, 0], [], []>} : vector<5x32xbf16>, vector<5x32xbf16>, vector<5x5xf32> -> vector<5x5xf32>
    %cst_20 = arith.constant 0.176776692 : f32
    %37 = vector.broadcast %cst_20 : f32 to vector<5x5xf32>
    %38 = arith.mulf %36, %37 : vector<5x5xf32>
    %cst_21 = arith.constant dense<0xFF800000> : vector<5xf32>
    %39 = vector.multi_reduction <maximumf>, %38, %cst_21 [1] : vector<5x5xf32> to vector<5xf32>
    %40 = vector.shape_cast %39 : vector<5xf32> to vector<5x1xf32>
    %41 = vector.broadcast %40 : vector<5x1xf32> to vector<5x5xf32>
    %42 = arith.subf %38, %41 : vector<5x5xf32>
    %43 = math.exp %42 : vector<5x5xf32>
    %cst_22 = arith.constant dense<0.000000e+00> : vector<5xf32>
    %44 = vector.multi_reduction <add>, %43, %cst_22 [1] : vector<5x5xf32> to vector<5xf32>
    %45 = vector.shape_cast %44 : vector<5xf32> to vector<5x1xf32>
    %46 = vector.broadcast %45 : vector<5x1xf32> to vector<5x5xf32>
    %47 = arith.divf %43, %46 : vector<5x5xf32>
    %c0_23 = arith.constant 0 : index
    %c0_24 = arith.constant 0 : index
    %c96 = arith.constant 96 : index
    %48 = vector.load %arg1[%c0_23, %c0_24, %c96] : memref<1x5x384xbf16, #tpu.memory_space<vmem>>, vector<1x5x32xbf16>
    %49 = vector.shape_cast %48 : vector<1x5x32xbf16> to vector<5x32xbf16>
    %c0_25 = arith.constant 0 : index
    %c0_26 = arith.constant 0 : index
    %c224 = arith.constant 224 : index
    %50 = vector.load %arg1[%c0_25, %c0_26, %c224] : memref<1x5x384xbf16, #tpu.memory_space<vmem>>, vector<1x5x32xbf16>
    %51 = vector.shape_cast %50 : vector<1x5x32xbf16> to vector<5x32xbf16>
    %cst_27 = arith.constant dense<0.000000e+00> : vector<5x5xf32>
    %52 = tpu.matmul %49, %51, %cst_27 {dimension_numbers = #tpu.dot_dimension_numbers<[1], [1], [0], [0], [0, 0, 1, 0], [], []>} : vector<5x32xbf16>, vector<5x32xbf16>, vector<5x5xf32> -> vector<5x5xf32>
    %cst_28 = arith.constant 0.176776692 : f32
    %53 = vector.broadcast %cst_28 : f32 to vector<5x5xf32>
    %54 = arith.mulf %52, %53 : vector<5x5xf32>
    %cst_29 = arith.constant dense<0xFF800000> : vector<5xf32>
    %55 = vector.multi_reduction <maximumf>, %54, %cst_29 [1] : vector<5x5xf32> to vector<5xf32>
    %56 = vector.shape_cast %55 : vector<5xf32> to vector<5x1xf32>
    %57 = vector.broadcast %56 : vector<5x1xf32> to vector<5x5xf32>
    %58 = arith.subf %54, %57 : vector<5x5xf32>
    %59 = math.exp %58 : vector<5x5xf32>
    %cst_30 = arith.constant dense<0.000000e+00> : vector<5xf32>
    %60 = vector.multi_reduction <add>, %59, %cst_30 [1] : vector<5x5xf32> to vector<5xf32>
    %61 = vector.shape_cast %60 : vector<5xf32> to vector<5x1xf32>
    %62 = vector.broadcast %61 : vector<5x1xf32> to vector<5x5xf32>
    %63 = arith.divf %59, %62 : vector<5x5xf32>
    %c0_31 = arith.constant 0 : index
    %c0_32 = arith.constant 0 : index
    %64 = memref.load %arg2[%c0_31, %c0_32] : memref<4x4xf32, #tpu.memory_space<smem>>
    %65 = vector.broadcast %64 : f32 to vector<5x5xf32>
    %66 = arith.mulf %15, %65 : vector<5x5xf32>
    %c1 = arith.constant 1 : index
    %c0_33 = arith.constant 0 : index
    %67 = memref.load %arg2[%c1, %c0_33] : memref<4x4xf32, #tpu.memory_space<smem>>
    %68 = vector.broadcast %67 : f32 to vector<5x5xf32>
    %69 = arith.mulf %31, %68 : vector<5x5xf32>
    %70 = arith.addf %66, %69 : vector<5x5xf32>
    %c2 = arith.constant 2 : index
    %c0_34 = arith.constant 0 : index
    %71 = memref.load %arg2[%c2, %c0_34] : memref<4x4xf32, #tpu.memory_space<smem>>
    %72 = vector.broadcast %71 : f32 to vector<5x5xf32>
    %73 = arith.mulf %47, %72 : vector<5x5xf32>
    %74 = arith.addf %70, %73 : vector<5x5xf32>
    %c3 = arith.constant 3 : index
    %c0_35 = arith.constant 0 : index
    %75 = memref.load %arg2[%c3, %c0_35] : memref<4x4xf32, #tpu.memory_space<smem>>
    %76 = vector.broadcast %75 : f32 to vector<5x5xf32>
    %77 = arith.mulf %63, %76 : vector<5x5xf32>
    %78 = arith.addf %74, %77 : vector<5x5xf32>
    %c0_36 = arith.constant 0 : index
    %c1_37 = arith.constant 1 : index
    %79 = memref.load %arg2[%c0_36, %c1_37] : memref<4x4xf32, #tpu.memory_space<smem>>
    %80 = vector.broadcast %79 : f32 to vector<5x5xf32>
    %81 = arith.mulf %15, %80 : vector<5x5xf32>
    %c1_38 = arith.constant 1 : index
    %c1_39 = arith.constant 1 : index
    %82 = memref.load %arg2[%c1_38, %c1_39] : memref<4x4xf32, #tpu.memory_space<smem>>
    %83 = vector.broadcast %82 : f32 to vector<5x5xf32>
    %84 = arith.mulf %31, %83 : vector<5x5xf32>
    %85 = arith.addf %81, %84 : vector<5x5xf32>
    %c2_40 = arith.constant 2 : index
    %c1_41 = arith.constant 1 : index
    %86 = memref.load %arg2[%c2_40, %c1_41] : memref<4x4xf32, #tpu.memory_space<smem>>
    %87 = vector.broadcast %86 : f32 to vector<5x5xf32>
    %88 = arith.mulf %47, %87 : vector<5x5xf32>
    %89 = arith.addf %85, %88 : vector<5x5xf32>
    %c3_42 = arith.constant 3 : index
    %c1_43 = arith.constant 1 : index
    %90 = memref.load %arg2[%c3_42, %c1_43] : memref<4x4xf32, #tpu.memory_space<smem>>
    %91 = vector.broadcast %90 : f32 to vector<5x5xf32>
    %92 = arith.mulf %63, %91 : vector<5x5xf32>
    %93 = arith.addf %89, %92 : vector<5x5xf32>
    %c0_44 = arith.constant 0 : index
    %c2_45 = arith.constant 2 : index
    %94 = memref.load %arg2[%c0_44, %c2_45] : memref<4x4xf32, #tpu.memory_space<smem>>
    %95 = vector.broadcast %94 : f32 to vector<5x5xf32>
    %96 = arith.mulf %15, %95 : vector<5x5xf32>
    %c1_46 = arith.constant 1 : index
    %c2_47 = arith.constant 2 : index
    %97 = memref.load %arg2[%c1_46, %c2_47] : memref<4x4xf32, #tpu.memory_space<smem>>
    %98 = vector.broadcast %97 : f32 to vector<5x5xf32>
    %99 = arith.mulf %31, %98 : vector<5x5xf32>
    %100 = arith.addf %96, %99 : vector<5x5xf32>
    %c2_48 = arith.constant 2 : index
    %c2_49 = arith.constant 2 : index
    %101 = memref.load %arg2[%c2_48, %c2_49] : memref<4x4xf32, #tpu.memory_space<smem>>
    %102 = vector.broadcast %101 : f32 to vector<5x5xf32>
    %103 = arith.mulf %47, %102 : vector<5x5xf32>
    %104 = arith.addf %100, %103 : vector<5x5xf32>
    %c3_50 = arith.constant 3 : index
    %c2_51 = arith.constant 2 : index
    %105 = memref.load %arg2[%c3_50, %c2_51] : memref<4x4xf32, #tpu.memory_space<smem>>
    %106 = vector.broadcast %105 : f32 to vector<5x5xf32>
    %107 = arith.mulf %63, %106 : vector<5x5xf32>
    %108 = arith.addf %104, %107 : vector<5x5xf32>
    %c0_52 = arith.constant 0 : index
    %c3_53 = arith.constant 3 : index
    %109 = memref.load %arg2[%c0_52, %c3_53] : memref<4x4xf32, #tpu.memory_space<smem>>
    %110 = vector.broadcast %109 : f32 to vector<5x5xf32>
    %111 = arith.mulf %15, %110 : vector<5x5xf32>
    %c1_54 = arith.constant 1 : index
    %c3_55 = arith.constant 3 : index
    %112 = memref.load %arg2[%c1_54, %c3_55] : memref<4x4xf32, #tpu.memory_space<smem>>
    %113 = vector.broadcast %112 : f32 to vector<5x5xf32>
    %114 = arith.mulf %31, %113 : vector<5x5xf32>
    %115 = arith.addf %111, %114 : vector<5x5xf32>
    %c2_56 = arith.constant 2 : index
    %c3_57 = arith.constant 3 : index
    %116 = memref.load %arg2[%c2_56, %c3_57] : memref<4x4xf32, #tpu.memory_space<smem>>
    %117 = vector.broadcast %116 : f32 to vector<5x5xf32>
    %118 = arith.mulf %47, %117 : vector<5x5xf32>
    %119 = arith.addf %115, %118 : vector<5x5xf32>
    %c3_58 = arith.constant 3 : index
    %c3_59 = arith.constant 3 : index
    %120 = memref.load %arg2[%c3_58, %c3_59] : memref<4x4xf32, #tpu.memory_space<smem>>
    %121 = vector.broadcast %120 : f32 to vector<5x5xf32>
    %122 = arith.mulf %63, %121 : vector<5x5xf32>
    %123 = arith.addf %119, %122 : vector<5x5xf32>
    %124 = arith.addf %78, %93 : vector<5x5xf32>
    %125 = arith.addf %124, %108 : vector<5x5xf32>
    %126 = arith.addf %125, %123 : vector<5x5xf32>
    %cst_60 = arith.constant 2.500000e-01 : f32
    %127 = vector.broadcast %cst_60 : f32 to vector<5x5xf32>
    %128 = arith.mulf %126, %127 : vector<5x5xf32>
    %129 = arith.subf %78, %128 : vector<5x5xf32>
    %130 = arith.mulf %129, %129 : vector<5x5xf32>
    %131 = arith.subf %93, %128 : vector<5x5xf32>
    %132 = arith.mulf %131, %131 : vector<5x5xf32>
    %133 = arith.addf %130, %132 : vector<5x5xf32>
    %134 = arith.subf %108, %128 : vector<5x5xf32>
    %135 = arith.mulf %134, %134 : vector<5x5xf32>
    %136 = arith.addf %133, %135 : vector<5x5xf32>
    %137 = arith.subf %123, %128 : vector<5x5xf32>
    %138 = arith.mulf %137, %137 : vector<5x5xf32>
    %139 = arith.addf %136, %138 : vector<5x5xf32>
    %cst_61 = arith.constant 2.500000e-01 : f32
    %140 = vector.broadcast %cst_61 : f32 to vector<5x5xf32>
    %141 = arith.mulf %139, %140 : vector<5x5xf32>
    %cst_62 = arith.constant 9.99999974E-6 : f32
    %142 = vector.broadcast %cst_62 : f32 to vector<5x5xf32>
    %143 = arith.addf %141, %142 : vector<5x5xf32>
    %144 = math.rsqrt %143 : vector<5x5xf32>
    %145 = arith.subf %78, %128 : vector<5x5xf32>
    %146 = arith.mulf %145, %144 : vector<5x5xf32>
    %c0_63 = arith.constant 0 : index
    %147 = memref.load %arg3[%c0_63] : memref<4xf32, #tpu.memory_space<smem>>
    %148 = vector.broadcast %147 : f32 to vector<5x5xf32>
    %149 = arith.mulf %146, %148 : vector<5x5xf32>
    %c0_64 = arith.constant 0 : index
    %150 = memref.load %arg4[%c0_64] : memref<4xf32, #tpu.memory_space<smem>>
    %151 = vector.broadcast %150 : f32 to vector<5x5xf32>
    %152 = arith.addf %149, %151 : vector<5x5xf32>
    %153 = arith.truncf %152 : vector<5x5xf32> to vector<5x5xbf16>
    %c0_65 = arith.constant 0 : index
    %c0_66 = arith.constant 0 : index
    %c256 = arith.constant 256 : index
    %154 = vector.load %arg1[%c0_65, %c0_66, %c256] : memref<1x5x384xbf16, #tpu.memory_space<vmem>>, vector<1x5x32xbf16>
    %155 = vector.shape_cast %154 : vector<1x5x32xbf16> to vector<5x32xbf16>
    %cst_67 = arith.constant dense<0.000000e+00> : vector<5x32xf32>
    %156 = tpu.matmul %153, %155, %cst_67 {dimension_numbers = #tpu.dot_dimension_numbers<[1], [0], [0], [1], [0, 0, 1, 1], [], []>} : vector<5x5xbf16>, vector<5x32xbf16>, vector<5x32xf32> -> vector<5x32xf32>
    %157 = arith.truncf %156 : vector<5x32xf32> to vector<5x32xbf16>
    %c0_68 = arith.constant 0 : index
    %c0_69 = arith.constant 0 : index
    %c0_70 = arith.constant 0 : index
    %158 = vector.load %arg5[%c0_68, %c0_69, %c0_70] : memref<1x5x128xbf16, #tpu.memory_space<vmem>>, vector<1x5x32xbf16>
    %159 = vector.shape_cast %158 : vector<1x5x32xbf16> to vector<5x32xbf16>
    %160 = vector.shape_cast %157 : vector<5x32xbf16> to vector<1x5x32xbf16>
    tpu.vector_store %arg5[%c0_68, %c0_69, %c0_70], %160 {strides = array<i32>} : memref<1x5x128xbf16, #tpu.memory_space<vmem>>, vector<1x5x32xbf16>,
    %161 = arith.subf %93, %128 : vector<5x5xf32>
    %162 = arith.mulf %161, %144 : vector<5x5xf32>
    %c1_71 = arith.constant 1 : index
    %163 = memref.load %arg3[%c1_71] : memref<4xf32, #tpu.memory_space<smem>>
    %164 = vector.broadcast %163 : f32 to vector<5x5xf32>
    %165 = arith.mulf %162, %164 : vector<5x5xf32>
    %c1_72 = arith.constant 1 : index
    %166 = memref.load %arg4[%c1_72] : memref<4xf32, #tpu.memory_space<smem>>
    %167 = vector.broadcast %166 : f32 to vector<5x5xf32>
    %168 = arith.addf %165, %167 : vector<5x5xf32>
    %169 = arith.truncf %168 : vector<5x5xf32> to vector<5x5xbf16>
    %c0_73 = arith.constant 0 : index
    %c0_74 = arith.constant 0 : index
    %c288 = arith.constant 288 : index
    %170 = vector.load %arg1[%c0_73, %c0_74, %c288] : memref<1x5x384xbf16, #tpu.memory_space<vmem>>, vector<1x5x32xbf16>
    %171 = vector.shape_cast %170 : vector<1x5x32xbf16> to vector<5x32xbf16>
    %cst_75 = arith.constant dense<0.000000e+00> : vector<5x32xf32>
    %172 = tpu.matmul %169, %171, %cst_75 {dimension_numbers = #tpu.dot_dimension_numbers<[1], [0], [0], [1], [0, 0, 1, 1], [], []>} : vector<5x5xbf16>, vector<5x32xbf16>, vector<5x32xf32> -> vector<5x32xf32>
    %173 = arith.truncf %172 : vector<5x32xf32> to vector<5x32xbf16>
    %c0_76 = arith.constant 0 : index
    %c0_77 = arith.constant 0 : index
    %c32_78 = arith.constant 32 : index
    %174 = vector.load %arg5[%c0_76, %c0_77, %c32_78] : memref<1x5x128xbf16, #tpu.memory_space<vmem>>, vector<1x5x32xbf16>
    %175 = vector.shape_cast %174 : vector<1x5x32xbf16> to vector<5x32xbf16>
    %176 = vector.shape_cast %173 : vector<5x32xbf16> to vector<1x5x32xbf16>
    tpu.vector_store %arg5[%c0_76, %c0_77, %c32_78], %176 {strides = array<i32>} : memref<1x5x128xbf16, #tpu.memory_space<vmem>>, vector<1x5x32xbf16>,
    %177 = arith.subf %108, %128 : vector<5x5xf32>
    %178 = arith.mulf %177, %144 : vector<5x5xf32>
    %c2_79 = arith.constant 2 : index
    %179 = memref.load %arg3[%c2_79] : memref<4xf32, #tpu.memory_space<smem>>
    %180 = vector.broadcast %179 : f32 to vector<5x5xf32>
    %181 = arith.mulf %178, %180 : vector<5x5xf32>
    %c2_80 = arith.constant 2 : index
    %182 = memref.load %arg4[%c2_80] : memref<4xf32, #tpu.memory_space<smem>>
    %183 = vector.broadcast %182 : f32 to vector<5x5xf32>
    %184 = arith.addf %181, %183 : vector<5x5xf32>
    %185 = arith.truncf %184 : vector<5x5xf32> to vector<5x5xbf16>
    %c0_81 = arith.constant 0 : index
    %c0_82 = arith.constant 0 : index
    %c320 = arith.constant 320 : index
    %186 = vector.load %arg1[%c0_81, %c0_82, %c320] : memref<1x5x384xbf16, #tpu.memory_space<vmem>>, vector<1x5x32xbf16>
    %187 = vector.shape_cast %186 : vector<1x5x32xbf16> to vector<5x32xbf16>
    %cst_83 = arith.constant dense<0.000000e+00> : vector<5x32xf32>
    %188 = tpu.matmul %185, %187, %cst_83 {dimension_numbers = #tpu.dot_dimension_numbers<[1], [0], [0], [1], [0, 0, 1, 1], [], []>} : vector<5x5xbf16>, vector<5x32xbf16>, vector<5x32xf32> -> vector<5x32xf32>
    %189 = arith.truncf %188 : vector<5x32xf32> to vector<5x32xbf16>
    %c0_84 = arith.constant 0 : index
    %c0_85 = arith.constant 0 : index
    %c64_86 = arith.constant 64 : index
    %190 = vector.load %arg5[%c0_84, %c0_85, %c64_86] : memref<1x5x128xbf16, #tpu.memory_space<vmem>>, vector<1x5x32xbf16>
    %191 = vector.shape_cast %190 : vector<1x5x32xbf16> to vector<5x32xbf16>
    %192 = vector.shape_cast %189 : vector<5x32xbf16> to vector<1x5x32xbf16>
    tpu.vector_store %arg5[%c0_84, %c0_85, %c64_86], %192 {strides = array<i32>} : memref<1x5x128xbf16, #tpu.memory_space<vmem>>, vector<1x5x32xbf16>,
    %193 = arith.subf %123, %128 : vector<5x5xf32>
    %194 = arith.mulf %193, %144 : vector<5x5xf32>
    %c3_87 = arith.constant 3 : index
    %195 = memref.load %arg3[%c3_87] : memref<4xf32, #tpu.memory_space<smem>>
    %196 = vector.broadcast %195 : f32 to vector<5x5xf32>
    %197 = arith.mulf %194, %196 : vector<5x5xf32>
    %c3_88 = arith.constant 3 : index
    %198 = memref.load %arg4[%c3_88] : memref<4xf32, #tpu.memory_space<smem>>
    %199 = vector.broadcast %198 : f32 to vector<5x5xf32>
    %200 = arith.addf %197, %199 : vector<5x5xf32>
    %201 = arith.truncf %200 : vector<5x5xf32> to vector<5x5xbf16>
    %c0_89 = arith.constant 0 : index
    %c0_90 = arith.constant 0 : index
    %c352 = arith.constant 352 : index
    %202 = vector.load %arg1[%c0_89, %c0_90, %c352] : memref<1x5x384xbf16, #tpu.memory_space<vmem>>, vector<1x5x32xbf16>
    %203 = vector.shape_cast %202 : vector<1x5x32xbf16> to vector<5x32xbf16>
    %cst_91 = arith.constant dense<0.000000e+00> : vector<5x32xf32>
    %204 = tpu.matmul %201, %203, %cst_91 {dimension_numbers = #tpu.dot_dimension_numbers<[1], [0], [0], [1], [0, 0, 1, 1], [], []>} : vector<5x5xbf16>, vector<5x32xbf16>, vector<5x32xf32> -> vector<5x32xf32>
    %205 = arith.truncf %204 : vector<5x32xf32> to vector<5x32xbf16>
    %c0_92 = arith.constant 0 : index
    %c0_93 = arith.constant 0 : index
    %c96_94 = arith.constant 96 : index
    %206 = vector.load %arg5[%c0_92, %c0_93, %c96_94] : memref<1x5x128xbf16, #tpu.memory_space<vmem>>, vector<1x5x32xbf16>
    %207 = vector.shape_cast %206 : vector<1x5x32xbf16> to vector<5x32xbf16>
    %208 = vector.shape_cast %205 : vector<5x32xbf16> to vector<1x5x32xbf16>
    tpu.vector_store %arg5[%c0_92, %c0_93, %c96_94], %208 {strides = array<i32>} : memref<1x5x128xbf16, #tpu.memory_space<vmem>>, vector<1x5x32xbf16>,
    return
  }
  func.func @transform_0(%arg0: i32) -> (i32, i32, i32) {
    %c0_i32 = arith.constant 0 : i32
    %c0_i32_0 = arith.constant 0 : i32
    %c0_i32_1 = arith.constant 0 : i32
    return %arg0, %c0_i32, %c0_i32_0 : i32, i32, i32
  }
  func.func @transform_1(%arg0: i32) -> (i32, i32) {
    %c0_i32 = arith.constant 0 : i32
    %c0_i32_0 = arith.constant 0 : i32
    %c0_i32_1 = arith.constant 0 : i32
    return %c0_i32, %c0_i32_0 : i32, i32
  }
  func.func @transform_2(%arg0: i32) -> i32 {
    %c0_i32 = arith.constant 0 : i32
    %c0_i32_0 = arith.constant 0 : i32
    return %c0_i32 : i32
  }
  func.func @transform_3(%arg0: i32) -> i32 {
    %c0_i32 = arith.constant 0 : i32
    %c0_i32_0 = arith.constant 0 : i32
    return %c0_i32 : i32
  }
  func.func @transform_4(%arg0: i32) -> (i32, i32, i32) {
    %c0_i32 = arith.constant 0 : i32
    %c0_i32_0 = arith.constant 0 : i32
    %c0_i32_1 = arith.constant 0 : i32
    return %arg0, %c0_i32, %c0_i32_0 : i32, i32, i32
  }
}

module attributes {stable_mosaic.version = 11 : i64} {
  func.func @_fused_mm_kernel(%arg0: i32, %arg1: i32, %arg2: memref<16x128xbf16, #tpu.memory_space<vmem>>, %arg3: memref<128x128xbf16, #tpu.memory_space<vmem>>, %arg4: memref<1x128xf32, #tpu.memory_space<vmem>>, %arg5: memref<16x128xf32, #tpu.memory_space<vmem>>, %arg6: memref<16x128xf32, #tpu.memory_space<vmem>>) attributes {dimension_semantics = [#tpu.dimension_semantics<parallel>, #tpu.dimension_semantics<parallel>], iteration_bounds = array<i64: 1, 1>, scalar_prefetch = 0 : i64, scratch_operands = 0 : i64, tpu.core_type = #tpu.core_type<tc>, window_params = [{transform_indices = @transform_0, window_bounds = array<i64: 16, 128>}, {transform_indices = @transform_1, window_bounds = array<i64: 128, 128>}, {transform_indices = @transform_2, window_bounds = array<i64: 1, 128>}, {transform_indices = @transform_3, window_bounds = array<i64: 16, 128>}, {transform_indices = @transform_4, window_bounds = array<i64: 16, 128>}]} {
    %c0 = arith.constant 0 : index
    %c0_0 = arith.constant 0 : index
    %0 = vector.load %arg2[%c0, %c0_0] : memref<16x128xbf16, #tpu.memory_space<vmem>>, vector<16x128xbf16>
    %c0_1 = arith.constant 0 : index
    %c0_2 = arith.constant 0 : index
    %1 = vector.load %arg3[%c0_1, %c0_2] : memref<128x128xbf16, #tpu.memory_space<vmem>>, vector<128x128xbf16>
    %cst = arith.constant dense<0.000000e+00> : vector<16x128xf32>
    %2 = tpu.matmul %0, %1, %cst {dimension_numbers = #tpu.dot_dimension_numbers<[1], [0], [0], [1], [0, 0, 1, 1], [], []>} : vector<16x128xbf16>, vector<128x128xbf16>, vector<16x128xf32> -> vector<16x128xf32>
    %c0_3 = arith.constant 0 : index
    %c0_4 = arith.constant 0 : index
    %3 = vector.load %arg4[%c0_3, %c0_4] : memref<1x128xf32, #tpu.memory_space<vmem>>, vector<1x128xf32>
    %4 = vector.broadcast %3 : vector<1x128xf32> to vector<16x128xf32>
    %5 = arith.addf %2, %4 : vector<16x128xf32>
    %c0_5 = arith.constant 0 : index
    %c0_6 = arith.constant 0 : index
    %6 = vector.load %arg5[%c0_5, %c0_6] : memref<16x128xf32, #tpu.memory_space<vmem>>, vector<16x128xf32>
    %7 = arith.addf %5, %6 : vector<16x128xf32>
    %c0_7 = arith.constant 0 : index
    %c0_8 = arith.constant 0 : index
    %8 = vector.load %arg6[%c0_7, %c0_8] : memref<16x128xf32, #tpu.memory_space<vmem>>, vector<16x128xf32>
    tpu.vector_store %arg6[%c0_7, %c0_8], %7 {strides = array<i32>} : memref<16x128xf32, #tpu.memory_space<vmem>>, vector<16x128xf32>,
    return
  }
  func.func @transform_0(%arg0: i32, %arg1: i32) -> (i32, i32) {
    %c0_i32 = arith.constant 0 : i32
    %c0_i32_0 = arith.constant 0 : i32
    return %arg0, %c0_i32 : i32, i32
  }
  func.func @transform_1(%arg0: i32, %arg1: i32) -> (i32, i32) {
    %c0_i32 = arith.constant 0 : i32
    %c0_i32_0 = arith.constant 0 : i32
    return %c0_i32, %arg1 : i32, i32
  }
  func.func @transform_2(%arg0: i32, %arg1: i32) -> (i32, i32) {
    %c0_i32 = arith.constant 0 : i32
    %c0_i32_0 = arith.constant 0 : i32
    return %c0_i32, %arg1 : i32, i32
  }
  func.func @transform_3(%arg0: i32, %arg1: i32) -> (i32, i32) {
    %c0_i32 = arith.constant 0 : i32
    return %arg0, %arg1 : i32, i32
  }
  func.func @transform_4(%arg0: i32, %arg1: i32) -> (i32, i32) {
    %c0_i32 = arith.constant 0 : i32
    return %arg0, %arg1 : i32, i32
  }
}

module attributes {stable_mosaic.version = 11 : i64} {
  func.func @_fused_mm_kernel(%arg0: i32, %arg1: i32, %arg2: memref<16x256xbf16, #tpu.memory_space<vmem>>, %arg3: memref<256x128xbf16, #tpu.memory_space<vmem>>, %arg4: memref<1x128xf32, #tpu.memory_space<vmem>>, %arg5: memref<16x128xf32, #tpu.memory_space<vmem>>, %arg6: memref<16x128xf32, #tpu.memory_space<vmem>>) attributes {dimension_semantics = [#tpu.dimension_semantics<parallel>, #tpu.dimension_semantics<parallel>], iteration_bounds = array<i64: 1, 1>, scalar_prefetch = 0 : i64, scratch_operands = 0 : i64, tpu.core_type = #tpu.core_type<tc>, window_params = [{transform_indices = @transform_0, window_bounds = array<i64: 16, 256>}, {transform_indices = @transform_1, window_bounds = array<i64: 256, 128>}, {transform_indices = @transform_2, window_bounds = array<i64: 1, 128>}, {transform_indices = @transform_3, window_bounds = array<i64: 16, 128>}, {transform_indices = @transform_4, window_bounds = array<i64: 16, 128>}]} {
    %c0 = arith.constant 0 : index
    %c0_0 = arith.constant 0 : index
    %0 = vector.load %arg2[%c0, %c0_0] : memref<16x256xbf16, #tpu.memory_space<vmem>>, vector<16x256xbf16>
    %c0_1 = arith.constant 0 : index
    %c0_2 = arith.constant 0 : index
    %1 = vector.load %arg3[%c0_1, %c0_2] : memref<256x128xbf16, #tpu.memory_space<vmem>>, vector<256x128xbf16>
    %cst = arith.constant dense<0.000000e+00> : vector<16x128xf32>
    %2 = tpu.matmul %0, %1, %cst {dimension_numbers = #tpu.dot_dimension_numbers<[1], [0], [0], [1], [0, 0, 1, 1], [], []>} : vector<16x256xbf16>, vector<256x128xbf16>, vector<16x128xf32> -> vector<16x128xf32>
    %c0_3 = arith.constant 0 : index
    %c0_4 = arith.constant 0 : index
    %3 = vector.load %arg4[%c0_3, %c0_4] : memref<1x128xf32, #tpu.memory_space<vmem>>, vector<1x128xf32>
    %4 = vector.broadcast %3 : vector<1x128xf32> to vector<16x128xf32>
    %5 = arith.addf %2, %4 : vector<16x128xf32>
    %c0_5 = arith.constant 0 : index
    %c0_6 = arith.constant 0 : index
    %6 = vector.load %arg5[%c0_5, %c0_6] : memref<16x128xf32, #tpu.memory_space<vmem>>, vector<16x128xf32>
    %7 = arith.addf %5, %6 : vector<16x128xf32>
    %c0_7 = arith.constant 0 : index
    %c0_8 = arith.constant 0 : index
    %8 = vector.load %arg6[%c0_7, %c0_8] : memref<16x128xf32, #tpu.memory_space<vmem>>, vector<16x128xf32>
    tpu.vector_store %arg6[%c0_7, %c0_8], %7 {strides = array<i32>} : memref<16x128xf32, #tpu.memory_space<vmem>>, vector<16x128xf32>,
    return
  }
  func.func @transform_0(%arg0: i32, %arg1: i32) -> (i32, i32) {
    %c0_i32 = arith.constant 0 : i32
    %c0_i32_0 = arith.constant 0 : i32
    return %arg0, %c0_i32 : i32, i32
  }
  func.func @transform_1(%arg0: i32, %arg1: i32) -> (i32, i32) {
    %c0_i32 = arith.constant 0 : i32
    %c0_i32_0 = arith.constant 0 : i32
    return %c0_i32, %arg1 : i32, i32
  }
  func.func @transform_2(%arg0: i32, %arg1: i32) -> (i32, i32) {
    %c0_i32 = arith.constant 0 : i32
    %c0_i32_0 = arith.constant 0 : i32
    return %c0_i32, %arg1 : i32, i32
  }
  func.func @transform_3(%arg0: i32, %arg1: i32) -> (i32, i32) {
    %c0_i32 = arith.constant 0 : i32
    return %arg0, %arg1 : i32, i32
  }
  func.func @transform_4(%arg0: i32, %arg1: i32) -> (i32, i32) {
    %c0_i32 = arith.constant 0 : i32
    return %arg0, %arg1 : i32, i32
  }
}

module attributes {stable_mosaic.version = 11 : i64} {
  func.func @_fused_mm_kernel(%arg0: i32, %arg1: i32, %arg2: memref<16x128xf32, #tpu.memory_space<vmem>>, %arg3: memref<128x256xbf16, #tpu.memory_space<vmem>>, %arg4: memref<1x256xf32, #tpu.memory_space<vmem>>, %arg5: memref<1x128xf32, #tpu.memory_space<vmem>>, %arg6: memref<1x128xf32, #tpu.memory_space<vmem>>, %arg7: memref<16x256xbf16, #tpu.memory_space<vmem>>) attributes {dimension_semantics = [#tpu.dimension_semantics<parallel>, #tpu.dimension_semantics<parallel>], iteration_bounds = array<i64: 1, 1>, scalar_prefetch = 0 : i64, scratch_operands = 0 : i64, tpu.core_type = #tpu.core_type<tc>, window_params = [{transform_indices = @transform_0, window_bounds = array<i64: 16, 128>}, {transform_indices = @transform_1, window_bounds = array<i64: 128, 256>}, {transform_indices = @transform_2, window_bounds = array<i64: 1, 256>}, {pipeline_mode = #tpu.pipeline_mode<synchronous>, transform_indices = @transform_3, window_bounds = array<i64: 1, 128>}, {pipeline_mode = #tpu.pipeline_mode<synchronous>, transform_indices = @transform_4, window_bounds = array<i64: 1, 128>}, {transform_indices = @transform_5, window_bounds = array<i64: 16, 256>}]} {
    %c0 = arith.constant 0 : index
    %c0_0 = arith.constant 0 : index
    %0 = vector.load %arg2[%c0, %c0_0] : memref<16x128xf32, #tpu.memory_space<vmem>>, vector<16x128xf32>
    %cst = arith.constant dense<0.000000e+00> : vector<16xf32>
    %1 = vector.multi_reduction <add>, %0, %cst [1] : vector<16x128xf32> to vector<16xf32>
    %2 = vector.shape_cast %1 : vector<16xf32> to vector<16x1xf32>
    %cst_1 = arith.constant 1.280000e+02 : f32
    %3 = vector.broadcast %cst_1 : f32 to vector<16x1xf32>
    %4 = arith.divf %2, %3 : vector<16x1xf32>
    %5 = vector.broadcast %4 : vector<16x1xf32> to vector<16x128xf32>
    %6 = arith.subf %0, %5 : vector<16x128xf32>
    %7 = arith.mulf %6, %6 : vector<16x128xf32>
    %cst_2 = arith.constant dense<0.000000e+00> : vector<16xf32>
    %8 = vector.multi_reduction <add>, %7, %cst_2 [1] : vector<16x128xf32> to vector<16xf32>
    %9 = vector.shape_cast %8 : vector<16xf32> to vector<16x1xf32>
    %cst_3 = arith.constant 1.280000e+02 : f32
    %10 = vector.broadcast %cst_3 : f32 to vector<16x1xf32>
    %11 = arith.divf %9, %10 : vector<16x1xf32>
    %cst_4 = arith.constant 9.99999974E-6 : f32
    %12 = vector.broadcast %cst_4 : f32 to vector<16x1xf32>
    %13 = arith.addf %11, %12 : vector<16x1xf32>
    %14 = math.rsqrt %13 : vector<16x1xf32>
    %15 = vector.broadcast %14 : vector<16x1xf32> to vector<16x128xf32>
    %16 = arith.mulf %6, %15 : vector<16x128xf32>
    %c0_5 = arith.constant 0 : index
    %c0_6 = arith.constant 0 : index
    %17 = vector.load %arg5[%c0_5, %c0_6] : memref<1x128xf32, #tpu.memory_space<vmem>>, vector<1x128xf32>
    %18 = vector.broadcast %17 : vector<1x128xf32> to vector<16x128xf32>
    %19 = arith.mulf %16, %18 : vector<16x128xf32>
    %c0_7 = arith.constant 0 : index
    %c0_8 = arith.constant 0 : index
    %20 = vector.load %arg6[%c0_7, %c0_8] : memref<1x128xf32, #tpu.memory_space<vmem>>, vector<1x128xf32>
    %21 = vector.broadcast %20 : vector<1x128xf32> to vector<16x128xf32>
    %22 = arith.addf %19, %21 : vector<16x128xf32>
    %23 = arith.truncf %22 : vector<16x128xf32> to vector<16x128xbf16>
    %c0_9 = arith.constant 0 : index
    %c0_10 = arith.constant 0 : index
    %24 = vector.load %arg3[%c0_9, %c0_10] : memref<128x256xbf16, #tpu.memory_space<vmem>>, vector<128x256xbf16>
    %cst_11 = arith.constant dense<0.000000e+00> : vector<16x256xf32>
    %25 = tpu.matmul %23, %24, %cst_11 {dimension_numbers = #tpu.dot_dimension_numbers<[1], [0], [0], [1], [0, 0, 1, 1], [], []>} : vector<16x128xbf16>, vector<128x256xbf16>, vector<16x256xf32> -> vector<16x256xf32>
    %c0_12 = arith.constant 0 : index
    %c0_13 = arith.constant 0 : index
    %26 = vector.load %arg4[%c0_12, %c0_13] : memref<1x256xf32, #tpu.memory_space<vmem>>, vector<1x256xf32>
    %27 = vector.broadcast %26 : vector<1x256xf32> to vector<16x256xf32>
    %28 = arith.addf %25, %27 : vector<16x256xf32>
    %cst_14 = arith.constant 5.000000e-01 : f32
    %29 = vector.broadcast %cst_14 : f32 to vector<16x256xf32>
    %30 = arith.mulf %29, %28 : vector<16x256xf32>
    %cst_15 = arith.constant 0.707106769 : f32
    %31 = vector.broadcast %cst_15 : f32 to vector<16x256xf32>
    %32 = arith.mulf %28, %31 : vector<16x256xf32>
    %cst_16 = arith.constant 0.000000e+00 : f32
    %33 = vector.broadcast %cst_16 : f32 to vector<16x256xf32>
    %34 = arith.cmpf olt, %32, %33 : vector<16x256xf32>
    %cst_17 = arith.constant -1.000000e+00 : f32
    %cst_18 = arith.constant 1.000000e+00 : f32
    %35 = vector.broadcast %cst_17 : f32 to vector<16x256xf32>
    %36 = vector.broadcast %cst_18 : f32 to vector<16x256xf32>
    %37 = arith.select %34, %35, %36 : vector<16x256xi1>, vector<16x256xf32>
    %38 = math.absf %32 : vector<16x256xf32>
    %cst_19 = arith.constant 0.327591091 : f32
    %39 = vector.broadcast %cst_19 : f32 to vector<16x256xf32>
    %40 = arith.mulf %39, %38 : vector<16x256xf32>
    %cst_20 = arith.constant 1.000000e+00 : f32
    %41 = vector.broadcast %cst_20 : f32 to vector<16x256xf32>
    %42 = arith.addf %41, %40 : vector<16x256xf32>
    %cst_21 = arith.constant 1.000000e+00 : f32
    %43 = vector.broadcast %cst_21 : f32 to vector<16x256xf32>
    %44 = arith.divf %43, %42 : vector<16x256xf32>
    %cst_22 = arith.constant 1.06140542 : f32
    %45 = vector.broadcast %cst_22 : f32 to vector<16x256xf32>
    %46 = arith.mulf %45, %44 : vector<16x256xf32>
    %cst_23 = arith.constant -1.45315206 : f32
    %47 = vector.broadcast %cst_23 : f32 to vector<16x256xf32>
    %48 = arith.addf %46, %47 : vector<16x256xf32>
    %49 = arith.mulf %48, %44 : vector<16x256xf32>
    %cst_24 = arith.constant 1.42141378 : f32
    %50 = vector.broadcast %cst_24 : f32 to vector<16x256xf32>
    %51 = arith.addf %49, %50 : vector<16x256xf32>
    %52 = arith.mulf %51, %44 : vector<16x256xf32>
    %cst_25 = arith.constant -0.284496725 : f32
    %53 = vector.broadcast %cst_25 : f32 to vector<16x256xf32>
    %54 = arith.addf %52, %53 : vector<16x256xf32>
    %55 = arith.mulf %54, %44 : vector<16x256xf32>
    %cst_26 = arith.constant 0.254829586 : f32
    %56 = vector.broadcast %cst_26 : f32 to vector<16x256xf32>
    %57 = arith.addf %55, %56 : vector<16x256xf32>
    %58 = arith.mulf %57, %44 : vector<16x256xf32>
    %cst_27 = arith.constant 0.000000e+00 : f32
    %59 = vector.broadcast %cst_27 : f32 to vector<16x256xf32>
    %60 = arith.subf %59, %38 : vector<16x256xf32>
    %61 = arith.mulf %60, %38 : vector<16x256xf32>
    %62 = math.exp %61 : vector<16x256xf32>
    %63 = arith.mulf %58, %62 : vector<16x256xf32>
    %cst_28 = arith.constant 1.000000e+00 : f32
    %64 = vector.broadcast %cst_28 : f32 to vector<16x256xf32>
    %65 = arith.subf %64, %63 : vector<16x256xf32>
    %66 = arith.mulf %37, %65 : vector<16x256xf32>
    %cst_29 = arith.constant 1.000000e+00 : f32
    %67 = vector.broadcast %cst_29 : f32 to vector<16x256xf32>
    %68 = arith.addf %67, %66 : vector<16x256xf32>
    %69 = arith.mulf %30, %68 : vector<16x256xf32>
    %70 = arith.truncf %69 : vector<16x256xf32> to vector<16x256xbf16>
    %c0_30 = arith.constant 0 : index
    %c0_31 = arith.constant 0 : index
    %71 = vector.load %arg7[%c0_30, %c0_31] : memref<16x256xbf16, #tpu.memory_space<vmem>>, vector<16x256xbf16>
    tpu.vector_store %arg7[%c0_30, %c0_31], %70 {strides = array<i32>} : memref<16x256xbf16, #tpu.memory_space<vmem>>, vector<16x256xbf16>,
    return
  }
  func.func @transform_0(%arg0: i32, %arg1: i32) -> (i32, i32) {
    %c0_i32 = arith.constant 0 : i32
    %c0_i32_0 = arith.constant 0 : i32
    return %arg0, %c0_i32 : i32, i32
  }
  func.func @transform_1(%arg0: i32, %arg1: i32) -> (i32, i32) {
    %c0_i32 = arith.constant 0 : i32
    %c0_i32_0 = arith.constant 0 : i32
    return %c0_i32, %arg1 : i32, i32
  }
  func.func @transform_2(%arg0: i32, %arg1: i32) -> (i32, i32) {
    %c0_i32 = arith.constant 0 : i32
    %c0_i32_0 = arith.constant 0 : i32
    return %c0_i32, %arg1 : i32, i32
  }
  func.func @transform_3(%arg0: i32, %arg1: i32) -> (i32, i32) {
    %c0_i32 = arith.constant 0 : i32
    %c0_i32_0 = arith.constant 0 : i32
    %c0_i32_1 = arith.constant 0 : i32
    return %c0_i32, %c0_i32_0 : i32, i32
  }
  func.func @transform_4(%arg0: i32, %arg1: i32) -> (i32, i32) {
    %c0_i32 = arith.constant 0 : i32
    %c0_i32_0 = arith.constant 0 : i32
    %c0_i32_1 = arith.constant 0 : i32
    return %c0_i32, %c0_i32_0 : i32, i32
  }
  func.func @transform_5(%arg0: i32, %arg1: i32) -> (i32, i32) {
    %c0_i32 = arith.constant 0 : i32
    return %arg0, %arg1 : i32, i32
  }
}

module attributes {stable_mosaic.version = 11 : i64} {
  func.func @_fused_mm_kernel(%arg0: i32, %arg1: i32, %arg2: memref<8x128xf32, #tpu.memory_space<vmem>>, %arg3: memref<128x128xbf16, #tpu.memory_space<vmem>>, %arg4: memref<1x128xf32, #tpu.memory_space<vmem>>, %arg5: memref<1x128xf32, #tpu.memory_space<vmem>>, %arg6: memref<1x128xf32, #tpu.memory_space<vmem>>, %arg7: memref<8x128xf32, #tpu.memory_space<vmem>>) attributes {dimension_semantics = [#tpu.dimension_semantics<parallel>, #tpu.dimension_semantics<parallel>], iteration_bounds = array<i64: 1, 1>, scalar_prefetch = 0 : i64, scratch_operands = 0 : i64, tpu.core_type = #tpu.core_type<tc>, window_params = [{transform_indices = @transform_0, window_bounds = array<i64: 8, 128>}, {transform_indices = @transform_1, window_bounds = array<i64: 128, 128>}, {transform_indices = @transform_2, window_bounds = array<i64: 1, 128>}, {pipeline_mode = #tpu.pipeline_mode<synchronous>, transform_indices = @transform_3, window_bounds = array<i64: 1, 128>}, {pipeline_mode = #tpu.pipeline_mode<synchronous>, transform_indices = @transform_4, window_bounds = array<i64: 1, 128>}, {transform_indices = @transform_5, window_bounds = array<i64: 8, 128>}]} {
    %c0 = arith.constant 0 : index
    %c0_0 = arith.constant 0 : index
    %0 = vector.load %arg2[%c0, %c0_0] : memref<8x128xf32, #tpu.memory_space<vmem>>, vector<8x128xf32>
    %cst = arith.constant dense<0.000000e+00> : vector<8xf32>
    %1 = vector.multi_reduction <add>, %0, %cst [1] : vector<8x128xf32> to vector<8xf32>
    %2 = vector.shape_cast %1 : vector<8xf32> to vector<8x1xf32>
    %cst_1 = arith.constant 1.280000e+02 : f32
    %3 = vector.broadcast %cst_1 : f32 to vector<8x1xf32>
    %4 = arith.divf %2, %3 : vector<8x1xf32>
    %5 = vector.broadcast %4 : vector<8x1xf32> to vector<8x128xf32>
    %6 = arith.subf %0, %5 : vector<8x128xf32>
    %7 = arith.mulf %6, %6 : vector<8x128xf32>
    %cst_2 = arith.constant dense<0.000000e+00> : vector<8xf32>
    %8 = vector.multi_reduction <add>, %7, %cst_2 [1] : vector<8x128xf32> to vector<8xf32>
    %9 = vector.shape_cast %8 : vector<8xf32> to vector<8x1xf32>
    %cst_3 = arith.constant 1.280000e+02 : f32
    %10 = vector.broadcast %cst_3 : f32 to vector<8x1xf32>
    %11 = arith.divf %9, %10 : vector<8x1xf32>
    %cst_4 = arith.constant 9.99999974E-6 : f32
    %12 = vector.broadcast %cst_4 : f32 to vector<8x1xf32>
    %13 = arith.addf %11, %12 : vector<8x1xf32>
    %14 = math.rsqrt %13 : vector<8x1xf32>
    %15 = vector.broadcast %14 : vector<8x1xf32> to vector<8x128xf32>
    %16 = arith.mulf %6, %15 : vector<8x128xf32>
    %c0_5 = arith.constant 0 : index
    %c0_6 = arith.constant 0 : index
    %17 = vector.load %arg5[%c0_5, %c0_6] : memref<1x128xf32, #tpu.memory_space<vmem>>, vector<1x128xf32>
    %18 = vector.broadcast %17 : vector<1x128xf32> to vector<8x128xf32>
    %19 = arith.mulf %16, %18 : vector<8x128xf32>
    %c0_7 = arith.constant 0 : index
    %c0_8 = arith.constant 0 : index
    %20 = vector.load %arg6[%c0_7, %c0_8] : memref<1x128xf32, #tpu.memory_space<vmem>>, vector<1x128xf32>
    %21 = vector.broadcast %20 : vector<1x128xf32> to vector<8x128xf32>
    %22 = arith.addf %19, %21 : vector<8x128xf32>
    %23 = arith.truncf %22 : vector<8x128xf32> to vector<8x128xbf16>
    %c0_9 = arith.constant 0 : index
    %c0_10 = arith.constant 0 : index
    %24 = vector.load %arg3[%c0_9, %c0_10] : memref<128x128xbf16, #tpu.memory_space<vmem>>, vector<128x128xbf16>
    %cst_11 = arith.constant dense<0.000000e+00> : vector<8x128xf32>
    %25 = tpu.matmul %23, %24, %cst_11 {dimension_numbers = #tpu.dot_dimension_numbers<[1], [0], [0], [1], [0, 0, 1, 1], [], []>} : vector<8x128xbf16>, vector<128x128xbf16>, vector<8x128xf32> -> vector<8x128xf32>
    %c0_12 = arith.constant 0 : index
    %c0_13 = arith.constant 0 : index
    %26 = vector.load %arg4[%c0_12, %c0_13] : memref<1x128xf32, #tpu.memory_space<vmem>>, vector<1x128xf32>
    %27 = vector.broadcast %26 : vector<1x128xf32> to vector<8x128xf32>
    %28 = arith.addf %25, %27 : vector<8x128xf32>
    %c0_14 = arith.constant 0 : index
    %c0_15 = arith.constant 0 : index
    %29 = vector.load %arg7[%c0_14, %c0_15] : memref<8x128xf32, #tpu.memory_space<vmem>>, vector<8x128xf32>
    tpu.vector_store %arg7[%c0_14, %c0_15], %28 {strides = array<i32>} : memref<8x128xf32, #tpu.memory_space<vmem>>, vector<8x128xf32>,
    return
  }
  func.func @transform_0(%arg0: i32, %arg1: i32) -> (i32, i32) {
    %c0_i32 = arith.constant 0 : i32
    %c0_i32_0 = arith.constant 0 : i32
    return %arg0, %c0_i32 : i32, i32
  }
  func.func @transform_1(%arg0: i32, %arg1: i32) -> (i32, i32) {
    %c0_i32 = arith.constant 0 : i32
    %c0_i32_0 = arith.constant 0 : i32
    return %c0_i32, %arg1 : i32, i32
  }
  func.func @transform_2(%arg0: i32, %arg1: i32) -> (i32, i32) {
    %c0_i32 = arith.constant 0 : i32
    %c0_i32_0 = arith.constant 0 : i32
    return %c0_i32, %arg1 : i32, i32
  }
  func.func @transform_3(%arg0: i32, %arg1: i32) -> (i32, i32) {
    %c0_i32 = arith.constant 0 : i32
    %c0_i32_0 = arith.constant 0 : i32
    %c0_i32_1 = arith.constant 0 : i32
    return %c0_i32, %c0_i32_0 : i32, i32
  }
  func.func @transform_4(%arg0: i32, %arg1: i32) -> (i32, i32) {
    %c0_i32 = arith.constant 0 : i32
    %c0_i32_0 = arith.constant 0 : i32
    %c0_i32_1 = arith.constant 0 : i32
    return %c0_i32, %c0_i32_0 : i32, i32
  }
  func.func @transform_5(%arg0: i32, %arg1: i32) -> (i32, i32) {
    %c0_i32 = arith.constant 0 : i32
    return %arg0, %arg1 : i32, i32
  }
}

</mosaic_0001>

<llo_original>
// kernel: _forward.12
$region0: #{_forward.12}
  #allocation0 [shape = 'u32[]', space=smem, size = 0x4, offset = 0x4, fixed_abs, tag = 'smem constant byte address 0x4 - core index']
  #allocation1 [shape = 'u32[144,128]{1,0:T(1,128)}', space=vmem, size = 0x12000, scoped, tag = 'internal scratch']
  %s0 = inlined_call_operand.vmem [shape: f32[8,256], index: 0, kind: input, shape index: {}]
  %s1 = inlined_call_operand.vmem [shape: f32[8,256], index: 1, kind: input, shape index: {}]
  %s2 = inlined_call_operand.vmem [shape: bf16[256,128], index: 2, kind: input, shape index: {}]
  %s3 = inlined_call_operand.vmem [shape: f32[1,128], index: 3, kind: input, shape index: {}]
  %s4 = inlined_call_operand.vmem [shape: f32[8,128], index: 4, kind: output, shape index: {}]
  %s5 = sld [smem:[#allocation0]]
  $region26: #{_forward.12} parent=0
    _
  %s7 = ssub.s32 1, %s5
  %s8 = scalar_select 0, %s7, %s5
  // Predicated region
  $region2: #{_forward.12} parent=0 // pred_check
    _
  $region3: #{_forward.12} parent=0 // pred_check_branch
    %10 = sbr.rel (0) target = $region5
  $region4: #{_forward.12} parent=0 // pred_region
    _
  $region5: #{_forward.12} parent=0 // pred_fallthru
    _
  // Predicated region
  $region6: #{_forward.12} parent=0 // pred_check
    _
  $region7: #{_forward.12} parent=0 // pred_check_branch
    %12 = sbr.rel (0) target = $region9
  $region8: #{_forward.12} parent=0 // pred_region
    _
  $region9: #{_forward.12} parent=0 // pred_fallthru
    _
  // Predicated region
  $region10: #{_forward.12} parent=0 // pred_check
    _
  $region11: #{_forward.12} parent=0 // pred_check_branch
    %14 = sbr.rel (0) target = $region13
  $region12: #{_forward.12} parent=0 // pred_region
    _
  $region13: #{_forward.12} parent=0 // pred_fallthru
    _
  // Predicated region
  $region14: #{_forward.12} parent=0 // pred_check
    _
  $region15: #{_forward.12} parent=0 // pred_check_branch
    %16 = sbr.rel (0) target = $region17
  $region16: #{_forward.12} parent=0 // pred_region
    _
  $region17: #{_forward.12} parent=0 // pred_fallthru
    _
  %v18 = vld [vmem:[%s0] sm:$0xff]
  %v19 = vld [vmem:[%s0 + $0x8] sm:$0xff]
  %v20 = vld [vmem:[%s1] sm:$0xff]
  %v21 = vld [vmem:[%s1 + $0x8] sm:$0xff]
  %v22 = vsub.f32 %v18, %v20
  %v23 = vsub.f32 %v19, %v21
  %v24 = vpack.c.bf16 %v22, %v22
  %v25 = vpack.c.bf16 %v23, %v23
  %v26 = vld [vmem:[%s2] sm:$0xf]
  %v27 = vld [vmem:[%s2 + $0x4] sm:$0xf]
  %v28 = vld [vmem:[%s2 + $0x8] sm:$0xf]
  %v29 = vld [vmem:[%s2 + $0xc] sm:$0xf]
  %v30 = vld [vmem:[%s2 + $0x10] sm:$0xf]
  %v31 = vld [vmem:[%s2 + $0x14] sm:$0xf]
  %v32 = vld [vmem:[%s2 + $0x18] sm:$0xf]
  %v33 = vld [vmem:[%s2 + $0x1c] sm:$0xf]
  %v34 = vld [vmem:[%s2 + $0x20] sm:$0xf]
  %v35 = vld [vmem:[%s2 + $0x24] sm:$0xf]
  %v36 = vld [vmem:[%s2 + $0x28] sm:$0xf]
  %v37 = vld [vmem:[%s2 + $0x2c] sm:$0xf]
  %v38 = vld [vmem:[%s2 + $0x30] sm:$0xf]
  %v39 = vld [vmem:[%s2 + $0x34] sm:$0xf]
  %v40 = vld [vmem:[%s2 + $0x38] sm:$0xf]
  %v41 = vld [vmem:[%s2 + $0x3c] sm:$0xf]
  %v42 = vld [vmem:[%s2 + $0x40] sm:$0xf]
  %v43 = vld [vmem:[%s2 + $0x44] sm:$0xf]
  %v44 = vld [vmem:[%s2 + $0x48] sm:$0xf]
  %v45 = vld [vmem:[%s2 + $0x4c] sm:$0xf]
  %v46 = vld [vmem:[%s2 + $0x50] sm:$0xf]
  %v47 = vld [vmem:[%s2 + $0x54] sm:$0xf]
  %v48 = vld [vmem:[%s2 + $0x58] sm:$0xf]
  %v49 = vld [vmem:[%s2 + $0x5c] sm:$0xf]
  %v50 = vld [vmem:[%s2 + $0x60] sm:$0xf]
  %v51 = vld [vmem:[%s2 + $0x64] sm:$0xf]
  %v52 = vld [vmem:[%s2 + $0x68] sm:$0xf]
  %v53 = vld [vmem:[%s2 + $0x6c] sm:$0xf]
  %v54 = vld [vmem:[%s2 + $0x70] sm:$0xf]
  %v55 = vld [vmem:[%s2 + $0x74] sm:$0xf]
  %v56 = vld [vmem:[%s2 + $0x78] sm:$0xf]
  %v57 = vld [vmem:[%s2 + $0x7c] sm:$0xf]
  %v58 = vld [vmem:[%s3] sm:$0x1]
  %v60 = vlaneseq
  %v61 = vshrl.u32 %v60, 7
  %v62 = vsub.s32 0, %v61
  %v63 = vrot.slane %v58, %v62
  %v97 = vunpack.c.l.b16 %v26
  %v98 = vunpack.c.l.b16 %v27
  %v99 = vunpack.c.l.b16 %v28
  %v100 = vunpack.c.l.b16 %v29
  %v101 = vunpack.c.l.b16 %v30
  %v102 = vunpack.c.l.b16 %v31
  %v103 = vunpack.c.l.b16 %v32
  %v104 = vunpack.c.l.b16 %v33
  %v105 = vunpack.c.l.b16 %v34
  %v106 = vunpack.c.l.b16 %v35
  %v107 = vunpack.c.l.b16 %v36
  %v108 = vunpack.c.l.b16 %v37
  %v109 = vunpack.c.l.b16 %v38
  %v110 = vunpack.c.l.b16 %v39
  %v111 = vunpack.c.l.b16 %v40
  %v112 = vunpack.c.l.b16 %v41
  %v113 = vunpack.c.l.b16 %v42
  %v114 = vunpack.c.l.b16 %v43
  %v115 = vunpack.c.l.b16 %v44
  %v116 = vunpack.c.l.b16 %v45
  %v117 = vunpack.c.l.b16 %v46
  %v118 = vunpack.c.l.b16 %v47
  %v119 = vunpack.c.l.b16 %v48
  %v120 = vunpack.c.l.b16 %v49
  %v121 = vunpack.c.l.b16 %v50
  %v122 = vunpack.c.l.b16 %v51
  %v123 = vunpack.c.l.b16 %v52
  %v124 = vunpack.c.l.b16 %v53
  %v125 = vunpack.c.l.b16 %v54
  %v126 = vunpack.c.l.b16 %v55
  %v127 = vunpack.c.l.b16 %v56
  %v128 = vunpack.c.l.b16 %v57
  %v129 = vpack.c.b16 %v98, %v97
  %v130 = vpack.c.b16 %v100, %v99
  %v131 = vpack.c.b16 %v102, %v101
  %v132 = vpack.c.b16 %v104, %v103
  %v133 = vpack.c.b16 %v106, %v105
  %v134 = vpack.c.b16 %v108, %v107
  %v135 = vpack.c.b16 %v110, %v109
  %v136 = vpack.c.b16 %v112, %v111
  %v137 = vpack.c.b16 %v114, %v113
  %v138 = vpack.c.b16 %v116, %v115
  %v139 = vpack.c.b16 %v118, %v117
  %v140 = vpack.c.b16 %v120, %v119
  %v141 = vpack.c.b16 %v122, %v121
  %v142 = vpack.c.b16 %v124, %v123
  %v143 = vpack.c.b16 %v126, %v125
  %v144 = vpack.c.b16 %v128, %v127
  %161 = vmatprep.subr.bf16.mxu0 0
  %162 = vmatpush1.bf16.msra.mxu0 %v136
  %163 = vmatprep.subr.bf16.mxu0 0
  %164 = vmatpush1.bf16.msra.mxu0 %v135
  %165 = vmatprep.subr.bf16.mxu0 0
  %166 = vmatpush1.bf16.msra.mxu0 %v134
  %167 = vmatprep.subr.bf16.mxu0 0
  %168 = vmatpush1.bf16.msra.mxu0 %v133
  %169 = vmatprep.subr.bf16.mxu0 0
  %170 = vmatpush1.bf16.msra.mxu0 %v132
  %171 = vmatprep.subr.bf16.mxu0 0
  %172 = vmatpush1.bf16.msra.mxu0 %v131
  %173 = vmatprep.subr.bf16.mxu0 0
  %174 = vmatpush1.bf16.msra.mxu0 %v130
  %175 = vmatprep.subr.bf16.mxu0 0
  %176 = vmatpush1.bf16.msra.mxu0 %v129
  %177 = vmatprep.subr.bf16.mxu0 0
  %178 = vmatpush2.bf16.msra.mxu0 %v144
  %179 = vmatprep.subr.bf16.mxu0 0
  %180 = vmatpush2.bf16.msra.mxu0 %v143
  %181 = vmatprep.subr.bf16.mxu0 0
  %182 = vmatpush2.bf16.msra.mxu0 %v142
  %183 = vmatprep.subr.bf16.mxu0 0
  %184 = vmatpush2.bf16.msra.mxu0 %v141
  %185 = vmatprep.subr.bf16.mxu0 0
  %186 = vmatpush2.bf16.msra.mxu0 %v140
  %187 = vmatprep.subr.bf16.mxu0 0
  %188 = vmatpush2.bf16.msra.mxu0 %v139
  %189 = vmatprep.subr.bf16.mxu0 0
  %190 = vmatpush2.bf16.msra.mxu0 %v138
  %191 = vmatprep.subr.bf16.mxu0 0
  %192 = vmatpush2.bf16.msra.mxu0 %v137
  %193 = vmatprep.mubr.bf16.mxu0 %v25
  %194 = vmatmul.mubr.bf16.gmra.mxu0 %v24
  %v195 = vpop.f32.mrf.mxu0
  %v196 = vadd.f32 %v63, %v195
  %v197 = vpop.f32.mrf.mxu0
  %v198 = vpop.f32.mrf.mxu0
  %v199 = vpop.f32.mrf.mxu0
  %200 = vdwg.mxu0
  %201 = vst [vmem:[%s4] sm:$0xff] %v196
  // Predicated region
  $region18: #{_forward.12} parent=0 // pred_check
    _
  $region19: #{_forward.12} parent=0 // pred_check_branch
    %203 = sbr.rel (0) target = $region21
  $region20: #{_forward.12} parent=0 // pred_region
    _
  $region21: #{_forward.12} parent=0 // pred_fallthru
    _
  // Predicated region
  $region22: #{_forward.12} parent=0 // pred_check
    _
  $region23: #{_forward.12} parent=0 // pred_check_branch
    %205 = sbr.rel (0) target = $region25
  $region24: #{_forward.12} parent=0 // pred_region
    _
  $region25: #{_forward.12} parent=0 // pred_fallthru
    _

// kernel: _forward.13
$region0: #{_forward.13}
  #allocation0 [shape = 'u32[]', space=smem, size = 0x4, offset = 0x4, fixed_abs, tag = 'smem constant byte address 0x4 - core index']
  #allocation1 [shape = 'u32[144,128]{1,0:T(1,128)}', space=vmem, size = 0x12000, scoped, tag = 'internal scratch']
  %s0 = inlined_call_operand.vmem [shape: f32[16,128], index: 0, kind: input, shape index: {}]
  %s1 = inlined_call_operand.vmem [shape: bf16[128,384], index: 1, kind: input, shape index: {}]
  %s2 = inlined_call_operand.vmem [shape: f32[1,128], index: 2, kind: input, shape index: {}]
  %s3 = inlined_call_operand.vmem [shape: f32[1,128], index: 3, kind: input, shape index: {}]
  %s4 = inlined_call_operand.vmem [shape: bf16[16,384], index: 4, kind: output, shape index: {}]
  %s5 = sld [smem:[#allocation0]]
  $region26: #{_forward.13} parent=0
    _
  %s7 = ssub.s32 1, %s5
  %s8 = scalar_select 0, %s7, %s5
  // Predicated region
  $region2: #{_forward.13} parent=0 // pred_check
    _
  $region3: #{_forward.13} parent=0 // pred_check_branch
    %10 = sbr.rel (0) target = $region5
  $region4: #{_forward.13} parent=0 // pred_region
    _
  $region5: #{_forward.13} parent=0 // pred_fallthru
    _
  // Predicated region
  $region6: #{_forward.13} parent=0 // pred_check
    _
  $region7: #{_forward.13} parent=0 // pred_check_branch
    %12 = sbr.rel (0) target = $region9
  $region8: #{_forward.13} parent=0 // pred_region
    _
  $region9: #{_forward.13} parent=0 // pred_fallthru
    _
  // Predicated region
  $region10: #{_forward.13} parent=0 // pred_check
    _
  $region11: #{_forward.13} parent=0 // pred_check_branch
    %14 = sbr.rel (0) target = $region13
  $region12: #{_forward.13} parent=0 // pred_region
    _
  $region13: #{_forward.13} parent=0 // pred_fallthru
    _
  // Predicated region
  $region14: #{_forward.13} parent=0 // pred_check
    _
  $region15: #{_forward.13} parent=0 // pred_check_branch
    %16 = sbr.rel (0) target = $region17
  $region16: #{_forward.13} parent=0 // pred_region
    _
  $region17: #{_forward.13} parent=0 // pred_fallthru
    _
  %v18 = vld [vmem:[%s0] sm:$0xff]
  %v19 = vld [vmem:[%s0 + $0x8] sm:$0xff]
  %20 = vadd.xlane.f32.xlu0 %v18
  %v21 = vpop.xlane.xlu0 %20
  %22 = vadd.xlane.f32.xlu0 %v19
  %v23 = vpop.xlane.xlu0 %22
  %v24 = vrcp.pop 128.0
  %v25 = vmul.f32 %v21, %v24
  %v26 = vmul.f32 %v23, %v24
  %v27 = vsub.f32 %v18, %v25
  %v28 = vsub.f32 %v19, %v26
  %v29 = vmul.f32 %v27, %v27
  %v30 = vmul.f32 %v28, %v28
  %31 = vadd.xlane.f32.xlu0 %v29
  %v32 = vpop.xlane.xlu0 %31
  %33 = vadd.xlane.f32.xlu0 %v30
  %v34 = vpop.xlane.xlu0 %33
  %v35 = vmul.f32 %v32, %v24
  %v36 = vmul.f32 %v34, %v24
  %v37 = vadd.f32 %v35, 1e-05
  %v38 = vadd.f32 %v36, 1e-05
  %v39 = vrsqrt.pop %v37
  %v40 = vrsqrt.pop %v38
  %v41 = vmul.f32 %v27, %v39
  %v42 = vmul.f32 %v28, %v40
  %v43 = vld [vmem:[%s2] sm:$0x1]
  %v45 = vlaneseq
  %v46 = vshrl.u32 %v45, 7
  %v47 = vsub.s32 0, %v46
  %v48 = vrot.slane %v43, %v47
  %v50 = vmul.f32 %v41, %v48
  %v51 = vmul.f32 %v42, %v48
  %v52 = vld [vmem:[%s3] sm:$0x1]
  %v54 = vlaneseq
  %v55 = vshrl.u32 %v54, 7
  %v56 = vsub.s32 0, %v55
  %v57 = vrot.slane %v52, %v56
  %v59 = vadd.f32 %v50, %v57
  %v60 = vadd.f32 %v51, %v57
  %v61 = vpack.c.bf16 %v60, %v59
  %v62 = vld [vmem:[%s1] sm:$0xff]
  %v63 = vld [vmem:[%s1 + $0x8] sm:$0xf]
  %v64 = vld [vmem:[%s1 + $0xc] sm:$0xff]
  %v65 = vld [vmem:[%s1 + $0x14] sm:$0xf]
  %v66 = vld [vmem:[%s1 + $0x18] sm:$0xff]
  %v67 = vld [vmem:[%s1 + $0x20] sm:$0xf]
  %v68 = vld [vmem:[%s1 + $0x24] sm:$0xff]
  %v69 = vld [vmem:[%s1 + $0x2c] sm:$0xf]
  %v70 = vld [vmem:[%s1 + $0x30] sm:$0xff]
  %v71 = vld [vmem:[%s1 + $0x38] sm:$0xf]
  %v72 = vld [vmem:[%s1 + $0x3c] sm:$0xff]
  %v73 = vld [vmem:[%s1 + $0x44] sm:$0xf]
  %v74 = vld [vmem:[%s1 + $0x48] sm:$0xff]
  %v75 = vld [vmem:[%s1 + $0x50] sm:$0xf]
  %v76 = vld [vmem:[%s1 + $0x54] sm:$0xff]
  %v77 = vld [vmem:[%s1 + $0x5c] sm:$0xf]
  %v78 = vld [vmem:[%s1 + $0x60] sm:$0xff]
  %v79 = vld [vmem:[%s1 + $0x68] sm:$0xf]
  %v80 = vld [vmem:[%s1 + $0x6c] sm:$0xff]
  %v81 = vld [vmem:[%s1 + $0x74] sm:$0xf]
  %v82 = vld [vmem:[%s1 + $0x78] sm:$0xff]
  %v83 = vld [vmem:[%s1 + $0x80] sm:$0xf]
  %v84 = vld [vmem:[%s1 + $0x84] sm:$0xff]
  %v85 = vld [vmem:[%s1 + $0x8c] sm:$0xf]
  %v86 = vld [vmem:[%s1 + $0x90] sm:$0xff]
  %v87 = vld [vmem:[%s1 + $0x98] sm:$0xf]
  %v88 = vld [vmem:[%s1 + $0x9c] sm:$0xff]
  %v89 = vld [vmem:[%s1 + $0xa4] sm:$0xf]
  %v90 = vld [vmem:[%s1 + $0xa8] sm:$0xff]
  %v91 = vld [vmem:[%s1 + $0xb0] sm:$0xf]
  %v92 = vld [vmem:[%s1 + $0xb4] sm:$0xff]
  %v93 = vld [vmem:[%s1 + $0xbc] sm:$0xf]
  %v126 = vunpack.c.l.b16 %v62
  %v127 = vunpack.c.h.b16 %v62
  %v128 = vunpack.c.l.b16 %v63
  %v129 = vunpack.c.l.b16 %v64
  %v130 = vunpack.c.h.b16 %v64
  %v131 = vunpack.c.l.b16 %v65
  %v132 = vunpack.c.l.b16 %v66
  %v133 = vunpack.c.h.b16 %v66
  %v134 = vunpack.c.l.b16 %v67
  %v135 = vunpack.c.l.b16 %v68
  %v136 = vunpack.c.h.b16 %v68
  %v137 = vunpack.c.l.b16 %v69
  %v138 = vunpack.c.l.b16 %v70
  %v139 = vunpack.c.h.b16 %v70
  %v140 = vunpack.c.l.b16 %v71
  %v141 = vunpack.c.l.b16 %v72
  %v142 = vunpack.c.h.b16 %v72
  %v143 = vunpack.c.l.b16 %v73
  %v144 = vunpack.c.l.b16 %v74
  %v145 = vunpack.c.h.b16 %v74
  %v146 = vunpack.c.l.b16 %v75
  %v147 = vunpack.c.l.b16 %v76
  %v148 = vunpack.c.h.b16 %v76
  %v149 = vunpack.c.l.b16 %v77
  %v150 = vunpack.c.l.b16 %v78
  %v151 = vunpack.c.h.b16 %v78
  %v152 = vunpack.c.l.b16 %v79
  %v153 = vunpack.c.l.b16 %v80
  %v154 = vunpack.c.h.b16 %v80
  %v155 = vunpack.c.l.b16 %v81
  %v156 = vunpack.c.l.b16 %v82
  %v157 = vunpack.c.h.b16 %v82
  %v158 = vunpack.c.l.b16 %v83
  %v159 = vunpack.c.l.b16 %v84
  %v160 = vunpack.c.h.b16 %v84
  %v161 = vunpack.c.l.b16 %v85
  %v162 = vunpack.c.l.b16 %v86
  %v163 = vunpack.c.h.b16 %v86
  %v164 = vunpack.c.l.b16 %v87
  %v165 = vunpack.c.l.b16 %v88
  %v166 = vunpack.c.h.b16 %v88
  %v167 = vunpack.c.l.b16 %v89
  %v168 = vunpack.c.l.b16 %v90
  %v169 = vunpack.c.h.b16 %v90
  %v170 = vunpack.c.l.b16 %v91
  %v171 = vunpack.c.l.b16 %v92
  %v172 = vunpack.c.h.b16 %v92
  %v173 = vunpack.c.l.b16 %v93
  %v174 = vpack.c.b16 %v129, %v126
  %v175 = vpack.c.b16 %v130, %v127
  %v176 = vpack.c.b16 %v131, %v128
  %v177 = vpack.c.b16 %v135, %v132
  %v178 = vpack.c.b16 %v136, %v133
  %v179 = vpack.c.b16 %v137, %v134
  %v180 = vpack.c.b16 %v141, %v138
  %v181 = vpack.c.b16 %v142, %v139
  %v182 = vpack.c.b16 %v143, %v140
  %v183 = vpack.c.b16 %v147, %v144
  %v184 = vpack.c.b16 %v148, %v145
  %v185 = vpack.c.b16 %v149, %v146
  %v186 = vpack.c.b16 %v153, %v150
  %v187 = vpack.c.b16 %v154, %v151
  %v188 = vpack.c.b16 %v155, %v152
  %v189 = vpack.c.b16 %v159, %v156
  %v190 = vpack.c.b16 %v160, %v157
  %v191 = vpack.c.b16 %v161, %v158
  %v192 = vpack.c.b16 %v165, %v162
  %v193 = vpack.c.b16 %v166, %v163
  %v194 = vpack.c.b16 %v167, %v164
  %v195 = vpack.c.b16 %v171, %v168
  %v196 = vpack.c.b16 %v172, %v169
  %v197 = vpack.c.b16 %v173, %v170
  %222 = vmatprep.subr.bf16.mxu0 %v196
  %223 = vmatpush1.bf16.msra.mxu0 %v195
  %224 = vmatprep.subr.bf16.mxu0 %v193
  %225 = vmatpush1.bf16.msra.mxu0 %v192
  %226 = vmatprep.subr.bf16.mxu0 %v190
  %227 = vmatpush1.bf16.msra.mxu0 %v189
  %228 = vmatprep.subr.bf16.mxu0 %v187
  %229 = vmatpush1.bf16.msra.mxu0 %v186
  %230 = vmatprep.subr.bf16.mxu0 %v184
  %231 = vmatpush1.bf16.msra.mxu0 %v183
  %232 = vmatprep.subr.bf16.mxu0 %v181
  %233 = vmatpush1.bf16.msra.mxu0 %v180
  %234 = vmatprep.subr.bf16.mxu0 %v178
  %235 = vmatpush1.bf16.msra.mxu0 %v177
  %236 = vmatprep.subr.bf16.mxu0 %v175
  %237 = vmatpush1.bf16.msra.mxu0 %v174
  %238 = vmatprep.subr.bf16.mxu0 0
  %239 = vmatpush2.bf16.msra.mxu0 0
  %240 = vmatprep.subr.bf16.mxu0 0
  %241 = vmatpush2.bf16.msra.mxu0 0
  %242 = vmatprep.subr.bf16.mxu0 0
  %243 = vmatpush2.bf16.msra.mxu0 0
  %244 = vmatprep.subr.bf16.mxu0 0
  %245 = vmatpush2.bf16.msra.mxu0 0
  %246 = vmatprep.subr.bf16.mxu0 0
  %247 = vmatpush2.bf16.msra.mxu0 0
  %248 = vmatprep.subr.bf16.mxu0 0
  %249 = vmatpush2.bf16.msra.mxu0 0
  %250 = vmatprep.subr.bf16.mxu0 0
  %251 = vmatpush2.bf16.msra.mxu0 0
  %252 = vmatprep.subr.bf16.mxu0 0
  %253 = vmatpush2.bf16.msra.mxu0 0
  %254 = vmatprep.mubr.bf16.mxu0 0
  %255 = vmatmul.mubr.bf16.gmra.mxu0 %v61
  %v256 = vpop.f32.mrf.mxu0
  %v257 = vadd.f32 0.0, %v256
  %v258 = vpop.f32.mrf.mxu0
  %v259 = vadd.f32 0.0, %v258
  %v260 = vpop.f32.mrf.mxu0
  %v261 = vadd.f32 0.0, %v260
  %v262 = vpop.f32.mrf.mxu0
  %v263 = vadd.f32 0.0, %v262
  %264 = vdwg.mxu0
  %265 = vmatprep.subr.bf16.mxu0 0
  %266 = vmatpush1.bf16.msra.mxu0 %v197
  %267 = vmatprep.subr.bf16.mxu0 0
  %268 = vmatpush1.bf16.msra.mxu0 %v194
  %269 = vmatprep.subr.bf16.mxu0 0
  %270 = vmatpush1.bf16.msra.mxu0 %v191
  %271 = vmatprep.subr.bf16.mxu0 0
  %272 = vmatpush1.bf16.msra.mxu0 %v188
  %273 = vmatprep.subr.bf16.mxu0 0
  %274 = vmatpush1.bf16.msra.mxu0 %v185
  %275 = vmatprep.subr.bf16.mxu0 0
  %276 = vmatpush1.bf16.msra.mxu0 %v182
  %277 = vmatprep.subr.bf16.mxu0 0
  %278 = vmatpush1.bf16.msra.mxu0 %v179
  %279 = vmatprep.subr.bf16.mxu0 0
  %280 = vmatpush1.bf16.msra.mxu0 %v176
  %281 = vmatprep.subr.bf16.mxu0 0
  %282 = vmatpush2.bf16.msra.mxu0 0
  %283 = vmatprep.subr.bf16.mxu0 0
  %284 = vmatpush2.bf16.msra.mxu0 0
  %285 = vmatprep.subr.bf16.mxu0 0
  %286 = vmatpush2.bf16.msra.mxu0 0
  %287 = vmatprep.subr.bf16.mxu0 0
  %288 = vmatpush2.bf16.msra.mxu0 0
  %289 = vmatprep.subr.bf16.mxu0 0
  %290 = vmatpush2.bf16.msra.mxu0 0
  %291 = vmatprep.subr.bf16.mxu0 0
  %292 = vmatpush2.bf16.msra.mxu0 0
  %293 = vmatprep.subr.bf16.mxu0 0
  %294 = vmatpush2.bf16.msra.mxu0 0
  %295 = vmatprep.subr.bf16.mxu0 0
  %296 = vmatpush2.bf16.msra.mxu0 0
  %297 = vmatprep.mubr.bf16.mxu0 0
  %298 = vmatmul.mubr.bf16.gmra.mxu0 %v61
  %v299 = vpop.f32.mrf.mxu0
  %v300 = vadd.f32 0.0, %v299
  %v301 = vpop.f32.mrf.mxu0
  %v302 = vpop.f32.mrf.mxu0
  %v303 = vadd.f32 0.0, %v302
  %v304 = vpop.f32.mrf.mxu0
  %305 = vdwg.mxu0
  %v306 = vpack.c.bf16 %v261, %v257
  %v307 = vpack.c.bf16 %v263, %v259
  %v308 = vpack.c.bf16 %v303, %v300
  %v312 = vunpack.c.l.b16 %v306
  %v313 = vunpack.c.l.b16 %v307
  %v314 = vunpack.c.l.b16 %v308
  %v315 = vunpack.c.h.b16 %v306
  %v316 = vunpack.c.h.b16 %v307
  %v317 = vunpack.c.h.b16 %v308
  %v318 = vpack.c.b16 %v313, %v312
  %v319 = vpack.c.b16 %v314, %v314
  %v320 = vpack.c.b16 %v316, %v315
  %v321 = vpack.c.b16 %v317, %v317
  %326 = vst [vmem:[%s4] sm:$0xff] %v318
  %327 = vst [vmem:[%s4 + $0x8] sm:$0xf] %v319
  %328 = vst [vmem:[%s4 + $0xc] sm:$0xff] %v320
  %329 = vst [vmem:[%s4 + $0x14] sm:$0xf] %v321
  // Predicated region
  $region18: #{_forward.13} parent=0 // pred_check
    _
  $region19: #{_forward.13} parent=0 // pred_check_branch
    %331 = sbr.rel (0) target = $region21
  $region20: #{_forward.13} parent=0 // pred_region
    _
  $region21: #{_forward.13} parent=0 // pred_fallthru
    _
  // Predicated region
  $region22: #{_forward.13} parent=0 // pred_check
    _
  $region23: #{_forward.13} parent=0 // pred_check_branch
    %333 = sbr.rel (0) target = $region25
  $region24: #{_forward.13} parent=0 // pred_region
    _
  $region25: #{_forward.13} parent=0 // pred_fallthru
    _

// kernel: _forward.15
$region0: #{_forward.15}
  #allocation0 [shape = 'u32[]', space=smem, size = 0x4, offset = 0x4, fixed_abs, tag = 'smem constant byte address 0x4 - core index']
  #allocation1 [shape = 'u32[144,128]{1,0:T(1,128)}', space=vmem, size = 0x12000, scoped, tag = 'internal scratch']
  %s0 = inlined_call_operand.vmem [shape: bf16[16,128], index: 0, kind: input, shape index: {}]
  %s1 = inlined_call_operand.vmem [shape: bf16[128,128], index: 1, kind: input, shape index: {}]
  %s2 = inlined_call_operand.vmem [shape: f32[1,128], index: 2, kind: input, shape index: {}]
  %s3 = inlined_call_operand.vmem [shape: f32[16,128], index: 3, kind: input, shape index: {}]
  %s4 = inlined_call_operand.vmem [shape: f32[16,128], index: 4, kind: output, shape index: {}]
  %s5 = sld [smem:[#allocation0]]
  $region26: #{_forward.15} parent=0
    _
  %s7 = ssub.s32 1, %s5
  %s8 = scalar_select 0, %s7, %s5
  // Predicated region
  $region2: #{_forward.15} parent=0 // pred_check
    _
  $region3: #{_forward.15} parent=0 // pred_check_branch
    %10 = sbr.rel (0) target = $region5
  $region4: #{_forward.15} parent=0 // pred_region
    _
  $region5: #{_forward.15} parent=0 // pred_fallthru
    _
  // Predicated region
  $region6: #{_forward.15} parent=0 // pred_check
    _
  $region7: #{_forward.15} parent=0 // pred_check_branch
    %12 = sbr.rel (0) target = $region9
  $region8: #{_forward.15} parent=0 // pred_region
    _
  $region9: #{_forward.15} parent=0 // pred_fallthru
    _
  // Predicated region
  $region10: #{_forward.15} parent=0 // pred_check
    _
  $region11: #{_forward.15} parent=0 // pred_check_branch
    %14 = sbr.rel (0) target = $region13
  $region12: #{_forward.15} parent=0 // pred_region
    _
  $region13: #{_forward.15} parent=0 // pred_fallthru
    _
  // Predicated region
  $region14: #{_forward.15} parent=0 // pred_check
    _
  $region15: #{_forward.15} parent=0 // pred_check_branch
    %16 = sbr.rel (0) target = $region17
  $region16: #{_forward.15} parent=0 // pred_region
    _
  $region17: #{_forward.15} parent=0 // pred_fallthru
    _
  %v18 = vld [vmem:[%s0] sm:$0xf]
  %v19 = vld [vmem:[%s0 + $0x4] sm:$0xf]
  %v20 = vld [vmem:[%s1] sm:$0xf]
  %v21 = vld [vmem:[%s1 + $0x4] sm:$0xf]
  %v22 = vld [vmem:[%s1 + $0x8] sm:$0xf]
  %v23 = vld [vmem:[%s1 + $0xc] sm:$0xf]
  %v24 = vld [vmem:[%s1 + $0x10] sm:$0xf]
  %v25 = vld [vmem:[%s1 + $0x14] sm:$0xf]
  %v26 = vld [vmem:[%s1 + $0x18] sm:$0xf]
  %v27 = vld [vmem:[%s1 + $0x1c] sm:$0xf]
  %v28 = vld [vmem:[%s1 + $0x20] sm:$0xf]
  %v29 = vld [vmem:[%s1 + $0x24] sm:$0xf]
  %v30 = vld [vmem:[%s1 + $0x28] sm:$0xf]
  %v31 = vld [vmem:[%s1 + $0x2c] sm:$0xf]
  %v32 = vld [vmem:[%s1 + $0x30] sm:$0xf]
  %v33 = vld [vmem:[%s1 + $0x34] sm:$0xf]
  %v34 = vld [vmem:[%s1 + $0x38] sm:$0xf]
  %v35 = vld [vmem:[%s1 + $0x3c] sm:$0xf]
  %v36 = vld [vmem:[%s2] sm:$0x1]
  %v38 = vlaneseq
  %v39 = vshrl.u32 %v38, 7
  %v40 = vsub.s32 0, %v39
  %v41 = vrot.slane %v36, %v40
  %v45 = vunpack.c.l.b16 %v18
  %v46 = vunpack.c.l.b16 %v19
  %v47 = vpack.c.b16 %v46, %v45
  %v65 = vunpack.c.l.b16 %v20
  %v66 = vunpack.c.l.b16 %v21
  %v67 = vunpack.c.l.b16 %v22
  %v68 = vunpack.c.l.b16 %v23
  %v69 = vunpack.c.l.b16 %v24
  %v70 = vunpack.c.l.b16 %v25
  %v71 = vunpack.c.l.b16 %v26
  %v72 = vunpack.c.l.b16 %v27
  %v73 = vunpack.c.l.b16 %v28
  %v74 = vunpack.c.l.b16 %v29
  %v75 = vunpack.c.l.b16 %v30
  %v76 = vunpack.c.l.b16 %v31
  %v77 = vunpack.c.l.b16 %v32
  %v78 = vunpack.c.l.b16 %v33
  %v79 = vunpack.c.l.b16 %v34
  %v80 = vunpack.c.l.b16 %v35
  %v81 = vpack.c.b16 %v66, %v65
  %v82 = vpack.c.b16 %v68, %v67
  %v83 = vpack.c.b16 %v70, %v69
  %v84 = vpack.c.b16 %v72, %v71
  %v85 = vpack.c.b16 %v74, %v73
  %v86 = vpack.c.b16 %v76, %v75
  %v87 = vpack.c.b16 %v78, %v77
  %v88 = vpack.c.b16 %v80, %v79
  %97 = vmatprep.subr.bf16.mxu0 0
  %98 = vmatpush1.bf16.msra.mxu0 %v88
  %99 = vmatprep.subr.bf16.mxu0 0
  %100 = vmatpush1.bf16.msra.mxu0 %v87
  %101 = vmatprep.subr.bf16.mxu0 0
  %102 = vmatpush1.bf16.msra.mxu0 %v86
  %103 = vmatprep.subr.bf16.mxu0 0
  %104 = vmatpush1.bf16.msra.mxu0 %v85
  %105 = vmatprep.subr.bf16.mxu0 0
  %106 = vmatpush1.bf16.msra.mxu0 %v84
  %107 = vmatprep.subr.bf16.mxu0 0
  %108 = vmatpush1.bf16.msra.mxu0 %v83
  %109 = vmatprep.subr.bf16.mxu0 0
  %110 = vmatpush1.bf16.msra.mxu0 %v82
  %111 = vmatprep.subr.bf16.mxu0 0
  %112 = vmatpush1.bf16.msra.mxu0 %v81
  %113 = vmatprep.subr.bf16.mxu0 0
  %114 = vmatpush2.bf16.msra.mxu0 0
  %115 = vmatprep.subr.bf16.mxu0 0
  %116 = vmatpush2.bf16.msra.mxu0 0
  %117 = vmatprep.subr.bf16.mxu0 0
  %118 = vmatpush2.bf16.msra.mxu0 0
  %119 = vmatprep.subr.bf16.mxu0 0
  %120 = vmatpush2.bf16.msra.mxu0 0
  %121 = vmatprep.subr.bf16.mxu0 0
  %122 = vmatpush2.bf16.msra.mxu0 0
  %123 = vmatprep.subr.bf16.mxu0 0
  %124 = vmatpush2.bf16.msra.mxu0 0
  %125 = vmatprep.subr.bf16.mxu0 0
  %126 = vmatpush2.bf16.msra.mxu0 0
  %127 = vmatprep.subr.bf16.mxu0 0
  %128 = vmatpush2.bf16.msra.mxu0 0
  %129 = vmatprep.mubr.bf16.mxu0 0
  %130 = vmatmul.mubr.bf16.gmra.mxu0 %v47
  %v131 = vpop.f32.mrf.mxu0
  %v132 = vadd.f32 %v41, %v131
  %v133 = vpop.f32.mrf.mxu0
  %v134 = vpop.f32.mrf.mxu0
  %v135 = vadd.f32 %v41, %v134
  %v136 = vpop.f32.mrf.mxu0
  %137 = vdwg.mxu0
  %v138 = vld [vmem:[%s3] sm:$0xff]
  %v139 = vld [vmem:[%s3 + $0x8] sm:$0xff]
  %v140 = vadd.f32 %v132, %v138
  %v141 = vadd.f32 %v135, %v139
  %142 = vst [vmem:[%s4] sm:$0xff] %v140
  %143 = vst [vmem:[%s4 + $0x8] sm:$0xff] %v141
  // Predicated region
  $region18: #{_forward.15} parent=0 // pred_check
    _
  $region19: #{_forward.15} parent=0 // pred_check_branch
    %145 = sbr.rel (0) target = $region21
  $region20: #{_forward.15} parent=0 // pred_region
    _
  $region21: #{_forward.15} parent=0 // pred_fallthru
    _
  // Predicated region
  $region22: #{_forward.15} parent=0 // pred_check
    _
  $region23: #{_forward.15} parent=0 // pred_check_branch
    %147 = sbr.rel (0) target = $region25
  $region24: #{_forward.15} parent=0 // pred_region
    _
  $region25: #{_forward.15} parent=0 // pred_fallthru
    _

// kernel: _forward.14
$region0: #{_forward.14}
  #allocation0 [shape = 'u32[]', space=smem, size = 0x4, offset = 0x4, fixed_abs, tag = 'smem constant byte address 0x4 - core index']
  #allocation1 [shape = 'u32[144,128]{1,0:T(1,128)}', space=vmem, size = 0x12000, scoped, tag = 'internal scratch']
  %s0 = inlined_call_operand.vmem [shape: bf16[2,5,384], index: 0, kind: input, shape index: {}]
  %s1 = inlined_call_operand.vmem [shape: f32[4,4], index: 1, kind: input, shape index: {}]
  %s2 = inlined_call_operand.vmem [shape: f32[4], index: 2, kind: input, shape index: {}]
  %s3 = inlined_call_operand.vmem [shape: f32[4], index: 3, kind: input, shape index: {}]
  %s4 = inlined_call_operand.vmem [shape: bf16[2,5,128], index: 4, kind: output, shape index: {}]
  %s5 = sld [smem:[#allocation0]]
  $region61: #{_forward.14} parent=0
    _
  %s7 = ssub.s32 1, %s5
  %s8 = scalar_select 0, %s7, %s5
  $region1: #{_forward.14} parent=0
    #allocation2 [shape = 'u8[2048]{0}', space=smem, size = 0x800, scoped, tag = 'input window, operand 1, single buffered']
    #allocation3 [shape = 's32[2]{0}', space=sflag, size = 0x8, scoped, tag = 'scoped memory for _forward.14']
    #allocation4 [shape = 'u8[512]{0}', space=smem, size = 0x200, scoped, tag = 'input window, operand 2, single buffered']
    #allocation5 [shape = 's32[1]{0}', space=sflag, size = 0x4, scoped, tag = 'scoped memory for _forward.14']
    #allocation6 [shape = 'u8[512]{0}', space=smem, size = 0x200, scoped, tag = 'input window, operand 3, single buffered']
    %9 = vsyncpa [#allocation3], 0
    %10 = vsyncpa [#allocation5], 0
    loop: start=0, step=1, limit=4
    $region2: #{_forward.14} parent=1 // loop_pre_header
      _
    $region3: #{_forward.14} parent=1 // loop_header
      %s12 = sphi 0, %s16
      %p13 = scmp.ge.s32.totalorder %s12, 4
      %s22 = sphi 0, %s24
      %s25 = sphi 0, %s22
      %s26 = sphi 0, %s25
      %s42 = sphi 0, %s26
      %s46 = sphi 0, %s46
      %s48 = sphi 0, %s46
      %s49 = sphi 0, %s48
      %s63 = sphi 0, %s49
      %s67 = sphi 0, %s67
      %s69 = sphi 0, %s67
      %s70 = sphi 0, %s69
      %s84 = sphi 0, %s70
      %s88 = sphi 0, %s88
      %s90 = sphi 0, %s88
      %s91 = sphi 0, %s90
      %s105 = sphi 0, %s91
      %s111 = sphi 0, %s113
      %s114 = sphi 0, %s111
      %s115 = sphi 0, %s114
      %s131 = sphi 0, %s115
    $region4: #{_forward.14} parent=1 // loop_header_branch
      %15 = sbr.rel (%p13) target = $region8
    $region5: #{_forward.14} parent=1 // loop_body
      %s17 = ssub.s32 %s12, 1
      %s18 = ssub.s32 %s12, 2
      %s19 = sadd.s32 %s12, 1
      %s20 = ssub.s32 %s12, %s19
      %p21 = scmp.eq.s32.totalorder %s20, 0
      %s23 = sadd.s32 %s22, 1
      %s24 = scalar_select %p21, %s22, %s23
      %p27 = pneg %p21
      %p28 = scmp.eq.s32.totalorder %s12, 1
      %p29 = por %p27, %p28
      %p30 = scmp.ne.s32.totalorder %s22, %s25
      %p31 = scmp.eq.s32.totalorder %s12, 0
      %p32 = por %p30, %p31
      %p33 = scmp.ne.s32.totalorder %s22, %s25
      %p34 = scmp.eq.s32.totalorder %s17, 1
      %p35 = por %p33, %p34
      %p36 = scmp.ne.s32.totalorder %s25, %s26
      %p37 = scmp.eq.s32.totalorder %s17, 0
      %p38 = por %p36, %p37
      %p39 = scmp.ne.s32.totalorder %s25, %s26
      %p40 = scmp.eq.s32.totalorder %s18, 1
      %p41 = por %p39, %p40
      %p43 = scmp.ne.s32.totalorder %s26, %s42
      %p44 = scmp.eq.s32.totalorder %s18, 0
      %p45 = por %p43, %p44
      %s47 = sadd.s32 %s46, 1
      %p50 = scmp.eq.s32.totalorder %s12, 1
      %p51 = scmp.ne.s32.totalorder %s46, %s48
      %p52 = scmp.eq.s32.totalorder %s12, 0
      %p53 = por %p51, %p52
      %p54 = scmp.ne.s32.totalorder %s46, %s48
      %p55 = scmp.eq.s32.totalorder %s17, 1
      %p56 = por %p54, %p55
      %p57 = scmp.ne.s32.totalorder %s48, %s49
      %p58 = scmp.eq.s32.totalorder %s17, 0
      %p59 = por %p57, %p58
      %p60 = scmp.ne.s32.totalorder %s48, %s49
      %p61 = scmp.eq.s32.totalorder %s18, 1
      %p62 = por %p60, %p61
      %p64 = scmp.ne.s32.totalorder %s49, %s63
      %p65 = scmp.eq.s32.totalorder %s18, 0
      %p66 = por %p64, %p65
      %s68 = sadd.s32 %s67, 1
      %p71 = scmp.eq.s32.totalorder %s12, 1
      %p72 = scmp.ne.s32.totalorder %s67, %s69
      %p73 = scmp.eq.s32.totalorder %s12, 0
      %p74 = por %p72, %p73
      %p75 = scmp.ne.s32.totalorder %s67, %s69
      %p76 = scmp.eq.s32.totalorder %s17, 1
      %p77 = por %p75, %p76
      %p78 = scmp.ne.s32.totalorder %s69, %s70
      %p79 = scmp.eq.s32.totalorder %s17, 0
      %p80 = por %p78, %p79
      %p81 = scmp.ne.s32.totalorder %s69, %s70
      %p82 = scmp.eq.s32.totalorder %s18, 1
      %p83 = por %p81, %p82
      %p85 = scmp.ne.s32.totalorder %s70, %s84
      %p86 = scmp.eq.s32.totalorder %s18, 0
      %p87 = por %p85, %p86
      %s89 = sadd.s32 %s88, 1
      %p92 = scmp.eq.s32.totalorder %s12, 1
      %p93 = scmp.ne.s32.totalorder %s88, %s90
      %p94 = scmp.eq.s32.totalorder %s12, 0
      %p95 = por %p93, %p94
      %p96 = scmp.ne.s32.totalorder %s88, %s90
      %p97 = scmp.eq.s32.totalorder %s17, 1
      %p98 = por %p96, %p97
      %p99 = scmp.ne.s32.totalorder %s90, %s91
      %p100 = scmp.eq.s32.totalorder %s17, 0
      %p101 = por %p99, %p100
      %p102 = scmp.ne.s32.totalorder %s90, %s91
      %p103 = scmp.eq.s32.totalorder %s18, 1
      %p104 = por %p102, %p103
      %p106 = scmp.ne.s32.totalorder %s91, %s105
      %p107 = scmp.eq.s32.totalorder %s18, 0
      %p108 = por %p106, %p107
      %s109 = ssub.s32 %s12, %s19
      %p110 = scmp.eq.s32.totalorder %s109, 0
      %s112 = sadd.s32 %s111, 1
      %s113 = scalar_select %p110, %s111, %s112
      %p116 = pneg %p110
      %p117 = scmp.eq.s32.totalorder %s12, 1
      %p118 = por %p116, %p117
      %p119 = scmp.ne.s32.totalorder %s111, %s114
      %p120 = scmp.eq.s32.totalorder %s12, 0
      %p121 = por %p119, %p120
      %p122 = scmp.ne.s32.totalorder %s111, %s114
      %p123 = scmp.eq.s32.totalorder %s17, 1
      %p124 = por %p122, %p123
      %p125 = scmp.ne.s32.totalorder %s114, %s115
      %p126 = scmp.eq.s32.totalorder %s17, 0
      %p127 = por %p125, %p126
      %p128 = scmp.ne.s32.totalorder %s114, %s115
      %p129 = scmp.eq.s32.totalorder %s18, 1
      %p130 = por %p128, %p129
      %p132 = scmp.ne.s32.totalorder %s115, %s131
      %p133 = scmp.eq.s32.totalorder %s18, 0
      %p134 = por %p132, %p133
      %p135 = scmp.le.s32.totalorder 1, %s12
      %p136 = scmp.lt.s32.totalorder %s12, 3
      %p137 = pnand %p135, %p136
      %p138 = pneg %p137
      // Predicated region
      $region9: #{_forward.14} parent=5 // pred_check
        _
      $region10: #{_forward.14} parent=5 // pred_check_branch
        %140 = sbr.rel (%p137) target = $region12
      $region11: #{_forward.14} parent=5 // pred_region
        %s141 = ssub.s32 %s12, 1
        // Predicated region
        $region13: #{_forward.14} parent=11 // pred_check
          %p142 = pneg %p59
        $region14: #{_forward.14} parent=11 // pred_check_branch
          %144 = sbr.rel (%p142) target = $region16
        $region15: #{_forward.14} parent=11 // pred_region
          %s146 = ssub.s32 64, 64
          %147 = vsyncadd [#allocation3], %s146
          %s149 = sshll.u32 %s1, 4
          %s150 = int_to_ptr.vmem [resolvable:$true] %s149
          %152 = dma.vmem_to_smem %s150, 64, [#allocation2], [#allocation3]
        $region16: #{_forward.14} parent=11 // pred_fallthru
          _
        // Predicated region
        $region17: #{_forward.14} parent=11 // pred_check
          %p153 = pneg %p80
        $region18: #{_forward.14} parent=11 // pred_check_branch
          %155 = sbr.rel (%p153) target = $region20
        $region19: #{_forward.14} parent=11 // pred_region
          %s157 = ssub.s32 16, 16
          %158 = vsyncadd [#allocation5], %s157
          %s160 = sshll.u32 %s2, 4
          %s161 = int_to_ptr.vmem [resolvable:$true] %s160
          %163 = dma.vmem_to_smem %s161, 16, [#allocation4], [#allocation5]
        $region20: #{_forward.14} parent=11 // pred_fallthru
          _
        // Predicated region
        $region21: #{_forward.14} parent=11 // pred_check
          %p164 = pneg %p101
        $region22: #{_forward.14} parent=11 // pred_check_branch
          %166 = sbr.rel (%p164) target = $region24
        $region23: #{_forward.14} parent=11 // pred_region
          %s168 = ssub.s32 16, 16
          %169 = vsyncadd [#allocation5], %s168
          %s171 = sshll.u32 %s3, 4
          %s172 = int_to_ptr.vmem [resolvable:$true] %s171
          %174 = dma.vmem_to_smem %s172, 16, [#allocation6], [#allocation5]
        $region24: #{_forward.14} parent=11 // pred_fallthru
          _
      $region12: #{_forward.14} parent=5 // pred_fallthru
        _
      %p175 = scmp.lt.s32.totalorder %s12, 2
      // Predicated region
      $region25: #{_forward.14} parent=5 // pred_check
        %p176 = pneg %p175
      $region26: #{_forward.14} parent=5 // pred_check_branch
        %178 = sbr.rel (%p176) target = $region28
      $region27: #{_forward.14} parent=5 // pred_region
        // Predicated region
        $region29: #{_forward.14} parent=27 // pred_check
          %p179 = pneg %p32
        $region30: #{_forward.14} parent=27 // pred_check_branch
          %181 = sbr.rel (%p179) target = $region32
        $region31: #{_forward.14} parent=27 // pred_region
          %p182 = scmp.lt.s32.totalorder %s12, 1
          %s183 = scalar_select %p182, %s12, 1
          %s184 = smul.addr %s183, 3
          %s185 = smul.addr %s184, 4
          %s186 = scalar_lea.vmem %s0, %s185
        $region32: #{_forward.14} parent=27 // pred_fallthru
          _
      $region28: #{_forward.14} parent=5 // pred_fallthru
        _
      %p187 = scmp.le.s32.totalorder 1, %s12
      %p188 = scmp.lt.s32.totalorder %s12, 3
      %p189 = pnand %p187, %p188
      %p190 = pneg %p189
      // Predicated region
      $region33: #{_forward.14} parent=5 // pred_check
        _
      $region34: #{_forward.14} parent=5 // pred_check_branch
        %192 = sbr.rel (%p189) target = $region36
      $region35: #{_forward.14} parent=5 // pred_region
        %s193 = ssub.s32 %s12, 1
        // Predicated region
        $region37: #{_forward.14} parent=35 // pred_check
          %p194 = pneg %p59
        $region38: #{_forward.14} parent=35 // pred_check_branch
          %196 = sbr.rel (%p194) target = $region40
        $region39: #{_forward.14} parent=35 // pred_region
          %197 = dma.done [#allocation3], 64
        $region40: #{_forward.14} parent=35 // pred_fallthru
          _
        // Predicated region
        $region41: #{_forward.14} parent=35 // pred_check
          %p198 = pneg %p80
        $region42: #{_forward.14} parent=35 // pred_check_branch
          %200 = sbr.rel (%p198) target = $region44
        $region43: #{_forward.14} parent=35 // pred_region
          %201 = dma.done [#allocation5], 16
        $region44: #{_forward.14} parent=35 // pred_fallthru
          _
        // Predicated region
        $region45: #{_forward.14} parent=35 // pred_check
          %p202 = pneg %p101
        $region46: #{_forward.14} parent=35 // pred_check_branch
          %204 = sbr.rel (%p202) target = $region48
        $region47: #{_forward.14} parent=35 // pred_region
          %205 = dma.done [#allocation5], 16
        $region48: #{_forward.14} parent=35 // pred_fallthru
          _
        %206 = sfence
        %p207 = scmp.lt.s32.totalorder %s17, 1
        %s208 = scalar_select %p207, %s17, 1
        %s209 = smul.addr %s208, 3
        %s210 = smul.addr %s209, 4
        %s211 = scalar_lea.vmem %s0, %s210
        %p212 = pneg %p38
        %p213 = pneg %p35
        %p214 = pneg %p59
        %p215 = pneg %p56
        %p216 = pneg %p80
        %p217 = pneg %p77
        %p218 = pneg %p101
        %p219 = pneg %p98
        %p220 = pneg %p127
        %p221 = pneg %p124
        %p222 = scmp.lt.s32.totalorder %s17, 1
        %s223 = scalar_select %p222, %s17, 1
        %s224 = smul.addr %s223, 4
        %s225 = scalar_lea.vmem %s4, %s224
        %p226 = scmp.lt.s32.totalorder %s17, 1
        %s227 = scalar_select %p226, %s17, 1
        %s228 = smul.addr %s227, 3
        %s229 = smul.addr %s228, 4
        %s230 = scalar_lea.vmem %s0, %s229
        %p231 = scmp.lt.s32.totalorder %s17, 1
        %s232 = scalar_select %p231, %s17, 1
        %s233 = smul.addr %s232, 4
        %s234 = scalar_lea.vmem %s4, %s233
        %v236 = vld [vmem:[%s230] sm:$0x7]
        %v237 = vld [vmem:[%s230 + $0x4] sm:$0x7]
        %vm238 = vcmask 261120
        %v240 = vsel %vm238, %v236, 0
        %v243 = vsel %vm238, %v237, 0
        %245 = vmatprep.subr.bf16.mxu0 0
        %246 = vmatpush1.bf16.xpose.msra.mxu0 0
        %247 = vmatprep.subr.bf16.mxu0 0
        %248 = vmatpush1.bf16.xpose.msra.mxu0 0
        %249 = vmatprep.subr.bf16.mxu0 0
        %250 = vmatpush1.bf16.xpose.msra.mxu0 0
        %251 = vmatprep.subr.bf16.mxu0 0
        %252 = vmatpush1.bf16.xpose.msra.mxu0 0
        %253 = vmatprep.subr.bf16.mxu0 0
        %254 = vmatpush1.bf16.xpose.msra.mxu0 0
        %255 = vmatprep.subr.bf16.mxu0 0
        %256 = vmatpush1.bf16.xpose.msra.mxu0 0
        %257 = vmatprep.subr.bf16.mxu0 0
        %258 = vmatpush1.bf16.xpose.msra.mxu0 0
        %259 = vmatprep.subr.bf16.mxu0 0
        %260 = vmatpush1.bf16.xpose.msra.mxu0 %v243
        %261 = vmatprep.subr.bf16.mxu0 0
        %262 = vmatpush2.bf16.xpose.msra.mxu0 0
        %263 = vmatprep.subr.bf16.mxu0 0
        %264 = vmatpush2.bf16.xpose.msra.mxu0 0
        %265 = vmatprep.subr.bf16.mxu0 0
        %266 = vmatpush2.bf16.xpose.msra.mxu0 0
        %267 = vmatprep.subr.bf16.mxu0 0
        %268 = vmatpush2.bf16.xpose.msra.mxu0 0
        %269 = vmatprep.subr.bf16.mxu0 0
        %270 = vmatpush2.bf16.xpose.msra.mxu0 0
        %271 = vmatprep.subr.bf16.mxu0 0
        %272 = vmatpush2.bf16.xpose.msra.mxu0 0
        %273 = vmatprep.subr.bf16.mxu0 0
        %274 = vmatpush2.bf16.xpose.msra.mxu0 0
        %275 = vmatprep.subr.bf16.mxu0 0
        %276 = vmatpush2.bf16.xpose.msra.mxu0 0
        %277 = vmatprep.mubr.bf16.mxu0 0
        %278 = vmatmul.mubr.bf16.gmra.mxu0 %v240
        %v279 = vpop.f32.mrf.mxu0
        %v280 = vadd.f32 0.0, %v279
        %v281 = vpop.f32.mrf.mxu0
        %v282 = vpop.f32.mrf.mxu0
        %v283 = vpop.f32.mrf.mxu0
        %284 = vdwg.mxu0
        %v285 = vmul.f32 %v280, 0.17677669
        %vm286 = vcmask 36864
        %v287 = vsel %vm286, %v285, -inf
        %288 = vmax.xlane.f32.xlu0 %v287
        %v289 = vpop.xlane.xlu0 %288
        %v290 = vsub.f32 %v285, %v289
        %v291 = vmul.f32 %v290, 1.442695
        %v292 = vpow.pop %v291
        %v293 = vsel %vm286, %v292, 0.0
        %294 = vadd.xlane.f32.xlu0 %v293
        %v295 = vpop.xlane.xlu0 %294
        %v296 = vrcp.pop %v295
        %v297 = vmul.f32 %v292, %v296
        %v299 = vunpack.c.l.b16 %v236
        %v300 = vpack.c.b16 %v299, %v299
        %301 = vrot.lane.b32.xlu0 %v300, 96
        %v302 = vpop.permute.xlu0 %301
        %v304 = vunpack.c.l.b16 %v237
        %v305 = vpack.c.b16 %v304, %v304
        %306 = vrot.lane.b32.xlu0 %v305, 96
        %v307 = vpop.permute.xlu0 %306
        %v309 = vsel %vm238, %v302, 0
        %v312 = vsel %vm238, %v307, 0
        %314 = vmatprep.subr.bf16.mxu0 0
        %315 = vmatpush1.bf16.xpose.msra.mxu0 0
        %316 = vmatprep.subr.bf16.mxu0 0
        %317 = vmatpush1.bf16.xpose.msra.mxu0 0
        %318 = vmatprep.subr.bf16.mxu0 0
        %319 = vmatpush1.bf16.xpose.msra.mxu0 0
        %320 = vmatprep.subr.bf16.mxu0 0
        %321 = vmatpush1.bf16.xpose.msra.mxu0 0
        %322 = vmatprep.subr.bf16.mxu0 0
        %323 = vmatpush1.bf16.xpose.msra.mxu0 0
        %324 = vmatprep.subr.bf16.mxu0 0
        %325 = vmatpush1.bf16.xpose.msra.mxu0 0
        %326 = vmatprep.subr.bf16.mxu0 0
        %327 = vmatpush1.bf16.xpose.msra.mxu0 0
        %328 = vmatprep.subr.bf16.mxu0 0
        %329 = vmatpush1.bf16.xpose.msra.mxu0 %v312
        %330 = vmatprep.subr.bf16.mxu0 0
        %331 = vmatpush2.bf16.xpose.msra.mxu0 0
        %332 = vmatprep.subr.bf16.mxu0 0
        %333 = vmatpush2.bf16.xpose.msra.mxu0 0
        %334 = vmatprep.subr.bf16.mxu0 0
        %335 = vmatpush2.bf16.xpose.msra.mxu0 0
        %336 = vmatprep.subr.bf16.mxu0 0
        %337 = vmatpush2.bf16.xpose.msra.mxu0 0
        %338 = vmatprep.subr.bf16.mxu0 0
        %339 = vmatpush2.bf16.xpose.msra.mxu0 0
        %340 = vmatprep.subr.bf16.mxu0 0
        %341 = vmatpush2.bf16.xpose.msra.mxu0 0
        %342 = vmatprep.subr.bf16.mxu0 0
        %343 = vmatpush2.bf16.xpose.msra.mxu0 0
        %344 = vmatprep.subr.bf16.mxu0 0
        %345 = vmatpush2.bf16.xpose.msra.mxu0 0
        %346 = vmatprep.mubr.bf16.mxu0 0
        %347 = vmatmul.mubr.bf16.gmra.mxu0 %v309
        %v348 = vpop.f32.mrf.mxu0
        %v349 = vadd.f32 0.0, %v348
        %v350 = vpop.f32.mrf.mxu0
        %v351 = vpop.f32.mrf.mxu0
        %v352 = vpop.f32.mrf.mxu0
        %353 = vdwg.mxu0
        %v354 = vmul.f32 %v349, 0.17677669
        %v355 = vsel %vm286, %v354, -inf
        %356 = vmax.xlane.f32.xlu0 %v355
        %v357 = vpop.xlane.xlu0 %356
        %v358 = vsub.f32 %v354, %v357
        %v359 = vmul.f32 %v358, 1.442695
        %v360 = vpow.pop %v359
        %v361 = vsel %vm286, %v360, 0.0
        %362 = vadd.xlane.f32.xlu0 %v361
        %v363 = vpop.xlane.xlu0 %362
        %v364 = vrcp.pop %v363
        %v365 = vmul.f32 %v360, %v364
        %366 = vrot.lane.b32.xlu0 %v300, 64
        %v367 = vpop.permute.xlu0 %366
        %368 = vrot.lane.b32.xlu0 %v305, 64
        %v369 = vpop.permute.xlu0 %368
        %v371 = vsel %vm238, %v367, 0
        %v374 = vsel %vm238, %v369, 0
        %376 = vmatprep.subr.bf16.mxu0 0
        %377 = vmatpush1.bf16.xpose.msra.mxu0 0
        %378 = vmatprep.subr.bf16.mxu0 0
        %379 = vmatpush1.bf16.xpose.msra.mxu0 0
        %380 = vmatprep.subr.bf16.mxu0 0
        %381 = vmatpush1.bf16.xpose.msra.mxu0 0
        %382 = vmatprep.subr.bf16.mxu0 0
        %383 = vmatpush1.bf16.xpose.msra.mxu0 0
        %384 = vmatprep.subr.bf16.mxu0 0
        %385 = vmatpush1.bf16.xpose.msra.mxu0 0
        %386 = vmatprep.subr.bf16.mxu0 0
        %387 = vmatpush1.bf16.xpose.msra.mxu0 0
        %388 = vmatprep.subr.bf16.mxu0 0
        %389 = vmatpush1.bf16.xpose.msra.mxu0 0
        %390 = vmatprep.subr.bf16.mxu0 0
        %391 = vmatpush1.bf16.xpose.msra.mxu0 %v374
        %392 = vmatprep.subr.bf16.mxu0 0
        %393 = vmatpush2.bf16.xpose.msra.mxu0 0
        %394 = vmatprep.subr.bf16.mxu0 0
        %395 = vmatpush2.bf16.xpose.msra.mxu0 0
        %396 = vmatprep.subr.bf16.mxu0 0
        %397 = vmatpush2.bf16.xpose.msra.mxu0 0
        %398 = vmatprep.subr.bf16.mxu0 0
        %399 = vmatpush2.bf16.xpose.msra.mxu0 0
        %400 = vmatprep.subr.bf16.mxu0 0
        %401 = vmatpush2.bf16.xpose.msra.mxu0 0
        %402 = vmatprep.subr.bf16.mxu0 0
        %403 = vmatpush2.bf16.xpose.msra.mxu0 0
        %404 = vmatprep.subr.bf16.mxu0 0
        %405 = vmatpush2.bf16.xpose.msra.mxu0 0
        %406 = vmatprep.subr.bf16.mxu0 0
        %407 = vmatpush2.bf16.xpose.msra.mxu0 0
        %408 = vmatprep.mubr.bf16.mxu0 0
        %409 = vmatmul.mubr.bf16.gmra.mxu0 %v371
        %v410 = vpop.f32.mrf.mxu0
        %v411 = vadd.f32 0.0, %v410
        %v412 = vpop.f32.mrf.mxu0
        %v413 = vpop.f32.mrf.mxu0
        %v414 = vpop.f32.mrf.mxu0
        %415 = vdwg.mxu0
        %v416 = vmul.f32 %v411, 0.17677669
        %v417 = vsel %vm286, %v416, -inf
        %418 = vmax.xlane.f32.xlu0 %v417
        %v419 = vpop.xlane.xlu0 %418
        %v420 = vsub.f32 %v416, %v419
        %v421 = vmul.f32 %v420, 1.442695
        %v422 = vpow.pop %v421
        %v423 = vsel %vm286, %v422, 0.0
        %424 = vadd.xlane.f32.xlu0 %v423
        %v425 = vpop.xlane.xlu0 %424
        %v426 = vrcp.pop %v425
        %v427 = vmul.f32 %v422, %v426
        %428 = vrot.lane.b32.xlu0 %v300, 32
        %v429 = vpop.permute.xlu0 %428
        %430 = vrot.lane.b32.xlu0 %v305, 32
        %v431 = vpop.permute.xlu0 %430
        %v433 = vsel %vm238, %v429, 0
        %v436 = vsel %vm238, %v431, 0
        %438 = vmatprep.subr.bf16.mxu0 0
        %439 = vmatpush1.bf16.xpose.msra.mxu0 0
        %440 = vmatprep.subr.bf16.mxu0 0
        %441 = vmatpush1.bf16.xpose.msra.mxu0 0
        %442 = vmatprep.subr.bf16.mxu0 0
        %443 = vmatpush1.bf16.xpose.msra.mxu0 0
        %444 = vmatprep.subr.bf16.mxu0 0
        %445 = vmatpush1.bf16.xpose.msra.mxu0 0
        %446 = vmatprep.subr.bf16.mxu0 0
        %447 = vmatpush1.bf16.xpose.msra.mxu0 0
        %448 = vmatprep.subr.bf16.mxu0 0
        %449 = vmatpush1.bf16.xpose.msra.mxu0 0
        %450 = vmatprep.subr.bf16.mxu0 0
        %451 = vmatpush1.bf16.xpose.msra.mxu0 0
        %452 = vmatprep.subr.bf16.mxu0 0
        %453 = vmatpush1.bf16.xpose.msra.mxu0 %v436
        %454 = vmatprep.subr.bf16.mxu0 0
        %455 = vmatpush2.bf16.xpose.msra.mxu0 0
        %456 = vmatprep.subr.bf16.mxu0 0
        %457 = vmatpush2.bf16.xpose.msra.mxu0 0
        %458 = vmatprep.subr.bf16.mxu0 0
        %459 = vmatpush2.bf16.xpose.msra.mxu0 0
        %460 = vmatprep.subr.bf16.mxu0 0
        %461 = vmatpush2.bf16.xpose.msra.mxu0 0
        %462 = vmatprep.subr.bf16.mxu0 0
        %463 = vmatpush2.bf16.xpose.msra.mxu0 0
        %464 = vmatprep.subr.bf16.mxu0 0
        %465 = vmatpush2.bf16.xpose.msra.mxu0 0
        %466 = vmatprep.subr.bf16.mxu0 0
        %467 = vmatpush2.bf16.xpose.msra.mxu0 0
        %468 = vmatprep.subr.bf16.mxu0 0
        %469 = vmatpush2.bf16.xpose.msra.mxu0 0
        %470 = vmatprep.mubr.bf16.mxu0 0
        %471 = vmatmul.mubr.bf16.gmra.mxu0 %v433
        %v472 = vpop.f32.mrf.mxu0
        %v473 = vadd.f32 0.0, %v472
        %v474 = vpop.f32.mrf.mxu0
        %v475 = vpop.f32.mrf.mxu0
        %v476 = vpop.f32.mrf.mxu0
        %477 = vdwg.mxu0
        %v478 = vmul.f32 %v473, 0.17677669
        %v479 = vsel %vm286, %v478, -inf
        %480 = vmax.xlane.f32.xlu0 %v479
        %v481 = vpop.xlane.xlu0 %480
        %v482 = vsub.f32 %v478, %v481
        %v483 = vmul.f32 %v482, 1.442695
        %v484 = vpow.pop %v483
        %v485 = vsel %vm286, %v484, 0.0
        %486 = vadd.xlane.f32.xlu0 %v485
        %v487 = vpop.xlane.xlu0 %486
        %v488 = vrcp.pop %v487
        %v489 = vmul.f32 %v484, %v488
        %s490 = sld [smem:[#allocation2]]
        %v491 = vstv %s490
        %v492 = vmul.f32 %v297, %v491
        %s493 = sld [smem:[#allocation2 + $0x80]]
        %v494 = vstv %s493
        %v495 = vmul.f32 %v365, %v494
        %v496 = vadd.f32 %v492, %v495
        %s497 = sld [smem:[#allocation2 + $0x100]]
        %v498 = vstv %s497
        %v499 = vmul.f32 %v427, %v498
        %v500 = vadd.f32 %v496, %v499
        %s501 = sld [smem:[#allocation2 + $0x180]]
        %v502 = vstv %s501
        %v503 = vmul.f32 %v489, %v502
        %v504 = vadd.f32 %v500, %v503
        %s505 = sld [smem:[#allocation2 + $0x1]]
        %v506 = vstv %s505
        %v507 = vmul.f32 %v297, %v506
        %s508 = sld [smem:[#allocation2 + $0x81]]
        %v509 = vstv %s508
        %v510 = vmul.f32 %v365, %v509
        %v511 = vadd.f32 %v507, %v510
        %s512 = sld [smem:[#allocation2 + $0x101]]
        %v513 = vstv %s512
        %v514 = vmul.f32 %v427, %v513
        %v515 = vadd.f32 %v511, %v514
        %s516 = sld [smem:[#allocation2 + $0x181]]
        %v517 = vstv %s516
        %v518 = vmul.f32 %v489, %v517
        %v519 = vadd.f32 %v515, %v518
        %s520 = sld [smem:[#allocation2 + $0x2]]
        %v521 = vstv %s520
        %v522 = vmul.f32 %v297, %v521
        %s523 = sld [smem:[#allocation2 + $0x82]]
        %v524 = vstv %s523
        %v525 = vmul.f32 %v365, %v524
        %v526 = vadd.f32 %v522, %v525
        %s527 = sld [smem:[#allocation2 + $0x102]]
        %v528 = vstv %s527
        %v529 = vmul.f32 %v427, %v528
        %v530 = vadd.f32 %v526, %v529
        %s531 = sld [smem:[#allocation2 + $0x182]]
        %v532 = vstv %s531
        %v533 = vmul.f32 %v489, %v532
        %v534 = vadd.f32 %v530, %v533
        %s535 = sld [smem:[#allocation2 + $0x3]]
        %v536 = vstv %s535
        %v537 = vmul.f32 %v297, %v536
        %s538 = sld [smem:[#allocation2 + $0x83]]
        %v539 = vstv %s538
        %v540 = vmul.f32 %v365, %v539
        %v541 = vadd.f32 %v537, %v540
        %s542 = sld [smem:[#allocation2 + $0x103]]
        %v543 = vstv %s542
        %v544 = vmul.f32 %v427, %v543
        %v545 = vadd.f32 %v541, %v544
        %s546 = sld [smem:[#allocation2 + $0x183]]
        %v547 = vstv %s546
        %v548 = vmul.f32 %v489, %v547
        %v549 = vadd.f32 %v545, %v548
        %v550 = vadd.f32 %v504, %v519
        %v551 = vadd.f32 %v550, %v534
        %v552 = vadd.f32 %v551, %v549
        %v553 = vmul.f32 %v552, 0.25
        %v554 = vsub.f32 %v504, %v553
        %v555 = vmul.f32 %v554, %v554
        %v556 = vsub.f32 %v519, %v553
        %v557 = vmul.f32 %v556, %v556
        %v558 = vadd.f32 %v555, %v557
        %v559 = vsub.f32 %v534, %v553
        %v560 = vmul.f32 %v559, %v559
        %v561 = vadd.f32 %v558, %v560
        %v562 = vsub.f32 %v549, %v553
        %v563 = vmul.f32 %v562, %v562
        %v564 = vadd.f32 %v561, %v563
        %v565 = vmul.f32 %v564, 0.25
        %v566 = vadd.f32 %v565, 1e-05
        %v567 = vrsqrt.pop %v566
        %v568 = vmul.f32 %v554, %v567
        %s569 = sld [smem:[#allocation4]]
        %v570 = vstv %s569
        %v571 = vmul.f32 %v568, %v570
        %s572 = sld [smem:[#allocation6]]
        %v573 = vstv %s572
        %v574 = vadd.f32 %v571, %v573
        %v575 = vpack.c.bf16 %v574, %v574
        %v576 = vld [vmem:[%s230 + $0x8] sm:$0x7]
        %vm577 = vcmask 39936
        %v579 = vsel %vm577, %v575, 0
        %vm581 = vcmask 1041408
        %vm582 = vcmask 1042432
        %v583 = vsel %vm581, 4294967295, 65535
        %v584 = vsel %vm582, %v583, 0
        %v586 = vand.u32 %v576, %v584
        %588 = vmatprep.subr.bf16.mxu0 0
        %589 = vmatpush1.bf16.msra.mxu0 0
        %590 = vmatprep.subr.bf16.mxu0 0
        %591 = vmatpush1.bf16.msra.mxu0 0
        %592 = vmatprep.subr.bf16.mxu0 0
        %593 = vmatpush1.bf16.msra.mxu0 0
        %594 = vmatprep.subr.bf16.mxu0 0
        %595 = vmatpush1.bf16.msra.mxu0 0
        %596 = vmatprep.subr.bf16.mxu0 0
        %597 = vmatpush1.bf16.msra.mxu0 0
        %598 = vmatprep.subr.bf16.mxu0 0
        %599 = vmatpush1.bf16.msra.mxu0 0
        %600 = vmatprep.subr.bf16.mxu0 0
        %601 = vmatpush1.bf16.msra.mxu0 0
        %602 = vmatprep.subr.bf16.mxu0 0
        %603 = vmatpush1.bf16.msra.mxu0 %v586
        %604 = vmatprep.subr.bf16.mxu0 0
        %605 = vmatpush2.bf16.msra.mxu0 0
        %606 = vmatprep.subr.bf16.mxu0 0
        %607 = vmatpush2.bf16.msra.mxu0 0
        %608 = vmatprep.subr.bf16.mxu0 0
        %609 = vmatpush2.bf16.msra.mxu0 0
        %610 = vmatprep.subr.bf16.mxu0 0
        %611 = vmatpush2.bf16.msra.mxu0 0
        %612 = vmatprep.subr.bf16.mxu0 0
        %613 = vmatpush2.bf16.msra.mxu0 0
        %614 = vmatprep.subr.bf16.mxu0 0
        %615 = vmatpush2.bf16.msra.mxu0 0
        %616 = vmatprep.subr.bf16.mxu0 0
        %617 = vmatpush2.bf16.msra.mxu0 0
        %618 = vmatprep.subr.bf16.mxu0 0
        %619 = vmatpush2.bf16.msra.mxu0 0
        %620 = vmatprep.mubr.bf16.mxu0 0
        %621 = vmatmul.mubr.bf16.gmra.mxu0 %v579
        %v622 = vpop.f32.mrf.mxu0
        %v623 = vadd.f32 0.0, %v622
        %v624 = vpop.f32.mrf.mxu0
        %v625 = vpop.f32.mrf.mxu0
        %v626 = vpop.f32.mrf.mxu0
        %627 = vdwg.mxu0
        %v628 = vpack.c.bf16 %v623, %v623
        %vm629 = vcmask 256000
        %vm630 = vsmask.f32 2304
        %vm631 = vmand %vm629, %vm630
        %v632 = vld [vmem:[%s234] sm:$0x7]
        %v633 = vsel %vm631, %v628, %v632
        %634 = vst [vmem:[%s234] sm:$0x7] %v633
        %v635 = vmul.f32 %v556, %v567
        %s636 = sld [smem:[#allocation4 + $0x1]]
        %v637 = vstv %s636
        %v638 = vmul.f32 %v635, %v637
        %s639 = sld [smem:[#allocation6 + $0x1]]
        %v640 = vstv %s639
        %v641 = vadd.f32 %v638, %v640
        %v642 = vpack.c.bf16 %v641, %v641
        %v643 = vld [vmem:[%s230 + $0x8] sm:$0x7]
        %v645 = vunpack.c.l.b16 %v643
        %v646 = vpack.c.b16 %v645, %v645
        %647 = vrot.lane.b32.xlu0 %v646, 96
        %v648 = vpop.permute.xlu0 %647
        %v650 = vsel %vm577, %v642, 0
        %v653 = vand.u32 %v648, %v584
        %655 = vmatprep.subr.bf16.mxu0 0
        %656 = vmatpush1.bf16.msra.mxu0 0
        %657 = vmatprep.subr.bf16.mxu0 0
        %658 = vmatpush1.bf16.msra.mxu0 0
        %659 = vmatprep.subr.bf16.mxu0 0
        %660 = vmatpush1.bf16.msra.mxu0 0
        %661 = vmatprep.subr.bf16.mxu0 0
        %662 = vmatpush1.bf16.msra.mxu0 0
        %663 = vmatprep.subr.bf16.mxu0 0
        %664 = vmatpush1.bf16.msra.mxu0 0
        %665 = vmatprep.subr.bf16.mxu0 0
        %666 = vmatpush1.bf16.msra.mxu0 0
        %667 = vmatprep.subr.bf16.mxu0 0
        %668 = vmatpush1.bf16.msra.mxu0 0
        %669 = vmatprep.subr.bf16.mxu0 0
        %670 = vmatpush1.bf16.msra.mxu0 %v653
        %671 = vmatprep.subr.bf16.mxu0 0
        %672 = vmatpush2.bf16.msra.mxu0 0
        %673 = vmatprep.subr.bf16.mxu0 0
        %674 = vmatpush2.bf16.msra.mxu0 0
        %675 = vmatprep.subr.bf16.mxu0 0
        %676 = vmatpush2.bf16.msra.mxu0 0
        %677 = vmatprep.subr.bf16.mxu0 0
        %678 = vmatpush2.bf16.msra.mxu0 0
        %679 = vmatprep.subr.bf16.mxu0 0
        %680 = vmatpush2.bf16.msra.mxu0 0
        %681 = vmatprep.subr.bf16.mxu0 0
        %682 = vmatpush2.bf16.msra.mxu0 0
        %683 = vmatprep.subr.bf16.mxu0 0
        %684 = vmatpush2.bf16.msra.mxu0 0
        %685 = vmatprep.subr.bf16.mxu0 0
        %686 = vmatpush2.bf16.msra.mxu0 0
        %687 = vmatprep.mubr.bf16.mxu0 0
        %688 = vmatmul.mubr.bf16.gmra.mxu0 %v650
        %v689 = vpop.f32.mrf.mxu0
        %v690 = vadd.f32 0.0, %v689
        %v691 = vpop.f32.mrf.mxu0
        %v692 = vpop.f32.mrf.mxu0
        %v693 = vpop.f32.mrf.mxu0
        %694 = vdwg.mxu0
        %v695 = vpack.c.bf16 %v690, %v690
        %v697 = vunpack.c.l.b16 %v695
        %v698 = vpack.c.b16 %v697, %v697
        %699 = vrot.lane.b32.xlu0 %v698, 32
        %v700 = vpop.permute.xlu0 %699
        %vm702 = vcmask 518400
        %vm703 = vmand %vm702, %vm630
        %v704 = vld [vmem:[%s234] sm:$0x7]
        %v705 = vsel %vm703, %v700, %v704
        %706 = vst [vmem:[%s234] sm:$0x7] %v705
        %v707 = vmul.f32 %v559, %v567
        %s708 = sld [smem:[#allocation4 + $0x2]]
        %v709 = vstv %s708
        %v710 = vmul.f32 %v707, %v709
        %s711 = sld [smem:[#allocation6 + $0x2]]
        %v712 = vstv %s711
        %v713 = vadd.f32 %v710, %v712
        %v714 = vpack.c.bf16 %v713, %v713
        %v715 = vld [vmem:[%s230 + $0x8] sm:$0x7]
        %v717 = vunpack.c.l.b16 %v715
        %v718 = vpack.c.b16 %v717, %v717
        %719 = vrot.lane.b32.xlu0 %v718, 64
        %v720 = vpop.permute.xlu0 %719
        %v722 = vsel %vm577, %v714, 0
        %v725 = vand.u32 %v720, %v584
        %727 = vmatprep.subr.bf16.mxu0 0
        %728 = vmatpush1.bf16.msra.mxu0 0
        %729 = vmatprep.subr.bf16.mxu0 0
        %730 = vmatpush1.bf16.msra.mxu0 0
        %731 = vmatprep.subr.bf16.mxu0 0
        %732 = vmatpush1.bf16.msra.mxu0 0
        %733 = vmatprep.subr.bf16.mxu0 0
        %734 = vmatpush1.bf16.msra.mxu0 0
        %735 = vmatprep.subr.bf16.mxu0 0
        %736 = vmatpush1.bf16.msra.mxu0 0
        %737 = vmatprep.subr.bf16.mxu0 0
        %738 = vmatpush1.bf16.msra.mxu0 0
        %739 = vmatprep.subr.bf16.mxu0 0
        %740 = vmatpush1.bf16.msra.mxu0 0
        %741 = vmatprep.subr.bf16.mxu0 0
        %742 = vmatpush1.bf16.msra.mxu0 %v725
        %743 = vmatprep.subr.bf16.mxu0 0
        %744 = vmatpush2.bf16.msra.mxu0 0
        %745 = vmatprep.subr.bf16.mxu0 0
        %746 = vmatpush2.bf16.msra.mxu0 0
        %747 = vmatprep.subr.bf16.mxu0 0
        %748 = vmatpush2.bf16.msra.mxu0 0
        %749 = vmatprep.subr.bf16.mxu0 0
        %750 = vmatpush2.bf16.msra.mxu0 0
        %751 = vmatprep.subr.bf16.mxu0 0
        %752 = vmatpush2.bf16.msra.mxu0 0
        %753 = vmatprep.subr.bf16.mxu0 0
        %754 = vmatpush2.bf16.msra.mxu0 0
        %755 = vmatprep.subr.bf16.mxu0 0
        %756 = vmatpush2.bf16.msra.mxu0 0
        %757 = vmatprep.subr.bf16.mxu0 0
        %758 = vmatpush2.bf16.msra.mxu0 0
        %759 = vmatprep.mubr.bf16.mxu0 0
        %760 = vmatmul.mubr.bf16.gmra.mxu0 %v722
        %v761 = vpop.f32.mrf.mxu0
        %v762 = vadd.f32 0.0, %v761
        %v763 = vpop.f32.mrf.mxu0
        %v764 = vpop.f32.mrf.mxu0
        %v765 = vpop.f32.mrf.mxu0
        %766 = vdwg.mxu0
        %v767 = vpack.c.bf16 %v762, %v762
        %v769 = vunpack.c.l.b16 %v767
        %v770 = vpack.c.b16 %v769, %v769
        %771 = vrot.lane.b32.xlu0 %v770, 64
        %v772 = vpop.permute.xlu0 %771
        %vm774 = vcmask 780800
        %vm775 = vmand %vm774, %vm630
        %v776 = vld [vmem:[%s234] sm:$0x7]
        %v777 = vsel %vm775, %v772, %v776
        %778 = vst [vmem:[%s234] sm:$0x7] %v777
        %v779 = vmul.f32 %v562, %v567
        %s780 = sld [smem:[#allocation4 + $0x3]]
        %v781 = vstv %s780
        %v782 = vmul.f32 %v779, %v781
        %s783 = sld [smem:[#allocation6 + $0x3]]
        %v784 = vstv %s783
        %v785 = vadd.f32 %v782, %v784
        %v786 = vpack.c.bf16 %v785, %v785
        %v787 = vld [vmem:[%s230 + $0x8] sm:$0x7]
        %v789 = vunpack.c.l.b16 %v787
        %v790 = vpack.c.b16 %v789, %v789
        %791 = vrot.lane.b32.xlu0 %v790, 32
        %v792 = vpop.permute.xlu0 %791
        %v794 = vsel %vm577, %v786, 0
        %v797 = vand.u32 %v792, %v584
        %799 = vmatprep.subr.bf16.mxu0 0
        %800 = vmatpush1.bf16.msra.mxu0 0
        %801 = vmatprep.subr.bf16.mxu0 0
        %802 = vmatpush1.bf16.msra.mxu0 0
        %803 = vmatprep.subr.bf16.mxu0 0
        %804 = vmatpush1.bf16.msra.mxu0 0
        %805 = vmatprep.subr.bf16.mxu0 0
        %806 = vmatpush1.bf16.msra.mxu0 0
        %807 = vmatprep.subr.bf16.mxu0 0
        %808 = vmatpush1.bf16.msra.mxu0 0
        %809 = vmatprep.subr.bf16.mxu0 0
        %810 = vmatpush1.bf16.msra.mxu0 0
        %811 = vmatprep.subr.bf16.mxu0 0
        %812 = vmatpush1.bf16.msra.mxu0 0
        %813 = vmatprep.subr.bf16.mxu0 0
        %814 = vmatpush1.bf16.msra.mxu0 %v797
        %815 = vmatprep.subr.bf16.mxu0 0
        %816 = vmatpush2.bf16.msra.mxu0 0
        %817 = vmatprep.subr.bf16.mxu0 0
        %818 = vmatpush2.bf16.msra.mxu0 0
        %819 = vmatprep.subr.bf16.mxu0 0
        %820 = vmatpush2.bf16.msra.mxu0 0
        %821 = vmatprep.subr.bf16.mxu0 0
        %822 = vmatpush2.bf16.msra.mxu0 0
        %823 = vmatprep.subr.bf16.mxu0 0
        %824 = vmatpush2.bf16.msra.mxu0 0
        %825 = vmatprep.subr.bf16.mxu0 0
        %826 = vmatpush2.bf16.msra.mxu0 0
        %827 = vmatprep.subr.bf16.mxu0 0
        %828 = vmatpush2.bf16.msra.mxu0 0
        %829 = vmatprep.subr.bf16.mxu0 0
        %830 = vmatpush2.bf16.msra.mxu0 0
        %831 = vmatprep.mubr.bf16.mxu0 0
        %832 = vmatmul.mubr.bf16.gmra.mxu0 %v794
        %v833 = vpop.f32.mrf.mxu0
        %v834 = vadd.f32 0.0, %v833
        %v835 = vpop.f32.mrf.mxu0
        %v836 = vpop.f32.mrf.mxu0
        %v837 = vpop.f32.mrf.mxu0
        %838 = vdwg.mxu0
        %v839 = vpack.c.bf16 %v834, %v834
        %v841 = vunpack.c.l.b16 %v839
        %v842 = vpack.c.b16 %v841, %v841
        %843 = vrot.lane.b32.xlu0 %v842, 96
        %v844 = vpop.permute.xlu0 %843
        %vm846 = vcmask 1043200
        %vm847 = vmand %vm846, %vm630
        %v848 = vld [vmem:[%s234] sm:$0x7]
        %v849 = vsel %vm847, %v844, %v848
        %850 = vst [vmem:[%s234] sm:$0x7] %v849
        %p851 = scmp.lt.s32.totalorder %s17, 1
        %s852 = scalar_select %p851, %s17, 1
        %s853 = smul.addr %s852, 4
        %s854 = scalar_lea.vmem %s4, %s853
        // Predicated region
        $region49: #{_forward.14} parent=35 // pred_check
          %p855 = pneg %p124
        $region50: #{_forward.14} parent=35 // pred_check_branch
          %857 = sbr.rel (%p855) target = $region52
        $region51: #{_forward.14} parent=35 // pred_region
          _
        $region52: #{_forward.14} parent=35 // pred_fallthru
          _
      $region36: #{_forward.14} parent=5 // pred_fallthru
        _
      %p858 = scmp.le.s32.totalorder 2, %s12
      // Predicated region
      $region53: #{_forward.14} parent=5 // pred_check
        %p859 = pneg %p858
      $region54: #{_forward.14} parent=5 // pred_check_branch
        %861 = sbr.rel (%p859) target = $region56
      $region55: #{_forward.14} parent=5 // pred_region
        %s862 = ssub.s32 %s12, 2
        // Predicated region
        $region57: #{_forward.14} parent=55 // pred_check
          %p863 = pneg %p130
        $region58: #{_forward.14} parent=55 // pred_check_branch
          %865 = sbr.rel (%p863) target = $region60
        $region59: #{_forward.14} parent=55 // pred_region
          %p866 = scmp.lt.s32.totalorder %s18, 1
          %s867 = scalar_select %p866, %s18, 1
          %s868 = smul.addr %s867, 4
          %s869 = scalar_lea.vmem %s4, %s868
        $region60: #{_forward.14} parent=55 // pred_fallthru
          _
      $region56: #{_forward.14} parent=5 // pred_fallthru
        _
    $region6: #{_forward.14} parent=1 // loop_footer
      %s16 = sadd.s32 1, %s12
    $region7: #{_forward.14} parent=1 // loop_footer_branch
      %11 = sbr.rel target = $region3
    $region8: #{_forward.14} parent=1 // loop_exit
      _
    %870 = vsyncpa [#allocation3], 1
    %s871 = scalar_lea.sflag [#allocation3], 1
    %872 = vsyncpa %s871, 1
    %873 = vsyncpa [#allocation5], 1

// kernel: _forward.17
$region0: #{_forward.17}
  #allocation0 [shape = 'u32[]', space=smem, size = 0x4, offset = 0x4, fixed_abs, tag = 'smem constant byte address 0x4 - core index']
  #allocation1 [shape = 'u32[144,128]{1,0:T(1,128)}', space=vmem, size = 0x12000, scoped, tag = 'internal scratch']
  %s0 = inlined_call_operand.vmem [shape: bf16[16,256], index: 0, kind: input, shape index: {}]
  %s1 = inlined_call_operand.vmem [shape: bf16[256,128], index: 1, kind: input, shape index: {}]
  %s2 = inlined_call_operand.vmem [shape: f32[1,128], index: 2, kind: input, shape index: {}]
  %s3 = inlined_call_operand.vmem [shape: f32[16,128], index: 3, kind: input, shape index: {}]
  %s4 = inlined_call_operand.vmem [shape: f32[16,128], index: 4, kind: output, shape index: {}]
  %s5 = sld [smem:[#allocation0]]
  $region26: #{_forward.17} parent=0
    _
  %s7 = ssub.s32 1, %s5
  %s8 = scalar_select 0, %s7, %s5
  // Predicated region
  $region2: #{_forward.17} parent=0 // pred_check
    _
  $region3: #{_forward.17} parent=0 // pred_check_branch
    %10 = sbr.rel (0) target = $region5
  $region4: #{_forward.17} parent=0 // pred_region
    _
  $region5: #{_forward.17} parent=0 // pred_fallthru
    _
  // Predicated region
  $region6: #{_forward.17} parent=0 // pred_check
    _
  $region7: #{_forward.17} parent=0 // pred_check_branch
    %12 = sbr.rel (0) target = $region9
  $region8: #{_forward.17} parent=0 // pred_region
    _
  $region9: #{_forward.17} parent=0 // pred_fallthru
    _
  // Predicated region
  $region10: #{_forward.17} parent=0 // pred_check
    _
  $region11: #{_forward.17} parent=0 // pred_check_branch
    %14 = sbr.rel (0) target = $region13
  $region12: #{_forward.17} parent=0 // pred_region
    _
  $region13: #{_forward.17} parent=0 // pred_fallthru
    _
  // Predicated region
  $region14: #{_forward.17} parent=0 // pred_check
    _
  $region15: #{_forward.17} parent=0 // pred_check_branch
    %16 = sbr.rel (0) target = $region17
  $region16: #{_forward.17} parent=0 // pred_region
    _
  $region17: #{_forward.17} parent=0 // pred_fallthru
    _
  %v18 = vld [vmem:[%s0] sm:$0xff]
  %v19 = vld [vmem:[%s0 + $0x8] sm:$0xff]
  %v20 = vld [vmem:[%s1] sm:$0xf]
  %v21 = vld [vmem:[%s1 + $0x4] sm:$0xf]
  %v22 = vld [vmem:[%s1 + $0x8] sm:$0xf]
  %v23 = vld [vmem:[%s1 + $0xc] sm:$0xf]
  %v24 = vld [vmem:[%s1 + $0x10] sm:$0xf]
  %v25 = vld [vmem:[%s1 + $0x14] sm:$0xf]
  %v26 = vld [vmem:[%s1 + $0x18] sm:$0xf]
  %v27 = vld [vmem:[%s1 + $0x1c] sm:$0xf]
  %v28 = vld [vmem:[%s1 + $0x20] sm:$0xf]
  %v29 = vld [vmem:[%s1 + $0x24] sm:$0xf]
  %v30 = vld [vmem:[%s1 + $0x28] sm:$0xf]
  %v31 = vld [vmem:[%s1 + $0x2c] sm:$0xf]
  %v32 = vld [vmem:[%s1 + $0x30] sm:$0xf]
  %v33 = vld [vmem:[%s1 + $0x34] sm:$0xf]
  %v34 = vld [vmem:[%s1 + $0x38] sm:$0xf]
  %v35 = vld [vmem:[%s1 + $0x3c] sm:$0xf]
  %v36 = vld [vmem:[%s1 + $0x40] sm:$0xf]
  %v37 = vld [vmem:[%s1 + $0x44] sm:$0xf]
  %v38 = vld [vmem:[%s1 + $0x48] sm:$0xf]
  %v39 = vld [vmem:[%s1 + $0x4c] sm:$0xf]
  %v40 = vld [vmem:[%s1 + $0x50] sm:$0xf]
  %v41 = vld [vmem:[%s1 + $0x54] sm:$0xf]
  %v42 = vld [vmem:[%s1 + $0x58] sm:$0xf]
  %v43 = vld [vmem:[%s1 + $0x5c] sm:$0xf]
  %v44 = vld [vmem:[%s1 + $0x60] sm:$0xf]
  %v45 = vld [vmem:[%s1 + $0x64] sm:$0xf]
  %v46 = vld [vmem:[%s1 + $0x68] sm:$0xf]
  %v47 = vld [vmem:[%s1 + $0x6c] sm:$0xf]
  %v48 = vld [vmem:[%s1 + $0x70] sm:$0xf]
  %v49 = vld [vmem:[%s1 + $0x74] sm:$0xf]
  %v50 = vld [vmem:[%s1 + $0x78] sm:$0xf]
  %v51 = vld [vmem:[%s1 + $0x7c] sm:$0xf]
  %v52 = vld [vmem:[%s2] sm:$0x1]
  %v54 = vlaneseq
  %v55 = vshrl.u32 %v54, 7
  %v56 = vsub.s32 0, %v55
  %v57 = vrot.slane %v52, %v56
  %v61 = vunpack.c.l.b16 %v18
  %v62 = vunpack.c.h.b16 %v18
  %v63 = vunpack.c.l.b16 %v19
  %v64 = vunpack.c.h.b16 %v19
  %v65 = vpack.c.b16 %v63, %v61
  %v66 = vpack.c.b16 %v64, %v62
  %v101 = vunpack.c.l.b16 %v20
  %v102 = vunpack.c.l.b16 %v21
  %v103 = vunpack.c.l.b16 %v22
  %v104 = vunpack.c.l.b16 %v23
  %v105 = vunpack.c.l.b16 %v24
  %v106 = vunpack.c.l.b16 %v25
  %v107 = vunpack.c.l.b16 %v26
  %v108 = vunpack.c.l.b16 %v27
  %v109 = vunpack.c.l.b16 %v28
  %v110 = vunpack.c.l.b16 %v29
  %v111 = vunpack.c.l.b16 %v30
  %v112 = vunpack.c.l.b16 %v31
  %v113 = vunpack.c.l.b16 %v32
  %v114 = vunpack.c.l.b16 %v33
  %v115 = vunpack.c.l.b16 %v34
  %v116 = vunpack.c.l.b16 %v35
  %v117 = vunpack.c.l.b16 %v36
  %v118 = vunpack.c.l.b16 %v37
  %v119 = vunpack.c.l.b16 %v38
  %v120 = vunpack.c.l.b16 %v39
  %v121 = vunpack.c.l.b16 %v40
  %v122 = vunpack.c.l.b16 %v41
  %v123 = vunpack.c.l.b16 %v42
  %v124 = vunpack.c.l.b16 %v43
  %v125 = vunpack.c.l.b16 %v44
  %v126 = vunpack.c.l.b16 %v45
  %v127 = vunpack.c.l.b16 %v46
  %v128 = vunpack.c.l.b16 %v47
  %v129 = vunpack.c.l.b16 %v48
  %v130 = vunpack.c.l.b16 %v49
  %v131 = vunpack.c.l.b16 %v50
  %v132 = vunpack.c.l.b16 %v51
  %v133 = vpack.c.b16 %v102, %v101
  %v134 = vpack.c.b16 %v104, %v103
  %v135 = vpack.c.b16 %v106, %v105
  %v136 = vpack.c.b16 %v108, %v107
  %v137 = vpack.c.b16 %v110, %v109
  %v138 = vpack.c.b16 %v112, %v111
  %v139 = vpack.c.b16 %v114, %v113
  %v140 = vpack.c.b16 %v116, %v115
  %v141 = vpack.c.b16 %v118, %v117
  %v142 = vpack.c.b16 %v120, %v119
  %v143 = vpack.c.b16 %v122, %v121
  %v144 = vpack.c.b16 %v124, %v123
  %v145 = vpack.c.b16 %v126, %v125
  %v146 = vpack.c.b16 %v128, %v127
  %v147 = vpack.c.b16 %v130, %v129
  %v148 = vpack.c.b16 %v132, %v131
  %165 = vmatprep.subr.bf16.mxu0 0
  %166 = vmatpush1.bf16.msra.mxu0 %v140
  %167 = vmatprep.subr.bf16.mxu0 0
  %168 = vmatpush1.bf16.msra.mxu0 %v139
  %169 = vmatprep.subr.bf16.mxu0 0
  %170 = vmatpush1.bf16.msra.mxu0 %v138
  %171 = vmatprep.subr.bf16.mxu0 0
  %172 = vmatpush1.bf16.msra.mxu0 %v137
  %173 = vmatprep.subr.bf16.mxu0 0
  %174 = vmatpush1.bf16.msra.mxu0 %v136
  %175 = vmatprep.subr.bf16.mxu0 0
  %176 = vmatpush1.bf16.msra.mxu0 %v135
  %177 = vmatprep.subr.bf16.mxu0 0
  %178 = vmatpush1.bf16.msra.mxu0 %v134
  %179 = vmatprep.subr.bf16.mxu0 0
  %180 = vmatpush1.bf16.msra.mxu0 %v133
  %181 = vmatprep.subr.bf16.mxu0 0
  %182 = vmatpush2.bf16.msra.mxu0 %v148
  %183 = vmatprep.subr.bf16.mxu0 0
  %184 = vmatpush2.bf16.msra.mxu0 %v147
  %185 = vmatprep.subr.bf16.mxu0 0
  %186 = vmatpush2.bf16.msra.mxu0 %v146
  %187 = vmatprep.subr.bf16.mxu0 0
  %188 = vmatpush2.bf16.msra.mxu0 %v145
  %189 = vmatprep.subr.bf16.mxu0 0
  %190 = vmatpush2.bf16.msra.mxu0 %v144
  %191 = vmatprep.subr.bf16.mxu0 0
  %192 = vmatpush2.bf16.msra.mxu0 %v143
  %193 = vmatprep.subr.bf16.mxu0 0
  %194 = vmatpush2.bf16.msra.mxu0 %v142
  %195 = vmatprep.subr.bf16.mxu0 0
  %196 = vmatpush2.bf16.msra.mxu0 %v141
  %197 = vmatprep.mubr.bf16.mxu0 %v66
  %198 = vmatmul.mubr.bf16.gmra.mxu0 %v65
  %v199 = vpop.f32.mrf.mxu0
  %v200 = vadd.f32 %v57, %v199
  %v201 = vpop.f32.mrf.mxu0
  %v202 = vpop.f32.mrf.mxu0
  %v203 = vadd.f32 %v57, %v202
  %v204 = vpop.f32.mrf.mxu0
  %205 = vdwg.mxu0
  %v206 = vld [vmem:[%s3] sm:$0xff]
  %v207 = vld [vmem:[%s3 + $0x8] sm:$0xff]
  %v208 = vadd.f32 %v200, %v206
  %v209 = vadd.f32 %v203, %v207
  %210 = vst [vmem:[%s4] sm:$0xff] %v208
  %211 = vst [vmem:[%s4 + $0x8] sm:$0xff] %v209
  // Predicated region
  $region18: #{_forward.17} parent=0 // pred_check
    _
  $region19: #{_forward.17} parent=0 // pred_check_branch
    %213 = sbr.rel (0) target = $region21
  $region20: #{_forward.17} parent=0 // pred_region
    _
  $region21: #{_forward.17} parent=0 // pred_fallthru
    _
  // Predicated region
  $region22: #{_forward.17} parent=0 // pred_check
    _
  $region23: #{_forward.17} parent=0 // pred_check_branch
    %215 = sbr.rel (0) target = $region25
  $region24: #{_forward.17} parent=0 // pred_region
    _
  $region25: #{_forward.17} parent=0 // pred_fallthru
    _

// kernel: _forward.16
$region0: #{_forward.16}
  #allocation0 [shape = 'u32[]', space=smem, size = 0x4, offset = 0x4, fixed_abs, tag = 'smem constant byte address 0x4 - core index']
  #allocation1 [shape = 'u32[144,128]{1,0:T(1,128)}', space=vmem, size = 0x12000, scoped, tag = 'internal scratch']
  %s0 = inlined_call_operand.vmem [shape: f32[16,128], index: 0, kind: input, shape index: {}]
  %s1 = inlined_call_operand.vmem [shape: bf16[128,256], index: 1, kind: input, shape index: {}]
  %s2 = inlined_call_operand.vmem [shape: f32[1,256], index: 2, kind: input, shape index: {}]
  %s3 = inlined_call_operand.vmem [shape: f32[1,128], index: 3, kind: input, shape index: {}]
  %s4 = inlined_call_operand.vmem [shape: f32[1,128], index: 4, kind: input, shape index: {}]
  %s5 = inlined_call_operand.vmem [shape: bf16[16,256], index: 5, kind: output, shape index: {}]
  %s6 = sld [smem:[#allocation0]]
  $region30: #{_forward.16} parent=0
    _
  %s8 = ssub.s32 1, %s6
  %s9 = scalar_select 0, %s8, %s6
  // Predicated region
  $region2: #{_forward.16} parent=0 // pred_check
    _
  $region3: #{_forward.16} parent=0 // pred_check_branch
    %11 = sbr.rel (0) target = $region5
  $region4: #{_forward.16} parent=0 // pred_region
    _
  $region5: #{_forward.16} parent=0 // pred_fallthru
    _
  // Predicated region
  $region6: #{_forward.16} parent=0 // pred_check
    _
  $region7: #{_forward.16} parent=0 // pred_check_branch
    %13 = sbr.rel (0) target = $region9
  $region8: #{_forward.16} parent=0 // pred_region
    _
  $region9: #{_forward.16} parent=0 // pred_fallthru
    _
  // Predicated region
  $region10: #{_forward.16} parent=0 // pred_check
    _
  $region11: #{_forward.16} parent=0 // pred_check_branch
    %15 = sbr.rel (0) target = $region13
  $region12: #{_forward.16} parent=0 // pred_region
    _
  $region13: #{_forward.16} parent=0 // pred_fallthru
    _
  // Predicated region
  $region14: #{_forward.16} parent=0 // pred_check
    _
  $region15: #{_forward.16} parent=0 // pred_check_branch
    %17 = sbr.rel (0) target = $region17
  $region16: #{_forward.16} parent=0 // pred_region
    _
  $region17: #{_forward.16} parent=0 // pred_fallthru
    _
  // Predicated region
  $region18: #{_forward.16} parent=0 // pred_check
    _
  $region19: #{_forward.16} parent=0 // pred_check_branch
    %19 = sbr.rel (0) target = $region21
  $region20: #{_forward.16} parent=0 // pred_region
    _
  $region21: #{_forward.16} parent=0 // pred_fallthru
    _
  %v21 = vld [vmem:[%s0] sm:$0xff]
  %v22 = vld [vmem:[%s0 + $0x8] sm:$0xff]
  %23 = vadd.xlane.f32.xlu0 %v21
  %v24 = vpop.xlane.xlu0 %23
  %25 = vadd.xlane.f32.xlu0 %v22
  %v26 = vpop.xlane.xlu0 %25
  %v27 = vrcp.pop 128.0
  %v28 = vmul.f32 %v24, %v27
  %v29 = vmul.f32 %v26, %v27
  %v30 = vsub.f32 %v21, %v28
  %v31 = vsub.f32 %v22, %v29
  %v32 = vmul.f32 %v30, %v30
  %v33 = vmul.f32 %v31, %v31
  %34 = vadd.xlane.f32.xlu0 %v32
  %v35 = vpop.xlane.xlu0 %34
  %36 = vadd.xlane.f32.xlu0 %v33
  %v37 = vpop.xlane.xlu0 %36
  %v38 = vmul.f32 %v35, %v27
  %v39 = vmul.f32 %v37, %v27
  %v40 = vadd.f32 %v38, 1e-05
  %v41 = vadd.f32 %v39, 1e-05
  %v42 = vrsqrt.pop %v40
  %v43 = vrsqrt.pop %v41
  %v44 = vmul.f32 %v30, %v42
  %v45 = vmul.f32 %v31, %v43
  %v46 = vld [vmem:[%s3] sm:$0x1]
  %v48 = vlaneseq
  %v49 = vshrl.u32 %v48, 7
  %v50 = vsub.s32 0, %v49
  %v51 = vrot.slane %v46, %v50
  %v53 = vmul.f32 %v44, %v51
  %v54 = vmul.f32 %v45, %v51
  %v55 = vld [vmem:[%s4] sm:$0x1]
  %v57 = vlaneseq
  %v58 = vshrl.u32 %v57, 7
  %v59 = vsub.s32 0, %v58
  %v60 = vrot.slane %v55, %v59
  %v62 = vadd.f32 %v53, %v60
  %v63 = vadd.f32 %v54, %v60
  %v64 = vpack.c.bf16 %v63, %v62
  %v65 = vld [vmem:[%s1] sm:$0xff]
  %v66 = vld [vmem:[%s1 + $0x8] sm:$0xff]
  %v67 = vld [vmem:[%s1 + $0x10] sm:$0xff]
  %v68 = vld [vmem:[%s1 + $0x18] sm:$0xff]
  %v69 = vld [vmem:[%s1 + $0x20] sm:$0xff]
  %v70 = vld [vmem:[%s1 + $0x28] sm:$0xff]
  %v71 = vld [vmem:[%s1 + $0x30] sm:$0xff]
  %v72 = vld [vmem:[%s1 + $0x38] sm:$0xff]
  %v73 = vld [vmem:[%s1 + $0x40] sm:$0xff]
  %v74 = vld [vmem:[%s1 + $0x48] sm:$0xff]
  %v75 = vld [vmem:[%s1 + $0x50] sm:$0xff]
  %v76 = vld [vmem:[%s1 + $0x58] sm:$0xff]
  %v77 = vld [vmem:[%s1 + $0x60] sm:$0xff]
  %v78 = vld [vmem:[%s1 + $0x68] sm:$0xff]
  %v79 = vld [vmem:[%s1 + $0x70] sm:$0xff]
  %v80 = vld [vmem:[%s1 + $0x78] sm:$0xff]
  %v81 = vld [vmem:[%s2] sm:$0x3]
  %v83 = vlaneseq
  %v84 = vshrl.u32 %v83, 7
  %v85 = vsub.s32 0, %v84
  %v86 = vrot.slane %v81, %v85
  %v87 = vlaneseq
  %v88 = vshrl.u32 %v87, 7
  %v89 = vsub.s32 1, %v88
  %v90 = vrot.slane %v81, %v89
  %v109 = vunpack.c.l.b16 %v65
  %v110 = vunpack.c.h.b16 %v65
  %v111 = vunpack.c.l.b16 %v66
  %v112 = vunpack.c.h.b16 %v66
  %v113 = vunpack.c.l.b16 %v67
  %v114 = vunpack.c.h.b16 %v67
  %v115 = vunpack.c.l.b16 %v68
  %v116 = vunpack.c.h.b16 %v68
  %v117 = vunpack.c.l.b16 %v69
  %v118 = vunpack.c.h.b16 %v69
  %v119 = vunpack.c.l.b16 %v70
  %v120 = vunpack.c.h.b16 %v70
  %v121 = vunpack.c.l.b16 %v71
  %v122 = vunpack.c.h.b16 %v71
  %v123 = vunpack.c.l.b16 %v72
  %v124 = vunpack.c.h.b16 %v72
  %v125 = vunpack.c.l.b16 %v73
  %v126 = vunpack.c.h.b16 %v73
  %v127 = vunpack.c.l.b16 %v74
  %v128 = vunpack.c.h.b16 %v74
  %v129 = vunpack.c.l.b16 %v75
  %v130 = vunpack.c.h.b16 %v75
  %v131 = vunpack.c.l.b16 %v76
  %v132 = vunpack.c.h.b16 %v76
  %v133 = vunpack.c.l.b16 %v77
  %v134 = vunpack.c.h.b16 %v77
  %v135 = vunpack.c.l.b16 %v78
  %v136 = vunpack.c.h.b16 %v78
  %v137 = vunpack.c.l.b16 %v79
  %v138 = vunpack.c.h.b16 %v79
  %v139 = vunpack.c.l.b16 %v80
  %v140 = vunpack.c.h.b16 %v80
  %v141 = vpack.c.b16 %v111, %v109
  %v142 = vpack.c.b16 %v112, %v110
  %v143 = vpack.c.b16 %v115, %v113
  %v144 = vpack.c.b16 %v116, %v114
  %v145 = vpack.c.b16 %v119, %v117
  %v146 = vpack.c.b16 %v120, %v118
  %v147 = vpack.c.b16 %v123, %v121
  %v148 = vpack.c.b16 %v124, %v122
  %v149 = vpack.c.b16 %v127, %v125
  %v150 = vpack.c.b16 %v128, %v126
  %v151 = vpack.c.b16 %v131, %v129
  %v152 = vpack.c.b16 %v132, %v130
  %v153 = vpack.c.b16 %v135, %v133
  %v154 = vpack.c.b16 %v136, %v134
  %v155 = vpack.c.b16 %v139, %v137
  %v156 = vpack.c.b16 %v140, %v138
  %173 = vmatprep.subr.bf16.mxu0 %v156
  %174 = vmatpush1.bf16.msra.mxu0 %v155
  %175 = vmatprep.subr.bf16.mxu0 %v154
  %176 = vmatpush1.bf16.msra.mxu0 %v153
  %177 = vmatprep.subr.bf16.mxu0 %v152
  %178 = vmatpush1.bf16.msra.mxu0 %v151
  %179 = vmatprep.subr.bf16.mxu0 %v150
  %180 = vmatpush1.bf16.msra.mxu0 %v149
  %181 = vmatprep.subr.bf16.mxu0 %v148
  %182 = vmatpush1.bf16.msra.mxu0 %v147
  %183 = vmatprep.subr.bf16.mxu0 %v146
  %184 = vmatpush1.bf16.msra.mxu0 %v145
  %185 = vmatprep.subr.bf16.mxu0 %v144
  %186 = vmatpush1.bf16.msra.mxu0 %v143
  %187 = vmatprep.subr.bf16.mxu0 %v142
  %188 = vmatpush1.bf16.msra.mxu0 %v141
  %189 = vmatprep.subr.bf16.mxu0 0
  %190 = vmatpush2.bf16.msra.mxu0 0
  %191 = vmatprep.subr.bf16.mxu0 0
  %192 = vmatpush2.bf16.msra.mxu0 0
  %193 = vmatprep.subr.bf16.mxu0 0
  %194 = vmatpush2.bf16.msra.mxu0 0
  %195 = vmatprep.subr.bf16.mxu0 0
  %196 = vmatpush2.bf16.msra.mxu0 0
  %197 = vmatprep.subr.bf16.mxu0 0
  %198 = vmatpush2.bf16.msra.mxu0 0
  %199 = vmatprep.subr.bf16.mxu0 0
  %200 = vmatpush2.bf16.msra.mxu0 0
  %201 = vmatprep.subr.bf16.mxu0 0
  %202 = vmatpush2.bf16.msra.mxu0 0
  %203 = vmatprep.subr.bf16.mxu0 0
  %204 = vmatpush2.bf16.msra.mxu0 0
  %205 = vmatprep.mubr.bf16.mxu0 0
  %206 = vmatmul.mubr.bf16.gmra.mxu0 %v64
  %v207 = vpop.f32.mrf.mxu0
  %v208 = vadd.f32 %v86, %v207
  %v209 = vpop.f32.mrf.mxu0
  %v210 = vadd.f32 %v90, %v209
  %v211 = vpop.f32.mrf.mxu0
  %v212 = vadd.f32 %v86, %v211
  %v213 = vpop.f32.mrf.mxu0
  %v214 = vadd.f32 %v90, %v213
  %215 = vdwg.mxu0
  %v216 = vmul.f32 %v208, 0.5
  %v217 = vmul.f32 %v210, 0.5
  %v218 = vmul.f32 %v212, 0.5
  %v219 = vmul.f32 %v214, 0.5
  %v220 = vmul.f32 %v208, 0.70710677
  %v221 = vmul.f32 %v210, 0.70710677
  %v222 = vmul.f32 %v212, 0.70710677
  %v223 = vmul.f32 %v214, 0.70710677
  %vm224 = vcmp.lt.f32.partialorder %v220, 0.0
  %vm225 = vcmp.lt.f32.partialorder %v221, 0.0
  %vm226 = vcmp.lt.f32.partialorder %v222, 0.0
  %vm227 = vcmp.lt.f32.partialorder %v223, 0.0
  %v228 = vsel %vm224, -1.0, 1.0
  %v229 = vsel %vm225, -1.0, 1.0
  %v230 = vsel %vm226, -1.0, 1.0
  %v231 = vsel %vm227, -1.0, 1.0
  %v232 = vand.u32 2147483647, %v220
  %v233 = vand.u32 2147483647, %v221
  %v234 = vand.u32 2147483647, %v222
  %v235 = vand.u32 2147483647, %v223
  %v236 = vmul.f32 %v232, 0.3275911
  %v237 = vmul.f32 %v233, 0.3275911
  %v238 = vmul.f32 %v234, 0.3275911
  %v239 = vmul.f32 %v235, 0.3275911
  %v240 = vadd.f32 %v236, 1.0
  %v241 = vadd.f32 %v237, 1.0
  %v242 = vadd.f32 %v238, 1.0
  %v243 = vadd.f32 %v239, 1.0
  %v244 = vrcp.pop %v240
  %v245 = vmul.f32 1.0, %v244
  %v246 = vrcp.pop %v241
  %v247 = vmul.f32 1.0, %v246
  %v248 = vrcp.pop %v242
  %v249 = vmul.f32 1.0, %v248
  %v250 = vrcp.pop %v243
  %v251 = vmul.f32 1.0, %v250
  %v252 = vmul.f32 %v245, 1.0614054
  %v253 = vmul.f32 %v247, 1.0614054
  %v254 = vmul.f32 %v249, 1.0614054
  %v255 = vmul.f32 %v251, 1.0614054
  %v256 = vadd.f32 %v252, -1.4531521
  %v257 = vadd.f32 %v253, -1.4531521
  %v258 = vadd.f32 %v254, -1.4531521
  %v259 = vadd.f32 %v255, -1.4531521
  %v260 = vmul.f32 %v256, %v245
  %v261 = vmul.f32 %v257, %v247
  %v262 = vmul.f32 %v258, %v249
  %v263 = vmul.f32 %v259, %v251
  %v264 = vadd.f32 %v260, 1.4214138
  %v265 = vadd.f32 %v261, 1.4214138
  %v266 = vadd.f32 %v262, 1.4214138
  %v267 = vadd.f32 %v263, 1.4214138
  %v268 = vmul.f32 %v264, %v245
  %v269 = vmul.f32 %v265, %v247
  %v270 = vmul.f32 %v266, %v249
  %v271 = vmul.f32 %v267, %v251
  %v272 = vadd.f32 %v268, -0.28449672
  %v273 = vadd.f32 %v269, -0.28449672
  %v274 = vadd.f32 %v270, -0.28449672
  %v275 = vadd.f32 %v271, -0.28449672
  %v276 = vmul.f32 %v272, %v245
  %v277 = vmul.f32 %v273, %v247
  %v278 = vmul.f32 %v274, %v249
  %v279 = vmul.f32 %v275, %v251
  %v280 = vadd.f32 %v276, 0.2548296
  %v281 = vadd.f32 %v277, 0.2548296
  %v282 = vadd.f32 %v278, 0.2548296
  %v283 = vadd.f32 %v279, 0.2548296
  %v284 = vmul.f32 %v280, %v245
  %v285 = vmul.f32 %v281, %v247
  %v286 = vmul.f32 %v282, %v249
  %v287 = vmul.f32 %v283, %v251
  %v288 = vsub.f32 0.0, %v232
  %v289 = vsub.f32 0.0, %v233
  %v290 = vsub.f32 0.0, %v234
  %v291 = vsub.f32 0.0, %v235
  %v292 = vmul.f32 %v288, %v232
  %v293 = vmul.f32 %v289, %v233
  %v294 = vmul.f32 %v290, %v234
  %v295 = vmul.f32 %v291, %v235
  %v296 = vmul.f32 %v292, 1.442695
  %v297 = vpow.pop %v296
  %v298 = vmul.f32 %v293, 1.442695
  %v299 = vpow.pop %v298
  %v300 = vmul.f32 %v294, 1.442695
  %v301 = vpow.pop %v300
  %v302 = vmul.f32 %v295, 1.442695
  %v303 = vpow.pop %v302
  %v304 = vmul.f32 %v284, %v297
  %v305 = vmul.f32 %v285, %v299
  %v306 = vmul.f32 %v286, %v301
  %v307 = vmul.f32 %v287, %v303
  %v308 = vsub.f32 1.0, %v304
  %v309 = vsub.f32 1.0, %v305
  %v310 = vsub.f32 1.0, %v306
  %v311 = vsub.f32 1.0, %v307
  %v312 = vmul.f32 %v228, %v308
  %v313 = vmul.f32 %v229, %v309
  %v314 = vmul.f32 %v230, %v310
  %v315 = vmul.f32 %v231, %v311
  %v316 = vadd.f32 %v312, 1.0
  %v317 = vadd.f32 %v313, 1.0
  %v318 = vadd.f32 %v314, 1.0
  %v319 = vadd.f32 %v315, 1.0
  %v320 = vmul.f32 %v216, %v316
  %v321 = vmul.f32 %v217, %v317
  %v322 = vmul.f32 %v218, %v318
  %v323 = vmul.f32 %v219, %v319
  %v324 = vpack.c.bf16 %v322, %v320
  %v325 = vpack.c.bf16 %v323, %v321
  %v328 = vunpack.c.l.b16 %v324
  %v329 = vunpack.c.l.b16 %v325
  %v330 = vunpack.c.h.b16 %v324
  %v331 = vunpack.c.h.b16 %v325
  %v332 = vpack.c.b16 %v329, %v328
  %v333 = vpack.c.b16 %v331, %v330
  %336 = vst [vmem:[%s5] sm:$0xff] %v332
  %337 = vst [vmem:[%s5 + $0x8] sm:$0xff] %v333
  // Predicated region
  $region22: #{_forward.16} parent=0 // pred_check
    _
  $region23: #{_forward.16} parent=0 // pred_check_branch
    %339 = sbr.rel (0) target = $region25
  $region24: #{_forward.16} parent=0 // pred_region
    _
  $region25: #{_forward.16} parent=0 // pred_fallthru
    _
  // Predicated region
  $region26: #{_forward.16} parent=0 // pred_check
    _
  $region27: #{_forward.16} parent=0 // pred_check_branch
    %341 = sbr.rel (0) target = $region29
  $region28: #{_forward.16} parent=0 // pred_region
    _
  $region29: #{_forward.16} parent=0 // pred_fallthru
    _

// kernel: _forward.23
$region0: #{_forward.23}
  #allocation0 [shape = 'u32[]', space=smem, size = 0x4, offset = 0x4, fixed_abs, tag = 'smem constant byte address 0x4 - core index']
  #allocation1 [shape = 'u32[144,128]{1,0:T(1,128)}', space=vmem, size = 0x12000, scoped, tag = 'internal scratch']
  %s0 = inlined_call_operand.vmem [shape: f32[8,128], index: 0, kind: input, shape index: {}]
  %s1 = inlined_call_operand.vmem [shape: bf16[128,128], index: 1, kind: input, shape index: {}]
  %s2 = inlined_call_operand.vmem [shape: f32[1,128], index: 2, kind: input, shape index: {}]
  %s3 = inlined_call_operand.vmem [shape: f32[1,128], index: 3, kind: input, shape index: {}]
  %s4 = inlined_call_operand.vmem [shape: f32[1,128], index: 4, kind: input, shape index: {}]
  %s5 = inlined_call_operand.vmem [shape: f32[8,128], index: 5, kind: output, shape index: {}]
  %s6 = sld [smem:[#allocation0]]
  $region30: #{_forward.23} parent=0
    _
  %s8 = ssub.s32 1, %s6
  %s9 = scalar_select 0, %s8, %s6
  // Predicated region
  $region2: #{_forward.23} parent=0 // pred_check
    _
  $region3: #{_forward.23} parent=0 // pred_check_branch
    %11 = sbr.rel (0) target = $region5
  $region4: #{_forward.23} parent=0 // pred_region
    _
  $region5: #{_forward.23} parent=0 // pred_fallthru
    _
  // Predicated region
  $region6: #{_forward.23} parent=0 // pred_check
    _
  $region7: #{_forward.23} parent=0 // pred_check_branch
    %13 = sbr.rel (0) target = $region9
  $region8: #{_forward.23} parent=0 // pred_region
    _
  $region9: #{_forward.23} parent=0 // pred_fallthru
    _
  // Predicated region
  $region10: #{_forward.23} parent=0 // pred_check
    _
  $region11: #{_forward.23} parent=0 // pred_check_branch
    %15 = sbr.rel (0) target = $region13
  $region12: #{_forward.23} parent=0 // pred_region
    _
  $region13: #{_forward.23} parent=0 // pred_fallthru
    _
  // Predicated region
  $region14: #{_forward.23} parent=0 // pred_check
    _
  $region15: #{_forward.23} parent=0 // pred_check_branch
    %17 = sbr.rel (0) target = $region17
  $region16: #{_forward.23} parent=0 // pred_region
    _
  $region17: #{_forward.23} parent=0 // pred_fallthru
    _
  // Predicated region
  $region18: #{_forward.23} parent=0 // pred_check
    _
  $region19: #{_forward.23} parent=0 // pred_check_branch
    %19 = sbr.rel (0) target = $region21
  $region20: #{_forward.23} parent=0 // pred_region
    _
  $region21: #{_forward.23} parent=0 // pred_fallthru
    _
  %v21 = vld [vmem:[%s0] sm:$0xff]
  %22 = vadd.xlane.f32.xlu0 %v21
  %v23 = vpop.xlane.xlu0 %22
  %v24 = vrcp.pop 128.0
  %v25 = vmul.f32 %v23, %v24
  %v26 = vsub.f32 %v21, %v25
  %v27 = vmul.f32 %v26, %v26
  %28 = vadd.xlane.f32.xlu0 %v27
  %v29 = vpop.xlane.xlu0 %28
  %v30 = vmul.f32 %v29, %v24
  %v31 = vadd.f32 %v30, 1e-05
  %v32 = vrsqrt.pop %v31
  %v33 = vmul.f32 %v26, %v32
  %v34 = vld [vmem:[%s3] sm:$0x1]
  %v36 = vlaneseq
  %v37 = vshrl.u32 %v36, 7
  %v38 = vsub.s32 0, %v37
  %v39 = vrot.slane %v34, %v38
  %v41 = vmul.f32 %v33, %v39
  %v42 = vld [vmem:[%s4] sm:$0x1]
  %v44 = vlaneseq
  %v45 = vshrl.u32 %v44, 7
  %v46 = vsub.s32 0, %v45
  %v47 = vrot.slane %v42, %v46
  %v49 = vadd.f32 %v41, %v47
  %v50 = vpack.c.bf16 %v49, %v49
  %v51 = vld [vmem:[%s1] sm:$0xf]
  %v52 = vld [vmem:[%s1 + $0x4] sm:$0xf]
  %v53 = vld [vmem:[%s1 + $0x8] sm:$0xf]
  %v54 = vld [vmem:[%s1 + $0xc] sm:$0xf]
  %v55 = vld [vmem:[%s1 + $0x10] sm:$0xf]
  %v56 = vld [vmem:[%s1 + $0x14] sm:$0xf]
  %v57 = vld [vmem:[%s1 + $0x18] sm:$0xf]
  %v58 = vld [vmem:[%s1 + $0x1c] sm:$0xf]
  %v59 = vld [vmem:[%s1 + $0x20] sm:$0xf]
  %v60 = vld [vmem:[%s1 + $0x24] sm:$0xf]
  %v61 = vld [vmem:[%s1 + $0x28] sm:$0xf]
  %v62 = vld [vmem:[%s1 + $0x2c] sm:$0xf]
  %v63 = vld [vmem:[%s1 + $0x30] sm:$0xf]
  %v64 = vld [vmem:[%s1 + $0x34] sm:$0xf]
  %v65 = vld [vmem:[%s1 + $0x38] sm:$0xf]
  %v66 = vld [vmem:[%s1 + $0x3c] sm:$0xf]
  %v67 = vld [vmem:[%s2] sm:$0x1]
  %v69 = vlaneseq
  %v70 = vshrl.u32 %v69, 7
  %v71 = vsub.s32 0, %v70
  %v72 = vrot.slane %v67, %v71
  %v90 = vunpack.c.l.b16 %v51
  %v91 = vunpack.c.l.b16 %v52
  %v92 = vunpack.c.l.b16 %v53
  %v93 = vunpack.c.l.b16 %v54
  %v94 = vunpack.c.l.b16 %v55
  %v95 = vunpack.c.l.b16 %v56
  %v96 = vunpack.c.l.b16 %v57
  %v97 = vunpack.c.l.b16 %v58
  %v98 = vunpack.c.l.b16 %v59
  %v99 = vunpack.c.l.b16 %v60
  %v100 = vunpack.c.l.b16 %v61
  %v101 = vunpack.c.l.b16 %v62
  %v102 = vunpack.c.l.b16 %v63
  %v103 = vunpack.c.l.b16 %v64
  %v104 = vunpack.c.l.b16 %v65
  %v105 = vunpack.c.l.b16 %v66
  %v106 = vpack.c.b16 %v91, %v90
  %v107 = vpack.c.b16 %v93, %v92
  %v108 = vpack.c.b16 %v95, %v94
  %v109 = vpack.c.b16 %v97, %v96
  %v110 = vpack.c.b16 %v99, %v98
  %v111 = vpack.c.b16 %v101, %v100
  %v112 = vpack.c.b16 %v103, %v102
  %v113 = vpack.c.b16 %v105, %v104
  %122 = vmatprep.subr.bf16.mxu0 0
  %123 = vmatpush1.bf16.msra.mxu0 %v113
  %124 = vmatprep.subr.bf16.mxu0 0
  %125 = vmatpush1.bf16.msra.mxu0 %v112
  %126 = vmatprep.subr.bf16.mxu0 0
  %127 = vmatpush1.bf16.msra.mxu0 %v111
  %128 = vmatprep.subr.bf16.mxu0 0
  %129 = vmatpush1.bf16.msra.mxu0 %v110
  %130 = vmatprep.subr.bf16.mxu0 0
  %131 = vmatpush1.bf16.msra.mxu0 %v109
  %132 = vmatprep.subr.bf16.mxu0 0
  %133 = vmatpush1.bf16.msra.mxu0 %v108
  %134 = vmatprep.subr.bf16.mxu0 0
  %135 = vmatpush1.bf16.msra.mxu0 %v107
  %136 = vmatprep.subr.bf16.mxu0 0
  %137 = vmatpush1.bf16.msra.mxu0 %v106
  %138 = vmatprep.subr.bf16.mxu0 0
  %139 = vmatpush2.bf16.msra.mxu0 0
  %140 = vmatprep.subr.bf16.mxu0 0
  %141 = vmatpush2.bf16.msra.mxu0 0
  %142 = vmatprep.subr.bf16.mxu0 0
  %143 = vmatpush2.bf16.msra.mxu0 0
  %144 = vmatprep.subr.bf16.mxu0 0
  %145 = vmatpush2.bf16.msra.mxu0 0
  %146 = vmatprep.subr.bf16.mxu0 0
  %147 = vmatpush2.bf16.msra.mxu0 0
  %148 = vmatprep.subr.bf16.mxu0 0
  %149 = vmatpush2.bf16.msra.mxu0 0
  %150 = vmatprep.subr.bf16.mxu0 0
  %151 = vmatpush2.bf16.msra.mxu0 0
  %152 = vmatprep.subr.bf16.mxu0 0
  %153 = vmatpush2.bf16.msra.mxu0 0
  %154 = vmatprep.mubr.bf16.mxu0 0
  %155 = vmatmul.mubr.bf16.gmra.mxu0 %v50
  %v156 = vpop.f32.mrf.mxu0
  %v157 = vadd.f32 %v72, %v156
  %v158 = vpop.f32.mrf.mxu0
  %v159 = vpop.f32.mrf.mxu0
  %v160 = vpop.f32.mrf.mxu0
  %161 = vdwg.mxu0
  %162 = vst [vmem:[%s5] sm:$0xff] %v157
  // Predicated region
  $region22: #{_forward.23} parent=0 // pred_check
    _
  $region23: #{_forward.23} parent=0 // pred_check_branch
    %164 = sbr.rel (0) target = $region25
  $region24: #{_forward.23} parent=0 // pred_region
    _
  $region25: #{_forward.23} parent=0 // pred_fallthru
    _
  // Predicated region
  $region26: #{_forward.23} parent=0 // pred_check
    _
  $region27: #{_forward.23} parent=0 // pred_check_branch
    %166 = sbr.rel (0) target = $region29
  $region28: #{_forward.23} parent=0 // pred_region
    _
  $region29: #{_forward.23} parent=0 // pred_fallthru
    _

</llo_original>
